<compile_context>
chip_gen: v5e
topology: v5e:2x2
jax: 0.10.0
libtpu: 0.0.40
codegen_flags: <defaults>
</compile_context>

<pallas_src>
import functools

import jax
import jax.numpy as jnp
from jax import lax
from jax.experimental import pallas as pl
from jax.experimental.pallas import tpu as pltpu


_BN_EPS = 1e-5
_DIRECT_TAP_MIN_CIN = 128   # Cin >= this: 9 direct matmuls, no patch concat


def _vmem_limit_bytes():
    """Per-generation VMEM budget (~3/4 of physical, capped at 96 MiB)."""
    default = 32 * 1024 * 1024
    try:
        cap = getattr(pltpu.get_tpu_info(), "vmem_capacity_bytes", None)
        if not cap:
            return default
        return max(default, min(int(cap) * 3 // 4, 96 * 1024 * 1024))
    except Exception:
        return default


# --------------------- pass 1: (fused BN+ReLU) conv + stats -------------------
def _conv_stats_kernel(*refs, th, rt_axis, fuse_bn, compute_dtype):
    """3x3 'same' conv (no bias) over a row tile + per-tile BN partial sums.

    If fuse_bn: the PREVIOUS stage's BatchNorm (scale/shift) + ReLU are applied
    to the input rows right after load (prologue fusion), so the raw previous
    activation never makes a standalone epilogue round trip through HBM.
    """
    if fuse_bn:
        x_ref, scale_ref, shift_ref, w_ref, conv_ref, stats_ref = refs
    else:
        x_ref, w_ref, conv_ref, stats_ref = refs
        scale_ref = shift_ref = None

    _, H, W, Cin = x_ref.shape
    tco = conv_ref.shape[-1]
    M = th * W

    rt = pl.program_id(rt_axis)
    nrt = pl.num_programs(rt_axis)
    r0 = rt * th

    def load_rows(start, size):
        v = x_ref[0, pl.ds(start, size)]                     # (size, W, Cin)
        if fuse_bn:                                          # prev-stage BN+ReLU
            v = v.astype(jnp.float32) * scale_ref[...] + shift_ref[...]
            v = jnp.maximum(v, 0.0)
        return v.astype(compute_dtype)

    main = load_rows(r0, th)                                 # (th, W, Cin)
    above = load_rows(jnp.maximum(r0 - 1, 0), 1)             # halo row above
    above = jnp.where(rt == 0, jnp.zeros_like(above), above)
    below = load_rows(jnp.minimum(r0 + th, H - 1), 1)        # halo row below
    below = jnp.where(rt == nrt - 1, jnp.zeros_like(below), below)
    xt = jnp.concatenate([above, main, below], axis=0)       # (th+2, W, Cin)

    # Single column-padded buffer per step (one concat, not one per dy tap).
    zcol = jnp.zeros((th + 2, 1, Cin), xt.dtype)
    xtp = jnp.concatenate([zcol, xt, zcol], axis=1)          # (th+2, W+2, Cin)

    acc = jnp.zeros((M, tco), jnp.float32)
    if Cin >= _DIRECT_TAP_MIN_CIN:
        # Wide layers: 9 direct matmuls (K=Cin), no patch-concat copy traffic.
        for dy in range(3):
            for dx in range(3):
                lhs = xtp[dy:dy + th, dx:dx + W, :].reshape(M, Cin)
                rhs = w_ref[dy, dx * Cin:(dx + 1) * Cin, :]
                acc = acc + jnp.dot(lhs, rhs, preferred_element_type=jnp.float32)
    else:
        # Narrow layers: fold dx taps into the contraction (K=3*Cin), 3 matmuls.
        for dy in range(3):
            r = xtp[dy:dy + th]                              # (th, W+2, Cin)
            patch = jnp.concatenate(
                [r[:, dx:dx + W, :] for dx in range(3)], axis=-1).reshape(M, 3 * Cin)
            acc = acc + jnp.dot(patch, w_ref[dy], preferred_element_type=jnp.float32)

    conv_ref[0] = acc.astype(conv_ref.dtype)

    # Per-(image, row-tile) BN partial sums from the f32 accumulator ->
    # no cross-step carry, grid stays fully parallel.
    s = jnp.sum(acc, axis=0, keepdims=True)                  # (1, tco)
    ss = jnp.sum(acc * acc, axis=0, keepdims=True)           # (1, tco)
    stats_ref[0, 0] = jnp.concatenate([s, ss], axis=0)       # (2, tco)


def _pick_conv_row_tile(H, W, Cin, tco, x_bytes, c_bytes, o_bytes, budget):
    """Largest TH dividing H whose per-step VMEM footprint fits `budget`."""
    fixed = 2 * H * W * Cin * x_bytes            # resident image (double-buffered)
    fixed += 2 * 9 * Cin * tco * c_bytes         # weight tile  (double-buffered)

    def per_th(th):
        m = th * W
        b = 2 * m * tco * o_bytes                # conv output block (2 buffers)
        b += m * tco * 4                         # f32 accumulator
        b += (th + 2) * (W + 2) * Cin * c_bytes  # padded activation buffer
        b += 2 * m * 3 * Cin * c_bytes           # patch / matmul operand copies
        return b

    smallest_legal = H
    for th in range(H, 0, -1):
        if H % th:
            continue
        if (th * W) % 8 and th != H:             # (8,128) block legality
            continue
        if fixed + per_th(th) <= budget:
            return th
        smallest_legal = th
    return smallest_legal                        # nothing fits: smallest legal TH


def _conv_stats_pass(x_nhwc, w_hwio, *, compute_dtype, inter_dtype,
                     in_scale=None, in_shift=None, vmem_limit):
    """One pipelined conv pass.  Returns (conv_raw (N,H*W,Cout), mean, var)."""
    N, H, W, Cin = x_nhwc.shape
    Cout = w_hwio.shape[-1]
    fuse_bn = in_scale is not None

    # Channel tile: fill the 256-wide MXU on v6e/v7x when possible.
    # TODO(synk): prefer tco=128 on v5e (4x128^2 MXU) via chip-version probe.
    if Cout % 256 == 0:
        tco = min(256, Cout)
    elif Cout % 128 == 0:
        tco = min(128, Cout)
    else:
        tco = Cout
    nco = Cout // tco

    x_bytes = x_nhwc.dtype.itemsize
    c_bytes = jnp.dtype(compute_dtype).itemsize
    o_bytes = jnp.dtype(inter_dtype).itemsize
    th = _pick_conv_row_tile(H, W, Cin, tco, x_bytes, c_bytes, o_bytes,
                             budget=int(vmem_limit * 0.7))
    nrt = H // th

    # Keep the larger operand resident: weights outer-most for deep layers.
    channels_outer = (9 * Cin * tco * c_bytes) > (H * W * Cin * x_bytes)

    wk = w_hwio.reshape(3, 3 * Cin, Cout).astype(compute_dtype)

    if channels_outer:
        grid, rt_axis = (nco, N, nrt), 2
        x_map = lambda j, n, rt: (n, 0, 0, 0)
        w_map = lambda j, n, rt: (0, 0, j)
        c_map = lambda j, n, rt: (n, rt, j)
        s_map = lambda j, n, rt: (n, rt, 0, j)
        v_map = lambda j, n, rt: (0, 0, 0)
    else:
        grid, rt_axis = (N, nrt, nco), 1
        x_map = lambda n, rt, j: (n, 0, 0, 0)
        w_map = lambda n, rt, j: (0, 0, j)
        c_map = lambda n, rt, j: (n, rt, j)
        s_map = lambda n, rt, j: (n, rt, 0, j)
        v_map = lambda n, rt, j: (0, 0, 0)

    in_specs = [pl.BlockSpec((1, H, W, Cin), x_map)]
    inputs = [x_nhwc]
    if fuse_bn:
        in_specs += [pl.BlockSpec((1, 1, Cin), v_map),
                     pl.BlockSpec((1, 1, Cin), v_map)]
        inputs += [in_scale.reshape(1, 1, Cin).astype(jnp.float32),
                   in_shift.reshape(1, 1, Cin).astype(jnp.float32)]
    in_specs += [pl.BlockSpec((3, 3 * Cin, tco), w_map)]
    inputs += [wk]

    kernel = functools.partial(_conv_stats_kernel, th=th, rt_axis=rt_axis,
                               fuse_bn=fuse_bn, compute_dtype=compute_dtype)

    conv_raw, stats = pl.pallas_call(
        kernel,
        out_shape=(jax.ShapeDtypeStruct((N, H * W, Cout), inter_dtype),
                   jax.ShapeDtypeStruct((N, nrt, 2, Cout), jnp.float32)),
        grid_spec=pltpu.PrefetchScalarGridSpec(
            num_scalar_prefetch=0,
            grid=grid,
            in_specs=in_specs,
            out_specs=(pl.BlockSpec((1, th * W, tco), c_map),
                       pl.BlockSpec((1, 1, 2, tco), s_map))),
        compiler_params=pltpu.CompilerParams(
            dimension_semantics=("parallel", "parallel", "parallel"),
            vmem_limit_bytes=vmem_limit),
    )(*inputs)

    # Finalize BN statistics (tiny O(Cout) math).  Two-level sums (per-tile,
    # then total) in f32; variance clamped against cancellation.
    cnt = jnp.float32(N * H * W)
    total = jnp.sum(stats, axis=(0, 1))                      # (2, Cout)
    mean = total[0] / cnt
    var = jnp.maximum(total[1] / cnt - mean * mean, 0.0)
    return conv_raw, mean, var


# -------------------- final epilogue: scale/shift + ReLU ----------------------
def _scale_shift_relu_kernel(y_ref, scale_ref, shift_ref, o_ref):
    y = y_ref[...].astype(jnp.float32) * scale_ref[...] + shift_ref[...]
    o_ref[...] = jnp.maximum(y, 0.0).astype(o_ref.dtype)


def _pick_row_tile(rows, lane, in_bytes, out_bytes, budget):
    """Largest legal row tile whose double-buffered bytes fit `budget`."""
    per_row = lane * 2 * (in_bytes + out_bytes)
    smallest_legal = rows
    for t in range(rows, 0, -1):
        if rows % t:
            continue
        if t % 8 and t != rows:
            continue
        if t * per_row + 4 * lane * 8 <= budget:
            return t
        smallest_legal = t
    return smallest_legal


def _bn_relu_pass(conv_raw, scale, shift, W, *, out_dtype, vmem_limit):
    N, HW, Cout = conv_raw.shape
    H = HW // W
    rows, lane = N * H, W * Cout
    y2 = conv_raw.reshape(rows, lane)                        # lane-dense layout
    scale_t = jnp.tile(scale, W).reshape(1, lane).astype(jnp.float32)
    shift_t = jnp.tile(shift, W).reshape(1, lane).astype(jnp.float32)
    tr = _pick_row_tile(rows, lane, conv_raw.dtype.itemsize,
                        jnp.dtype(out_dtype).itemsize,
                        budget=int(vmem_limit * 0.7))
    out2 = pl.pallas_call(
        _scale_shift_relu_kernel,
        out_shape=jax.ShapeDtypeStruct((rows, lane), out_dtype),
        grid=(rows // tr,),
        in_specs=[pl.BlockSpec((tr, lane), lambda i: (i, 0)),
                  pl.BlockSpec((1, lane), lambda i: (0, 0)),
                  pl.BlockSpec((1, lane), lambda i: (0, 0))],
        out_specs=pl.BlockSpec((tr, lane), lambda i: (i, 0)),
        compiler_params=pltpu.CompilerParams(
            dimension_semantics=("parallel",),
            vmem_limit_bytes=vmem_limit),
    )(y2, scale_t, shift_t)
    return out2.reshape(N, H, W, Cout)


# -------------------------------- double_conv ---------------------------------
@functools.partial(jax.jit, static_argnames=("compute_dtype", "inter_dtype"))
def double_conv_forward(x_nchw, params, compute_dtype=jnp.bfloat16,
                        inter_dtype=jnp.bfloat16):
    """PyTorch double_conv forward: (conv3x3 => BN(train stats) => ReLU) * 2."""
    vmem_limit = _vmem_limit_bytes()
    N, _, H, W = x_nchw.shape

    # TODO(synk): a full U-Net would keep activations NHWC end-to-end (and fuse
    # this transpose into the first conv prologue); kept as wrapper ops here to
    # match the PyTorch NCHW interface.
    x = jnp.transpose(x_nchw, (0, 2, 3, 1))

    # stage 1: conv1 + batch stats (conv bias dropped: BN mean cancels it).
    c1, m1, v1 = _conv_stats_pass(
        x, params["w1"], compute_dtype=compute_dtype, inter_dtype=inter_dtype,
        vmem_limit=vmem_limit)
    scale1 = params["g1"] * lax.rsqrt(v1 + _BN_EPS)
    shift1 = params["be1"] - m1 * scale1

    # stage 2: BN1 + ReLU1 fused into the conv2 prologue; conv2 + batch stats.
    Cmid = params["w1"].shape[-1]
    c1_img = c1.reshape(N, H, W, Cmid)                       # free relabel
    c2, m2, v2 = _conv_stats_pass(
        c1_img, params["w2"], compute_dtype=compute_dtype, inter_dtype=inter_dtype,
        in_scale=scale1, in_shift=shift1, vmem_limit=vmem_limit)
    scale2 = params["g2"] * lax.rsqrt(v2 + _BN_EPS)
    shift2 = params["be2"] - m2 * scale2

    # final epilogue: BN2 + ReLU2 (lane-dense, byte-budgeted row tiles).
    out = _bn_relu_pass(c2, scale2, shift2, W, out_dtype=jnp.float32,
                        vmem_limit=vmem_limit)
    return jnp.transpose(out, (0, 3, 1, 2))


def init_params(key, in_ch, out_ch):
    """Deterministic init matching PyTorch defaults (kaiming-uniform style)."""
    ks = jax.random.split(key, 4)

    def conv_init(kw, kb, cin, cout):
        fan_in = cin * 9
        bound = 1.0 / jnp.sqrt(fan_in)
        w = jax.random.uniform(kw, (3, 3, cin, cout), jnp.float32, -bound, bound)
        b = jax.random.uniform(kb, (cout,), jnp.float32, -bound, bound)
        return w, b

    w1, b1 = conv_init(ks[0], ks[1], in_ch, out_ch)
    w2, b2 = conv_init(ks[2], ks[3], out_ch, out_ch)
    ones = jnp.ones((out_ch,), jnp.float32)
    zeros = jnp.zeros((out_ch,), jnp.float32)
    # Biases kept for reference parity; kernels omit them (training BN cancels).
    return {"w1": w1, "b1": b1, "g1": ones, "be1": zeros,
            "w2": w2, "b2": b2, "g2": ones, "be2": zeros}


# ----------------------------- reference (pure JAX) ---------------------------
def _ref_conv_bn_relu(x_nhwc, w_hwio, bias, gamma, beta):
    y = lax.conv_general_dilated(
        x_nhwc, w_hwio, window_strides=(1, 1), padding="SAME",
        dimension_numbers=("NHWC", "HWIO", "NHWC"),
        precision=lax.Precision.HIGHEST)
    y = y + bias[None, None, None, :]
    mean = jnp.mean(y, axis=(0, 1, 2), keepdims=True)
    var = jnp.mean(jnp.square(y - mean), axis=(0, 1, 2), keepdims=True)
    y = (y - mean) * lax.rsqrt(var + _BN_EPS)
    y = y * gamma[None, None, None, :] + beta[None, None, None, :]
    return jnp.maximum(y, 0.0)


def _ref_double_conv(x_nchw, p):
    x = jnp.transpose(x_nchw, (0, 2, 3, 1))
    x = _ref_conv_bn_relu(x, p["w1"], p["b1"], p["g1"], p["be1"])
    x = _ref_conv_bn_relu(x, p["w2"], p["b2"], p["g2"], p["be2"])
    return jnp.transpose(x, (0, 3, 1, 2))


# ------------------------------------ main ------------------------------------
if __name__ == "__main__":
    key = jax.random.PRNGKey(0)
    k_x, k_p = jax.random.split(key)

    N, in_ch, out_ch, H, W = 2, 4, 8, 16, 16
    x = jax.random.normal(k_x, (N, in_ch, H, W), jnp.float32)
    params = init_params(k_p, in_ch, out_ch)

    ref = _ref_double_conv(x, params)

    # (1) f32 configuration: checks the conv/tiling/fused-BN/epilogue logic.
    out_f32 = jax.block_until_ready(
        double_conv_forward(x, params, compute_dtype=jnp.float32,
                            inter_dtype=jnp.float32))
    assert out_f32.shape == (N, out_ch, H, W), out_f32.shape
    err32 = float(jnp.max(jnp.abs(out_f32 - ref)))
    assert err32 < 5e-2, err32

    # (2) performance configuration: bf16 MXU operands + bf16 inter-stage
    #     activation, f32 statistics / epilogue.
    out_bf16 = jax.block_until_ready(double_conv_forward(x, params))
    assert out_bf16.shape == (N, out_ch, H, W), out_bf16.shape
    err16 = float(jnp.max(jnp.abs(out_bf16 - ref)))
    assert err16 < 1.5e-1, err16

    print("KERNEL_OK")
</pallas_src>

<mosaic_0001>
module attributes {stable_mosaic.version = 11 : i64} {
  func.func @_conv_stats_kernel(%arg0: i32, %arg1: i32, %arg2: i32, %arg3: memref<1x16x16x4xf32, #tpu.memory_space<vmem>>, %arg4: memref<3x12x8xf32, #tpu.memory_space<vmem>>, %arg5: memref<1x256x8xf32, #tpu.memory_space<vmem>>, %arg6: memref<1x1x2x8xf32, #tpu.memory_space<vmem>>) attributes {dimension_semantics = [#tpu.dimension_semantics<parallel>, #tpu.dimension_semantics<parallel>, #tpu.dimension_semantics<parallel>], iteration_bounds = array<i64: 2, 1, 1>, scalar_prefetch = 0 : i64, scratch_operands = 0 : i64, tpu.core_type = #tpu.core_type<tc>, window_params = [{transform_indices = @transform_0, window_bounds = array<i64: 1, 16, 16, 4>}, {transform_indices = @transform_1, window_bounds = array<i64: 3, 12, 8>}, {transform_indices = @transform_2, window_bounds = array<i64: 1, 256, 8>}, {transform_indices = @transform_3, window_bounds = array<i64: 1, 1, 2, 8>}]} {
    %c16_i32 = arith.constant 16 : i32
    %0 = arith.muli %arg1, %c16_i32 : i32
    %c0 = arith.constant 0 : index
    %1 = arith.index_cast %0 : i32 to index
    %c0_0 = arith.constant 0 : index
    %c0_1 = arith.constant 0 : index
    %2 = vector.load %arg3[%c0, %1, %c0_0, %c0_1] : memref<1x16x16x4xf32, #tpu.memory_space<vmem>>, vector<1x16x16x4xf32>
    %3 = vector.shape_cast %2 : vector<1x16x16x4xf32> to vector<16x16x4xf32>
    %c1_i32 = arith.constant 1 : i32
    %4 = arith.subi %0, %c1_i32 : i32
    %c0_i32 = arith.constant 0 : i32
    %5 = arith.maxsi %4, %c0_i32 : i32
    %c0_2 = arith.constant 0 : index
    %6 = arith.index_cast %5 : i32 to index
    %c0_3 = arith.constant 0 : index
    %c0_4 = arith.constant 0 : index
    %7 = vector.load %arg3[%c0_2, %6, %c0_3, %c0_4] : memref<1x16x16x4xf32, #tpu.memory_space<vmem>>, vector<1x1x16x4xf32>
    %8 = vector.shape_cast %7 : vector<1x1x16x4xf32> to vector<1x16x4xf32>
    %c0_i32_5 = arith.constant 0 : i32
    %9 = arith.cmpi eq, %arg1, %c0_i32_5 : i32
    %cst = arith.constant 0.000000e+00 : f32
    %10 = vector.broadcast %cst : f32 to vector<1x16x4xf32>
    %11 = arith.select %9, %10, %8 : vector<1x16x4xf32>
    %c16_i32_6 = arith.constant 16 : i32
    %12 = arith.addi %0, %c16_i32_6 : i32
    %c15_i32 = arith.constant 15 : i32
    %13 = arith.minsi %12, %c15_i32 : i32
    %c0_7 = arith.constant 0 : index
    %14 = arith.index_cast %13 : i32 to index
    %c0_8 = arith.constant 0 : index
    %c0_9 = arith.constant 0 : index
    %15 = vector.load %arg3[%c0_7, %14, %c0_8, %c0_9] : memref<1x16x16x4xf32, #tpu.memory_space<vmem>>, vector<1x1x16x4xf32>
    %16 = vector.shape_cast %15 : vector<1x1x16x4xf32> to vector<1x16x4xf32>
    %c0_i32_10 = arith.constant 0 : i32
    %17 = arith.cmpi eq, %arg1, %c0_i32_10 : i32
    %cst_11 = arith.constant 0.000000e+00 : f32
    %18 = vector.broadcast %cst_11 : f32 to vector<1x16x4xf32>
    %19 = arith.select %17, %18, %16 : vector<1x16x4xf32>
    %20 = tpu.concatenate %11, %3, %19 in 0 : vector<1x16x4xf32>, vector<16x16x4xf32>, vector<1x16x4xf32> -> vector<18x16x4xf32>
    %cst_12 = arith.constant 0.000000e+00 : f32
    %21 = vector.broadcast %cst_12 : f32 to vector<18x1x4xf32>
    %22 = tpu.concatenate %21, %20, %21 in 1 : vector<18x1x4xf32>, vector<18x16x4xf32>, vector<18x1x4xf32> -> vector<18x18x4xf32>
    %cst_13 = arith.constant 0.000000e+00 : f32
    %23 = vector.broadcast %cst_13 : f32 to vector<256x8xf32>
    %24 = vector.extract_strided_slice %22 {offsets = [0, 0, 0], sizes = [16, 18, 4], strides = [1, 1, 1]} : vector<18x18x4xf32> to vector<16x18x4xf32>
    %25 = vector.extract_strided_slice %24 {offsets = [0, 0, 0], sizes = [16, 16, 4], strides = [1, 1, 1]} : vector<16x18x4xf32> to vector<16x16x4xf32>
    %26 = vector.extract_strided_slice %24 {offsets = [0, 1, 0], sizes = [16, 16, 4], strides = [1, 1, 1]} : vector<16x18x4xf32> to vector<16x16x4xf32>
    %27 = vector.extract_strided_slice %24 {offsets = [0, 2, 0], sizes = [16, 16, 4], strides = [1, 1, 1]} : vector<16x18x4xf32> to vector<16x16x4xf32>
    %28 = tpu.concatenate %25, %26, %27 in 2 : vector<16x16x4xf32>, vector<16x16x4xf32>, vector<16x16x4xf32> -> vector<16x16x12xf32>
    %29 = vector.shape_cast %28 : vector<16x16x12xf32> to vector<256x12xf32>
    %c0_14 = arith.constant 0 : index
    %c0_15 = arith.constant 0 : index
    %c0_16 = arith.constant 0 : index
    %30 = vector.load %arg4[%c0_14, %c0_15, %c0_16] : memref<3x12x8xf32, #tpu.memory_space<vmem>>, vector<1x12x8xf32>
    %31 = vector.shape_cast %30 : vector<1x12x8xf32> to vector<12x8xf32>
    %cst_17 = arith.constant dense<0.000000e+00> : vector<256x8xf32>
    %32 = tpu.matmul %29, %31, %cst_17 {dimension_numbers = #tpu.dot_dimension_numbers<[1], [0], [0], [1], [0, 0, 1, 1], [], []>} : vector<256x12xf32>, vector<12x8xf32>, vector<256x8xf32> -> vector<256x8xf32>
    %33 = arith.addf %23, %32 : vector<256x8xf32>
    %34 = vector.extract_strided_slice %22 {offsets = [1, 0, 0], sizes = [16, 18, 4], strides = [1, 1, 1]} : vector<18x18x4xf32> to vector<16x18x4xf32>
    %35 = vector.extract_strided_slice %34 {offsets = [0, 0, 0], sizes = [16, 16, 4], strides = [1, 1, 1]} : vector<16x18x4xf32> to vector<16x16x4xf32>
    %36 = vector.extract_strided_slice %34 {offsets = [0, 1, 0], sizes = [16, 16, 4], strides = [1, 1, 1]} : vector<16x18x4xf32> to vector<16x16x4xf32>
    %37 = vector.extract_strided_slice %34 {offsets = [0, 2, 0], sizes = [16, 16, 4], strides = [1, 1, 1]} : vector<16x18x4xf32> to vector<16x16x4xf32>
    %38 = tpu.concatenate %35, %36, %37 in 2 : vector<16x16x4xf32>, vector<16x16x4xf32>, vector<16x16x4xf32> -> vector<16x16x12xf32>
    %39 = vector.shape_cast %38 : vector<16x16x12xf32> to vector<256x12xf32>
    %c1 = arith.constant 1 : index
    %c0_18 = arith.constant 0 : index
    %c0_19 = arith.constant 0 : index
    %40 = vector.load %arg4[%c1, %c0_18, %c0_19] : memref<3x12x8xf32, #tpu.memory_space<vmem>>, vector<1x12x8xf32>
    %41 = vector.shape_cast %40 : vector<1x12x8xf32> to vector<12x8xf32>
    %cst_20 = arith.constant dense<0.000000e+00> : vector<256x8xf32>
    %42 = tpu.matmul %39, %41, %cst_20 {dimension_numbers = #tpu.dot_dimension_numbers<[1], [0], [0], [1], [0, 0, 1, 1], [], []>} : vector<256x12xf32>, vector<12x8xf32>, vector<256x8xf32> -> vector<256x8xf32>
    %43 = arith.addf %33, %42 : vector<256x8xf32>
    %44 = vector.extract_strided_slice %22 {offsets = [2, 0, 0], sizes = [16, 18, 4], strides = [1, 1, 1]} : vector<18x18x4xf32> to vector<16x18x4xf32>
    %45 = vector.extract_strided_slice %44 {offsets = [0, 0, 0], sizes = [16, 16, 4], strides = [1, 1, 1]} : vector<16x18x4xf32> to vector<16x16x4xf32>
    %46 = vector.extract_strided_slice %44 {offsets = [0, 1, 0], sizes = [16, 16, 4], strides = [1, 1, 1]} : vector<16x18x4xf32> to vector<16x16x4xf32>
    %47 = vector.extract_strided_slice %44 {offsets = [0, 2, 0], sizes = [16, 16, 4], strides = [1, 1, 1]} : vector<16x18x4xf32> to vector<16x16x4xf32>
    %48 = tpu.concatenate %45, %46, %47 in 2 : vector<16x16x4xf32>, vector<16x16x4xf32>, vector<16x16x4xf32> -> vector<16x16x12xf32>
    %49 = vector.shape_cast %48 : vector<16x16x12xf32> to vector<256x12xf32>
    %c2 = arith.constant 2 : index
    %c0_21 = arith.constant 0 : index
    %c0_22 = arith.constant 0 : index
    %50 = vector.load %arg4[%c2, %c0_21, %c0_22] : memref<3x12x8xf32, #tpu.memory_space<vmem>>, vector<1x12x8xf32>
    %51 = vector.shape_cast %50 : vector<1x12x8xf32> to vector<12x8xf32>
    %cst_23 = arith.constant dense<0.000000e+00> : vector<256x8xf32>
    %52 = tpu.matmul %49, %51, %cst_23 {dimension_numbers = #tpu.dot_dimension_numbers<[1], [0], [0], [1], [0, 0, 1, 1], [], []>} : vector<256x12xf32>, vector<12x8xf32>, vector<256x8xf32> -> vector<256x8xf32>
    %53 = arith.addf %43, %52 : vector<256x8xf32>
    %c0_24 = arith.constant 0 : index
    %c0_25 = arith.constant 0 : index
    %c0_26 = arith.constant 0 : index
    %54 = vector.load %arg5[%c0_24, %c0_25, %c0_26] : memref<1x256x8xf32, #tpu.memory_space<vmem>>, vector<1x256x8xf32>
    %55 = vector.shape_cast %54 : vector<1x256x8xf32> to vector<256x8xf32>
    %56 = vector.shape_cast %53 : vector<256x8xf32> to vector<1x256x8xf32>
    tpu.vector_store %arg5[%c0_24, %c0_25, %c0_26], %56 {strides = array<i32>} : memref<1x256x8xf32, #tpu.memory_space<vmem>>, vector<1x256x8xf32>,
    %cst_27 = arith.constant dense<0.000000e+00> : vector<8xf32>
    %57 = vector.multi_reduction <add>, %53, %cst_27 [0] : vector<256x8xf32> to vector<8xf32>
    %58 = vector.shape_cast %57 : vector<8xf32> to vector<1x8xf32>
    %59 = arith.mulf %53, %53 : vector<256x8xf32>
    %cst_28 = arith.constant dense<0.000000e+00> : vector<8xf32>
    %60 = vector.multi_reduction <add>, %59, %cst_28 [0] : vector<256x8xf32> to vector<8xf32>
    %61 = vector.shape_cast %60 : vector<8xf32> to vector<1x8xf32>
    %62 = tpu.concatenate %58, %61 in 0 : vector<1x8xf32>, vector<1x8xf32> -> vector<2x8xf32>
    %c0_29 = arith.constant 0 : index
    %c0_30 = arith.constant 0 : index
    %c0_31 = arith.constant 0 : index
    %c0_32 = arith.constant 0 : index
    %63 = vector.load %arg6[%c0_29, %c0_30, %c0_31, %c0_32] : memref<1x1x2x8xf32, #tpu.memory_space<vmem>>, vector<1x1x2x8xf32>
    %64 = vector.shape_cast %63 : vector<1x1x2x8xf32> to vector<2x8xf32>
    %65 = vector.shape_cast %62 : vector<2x8xf32> to vector<1x1x2x8xf32>
    tpu.vector_store %arg6[%c0_29, %c0_30, %c0_31, %c0_32], %65 {strides = array<i32>} : memref<1x1x2x8xf32, #tpu.memory_space<vmem>>, vector<1x1x2x8xf32>,
    return
  }
  func.func @transform_0(%arg0: i32, %arg1: i32, %arg2: i32) -> (i32, i32, i32, i32) {
    %c0_i32 = arith.constant 0 : i32
    %c0_i32_0 = arith.constant 0 : i32
    %c0_i32_1 = arith.constant 0 : i32
    %c0_i32_2 = arith.constant 0 : i32
    return %arg0, %c0_i32, %c0_i32_0, %c0_i32_1 : i32, i32, i32, i32
  }
  func.func @transform_1(%arg0: i32, %arg1: i32, %arg2: i32) -> (i32, i32, i32) {
    %c0_i32 = arith.constant 0 : i32
    %c0_i32_0 = arith.constant 0 : i32
    %c0_i32_1 = arith.constant 0 : i32
    return %c0_i32, %c0_i32_0, %arg2 : i32, i32, i32
  }
  func.func @transform_2(%arg0: i32, %arg1: i32, %arg2: i32) -> (i32, i32, i32) {
    %c0_i32 = arith.constant 0 : i32
    return %arg0, %arg1, %arg2 : i32, i32, i32
  }
  func.func @transform_3(%arg0: i32, %arg1: i32, %arg2: i32) -> (i32, i32, i32, i32) {
    %c0_i32 = arith.constant 0 : i32
    %c0_i32_0 = arith.constant 0 : i32
    return %arg0, %arg1, %c0_i32, %arg2 : i32, i32, i32, i32
  }
}

module attributes {stable_mosaic.version = 11 : i64} {
  func.func @_conv_stats_kernel(%arg0: i32, %arg1: i32, %arg2: i32, %arg3: memref<1x16x16x8xf32, #tpu.memory_space<vmem>>, %arg4: memref<1x1x8xf32, #tpu.memory_space<vmem>>, %arg5: memref<1x1x8xf32, #tpu.memory_space<vmem>>, %arg6: memref<3x24x8xf32, #tpu.memory_space<vmem>>, %arg7: memref<1x256x8xf32, #tpu.memory_space<vmem>>, %arg8: memref<1x1x2x8xf32, #tpu.memory_space<vmem>>) attributes {dimension_semantics = [#tpu.dimension_semantics<parallel>, #tpu.dimension_semantics<parallel>, #tpu.dimension_semantics<parallel>], iteration_bounds = array<i64: 2, 1, 1>, scalar_prefetch = 0 : i64, scratch_operands = 0 : i64, tpu.core_type = #tpu.core_type<tc>, window_params = [{transform_indices = @transform_0, window_bounds = array<i64: 1, 16, 16, 8>}, {pipeline_mode = #tpu.pipeline_mode<synchronous>, transform_indices = @transform_1, window_bounds = array<i64: 1, 1, 8>}, {pipeline_mode = #tpu.pipeline_mode<synchronous>, transform_indices = @transform_2, window_bounds = array<i64: 1, 1, 8>}, {transform_indices = @transform_3, window_bounds = array<i64: 3, 24, 8>}, {transform_indices = @transform_4, window_bounds = array<i64: 1, 256, 8>}, {transform_indices = @transform_5, window_bounds = array<i64: 1, 1, 2, 8>}]} {
    %c16_i32 = arith.constant 16 : i32
    %0 = arith.muli %arg1, %c16_i32 : i32
    %c0 = arith.constant 0 : index
    %1 = arith.index_cast %0 : i32 to index
    %c0_0 = arith.constant 0 : index
    %c0_1 = arith.constant 0 : index
    %2 = vector.load %arg3[%c0, %1, %c0_0, %c0_1] : memref<1x16x16x8xf32, #tpu.memory_space<vmem>>, vector<1x16x16x8xf32>
    %3 = vector.shape_cast %2 : vector<1x16x16x8xf32> to vector<16x16x8xf32>
    %c0_2 = arith.constant 0 : index
    %c0_3 = arith.constant 0 : index
    %c0_4 = arith.constant 0 : index
    %4 = vector.load %arg4[%c0_2, %c0_3, %c0_4] : memref<1x1x8xf32, #tpu.memory_space<vmem>>, vector<1x1x8xf32>
    %5 = vector.broadcast %4 : vector<1x1x8xf32> to vector<16x16x8xf32>
    %6 = arith.mulf %3, %5 : vector<16x16x8xf32>
    %c0_5 = arith.constant 0 : index
    %c0_6 = arith.constant 0 : index
    %c0_7 = arith.constant 0 : index
    %7 = vector.load %arg5[%c0_5, %c0_6, %c0_7] : memref<1x1x8xf32, #tpu.memory_space<vmem>>, vector<1x1x8xf32>
    %8 = vector.broadcast %7 : vector<1x1x8xf32> to vector<16x16x8xf32>
    %9 = arith.addf %6, %8 : vector<16x16x8xf32>
    %cst = arith.constant 0.000000e+00 : f32
    %10 = vector.broadcast %cst : f32 to vector<16x16x8xf32>
    %11 = arith.maximumf %9, %10 : vector<16x16x8xf32>
    %c1_i32 = arith.constant 1 : i32
    %12 = arith.subi %0, %c1_i32 : i32
    %c0_i32 = arith.constant 0 : i32
    %13 = arith.maxsi %12, %c0_i32 : i32
    %c0_8 = arith.constant 0 : index
    %14 = arith.index_cast %13 : i32 to index
    %c0_9 = arith.constant 0 : index
    %c0_10 = arith.constant 0 : index
    %15 = vector.load %arg3[%c0_8, %14, %c0_9, %c0_10] : memref<1x16x16x8xf32, #tpu.memory_space<vmem>>, vector<1x1x16x8xf32>
    %16 = vector.shape_cast %15 : vector<1x1x16x8xf32> to vector<1x16x8xf32>
    %c0_11 = arith.constant 0 : index
    %c0_12 = arith.constant 0 : index
    %c0_13 = arith.constant 0 : index
    %17 = vector.load %arg4[%c0_11, %c0_12, %c0_13] : memref<1x1x8xf32, #tpu.memory_space<vmem>>, vector<1x1x8xf32>
    %18 = vector.broadcast %17 : vector<1x1x8xf32> to vector<1x16x8xf32>
    %19 = arith.mulf %16, %18 : vector<1x16x8xf32>
    %c0_14 = arith.constant 0 : index
    %c0_15 = arith.constant 0 : index
    %c0_16 = arith.constant 0 : index
    %20 = vector.load %arg5[%c0_14, %c0_15, %c0_16] : memref<1x1x8xf32, #tpu.memory_space<vmem>>, vector<1x1x8xf32>
    %21 = vector.broadcast %20 : vector<1x1x8xf32> to vector<1x16x8xf32>
    %22 = arith.addf %19, %21 : vector<1x16x8xf32>
    %cst_17 = arith.constant 0.000000e+00 : f32
    %23 = vector.broadcast %cst_17 : f32 to vector<1x16x8xf32>
    %24 = arith.maximumf %22, %23 : vector<1x16x8xf32>
    %c0_i32_18 = arith.constant 0 : i32
    %25 = arith.cmpi eq, %arg1, %c0_i32_18 : i32
    %cst_19 = arith.constant 0.000000e+00 : f32
    %26 = vector.broadcast %cst_19 : f32 to vector<1x16x8xf32>
    %27 = arith.select %25, %26, %24 : vector<1x16x8xf32>
    %c16_i32_20 = arith.constant 16 : i32
    %28 = arith.addi %0, %c16_i32_20 : i32
    %c15_i32 = arith.constant 15 : i32
    %29 = arith.minsi %28, %c15_i32 : i32
    %c0_21 = arith.constant 0 : index
    %30 = arith.index_cast %29 : i32 to index
    %c0_22 = arith.constant 0 : index
    %c0_23 = arith.constant 0 : index
    %31 = vector.load %arg3[%c0_21, %30, %c0_22, %c0_23] : memref<1x16x16x8xf32, #tpu.memory_space<vmem>>, vector<1x1x16x8xf32>
    %32 = vector.shape_cast %31 : vector<1x1x16x8xf32> to vector<1x16x8xf32>
    %c0_24 = arith.constant 0 : index
    %c0_25 = arith.constant 0 : index
    %c0_26 = arith.constant 0 : index
    %33 = vector.load %arg4[%c0_24, %c0_25, %c0_26] : memref<1x1x8xf32, #tpu.memory_space<vmem>>, vector<1x1x8xf32>
    %34 = vector.broadcast %33 : vector<1x1x8xf32> to vector<1x16x8xf32>
    %35 = arith.mulf %32, %34 : vector<1x16x8xf32>
    %c0_27 = arith.constant 0 : index
    %c0_28 = arith.constant 0 : index
    %c0_29 = arith.constant 0 : index
    %36 = vector.load %arg5[%c0_27, %c0_28, %c0_29] : memref<1x1x8xf32, #tpu.memory_space<vmem>>, vector<1x1x8xf32>
    %37 = vector.broadcast %36 : vector<1x1x8xf32> to vector<1x16x8xf32>
    %38 = arith.addf %35, %37 : vector<1x16x8xf32>
    %cst_30 = arith.constant 0.000000e+00 : f32
    %39 = vector.broadcast %cst_30 : f32 to vector<1x16x8xf32>
    %40 = arith.maximumf %38, %39 : vector<1x16x8xf32>
    %c0_i32_31 = arith.constant 0 : i32
    %41 = arith.cmpi eq, %arg1, %c0_i32_31 : i32
    %cst_32 = arith.constant 0.000000e+00 : f32
    %42 = vector.broadcast %cst_32 : f32 to vector<1x16x8xf32>
    %43 = arith.select %41, %42, %40 : vector<1x16x8xf32>
    %44 = tpu.concatenate %27, %11, %43 in 0 : vector<1x16x8xf32>, vector<16x16x8xf32>, vector<1x16x8xf32> -> vector<18x16x8xf32>
    %cst_33 = arith.constant 0.000000e+00 : f32
    %45 = vector.broadcast %cst_33 : f32 to vector<18x1x8xf32>
    %46 = tpu.concatenate %45, %44, %45 in 1 : vector<18x1x8xf32>, vector<18x16x8xf32>, vector<18x1x8xf32> -> vector<18x18x8xf32>
    %cst_34 = arith.constant 0.000000e+00 : f32
    %47 = vector.broadcast %cst_34 : f32 to vector<256x8xf32>
    %48 = vector.extract_strided_slice %46 {offsets = [0, 0, 0], sizes = [16, 18, 8], strides = [1, 1, 1]} : vector<18x18x8xf32> to vector<16x18x8xf32>
    %49 = vector.extract_strided_slice %48 {offsets = [0, 0, 0], sizes = [16, 16, 8], strides = [1, 1, 1]} : vector<16x18x8xf32> to vector<16x16x8xf32>
    %50 = vector.extract_strided_slice %48 {offsets = [0, 1, 0], sizes = [16, 16, 8], strides = [1, 1, 1]} : vector<16x18x8xf32> to vector<16x16x8xf32>
    %51 = vector.extract_strided_slice %48 {offsets = [0, 2, 0], sizes = [16, 16, 8], strides = [1, 1, 1]} : vector<16x18x8xf32> to vector<16x16x8xf32>
    %52 = tpu.concatenate %49, %50, %51 in 2 : vector<16x16x8xf32>, vector<16x16x8xf32>, vector<16x16x8xf32> -> vector<16x16x24xf32>
    %53 = vector.shape_cast %52 : vector<16x16x24xf32> to vector<256x24xf32>
    %c0_35 = arith.constant 0 : index
    %c0_36 = arith.constant 0 : index
    %c0_37 = arith.constant 0 : index
    %54 = vector.load %arg6[%c0_35, %c0_36, %c0_37] : memref<3x24x8xf32, #tpu.memory_space<vmem>>, vector<1x24x8xf32>
    %55 = vector.shape_cast %54 : vector<1x24x8xf32> to vector<24x8xf32>
    %cst_38 = arith.constant dense<0.000000e+00> : vector<256x8xf32>
    %56 = tpu.matmul %53, %55, %cst_38 {dimension_numbers = #tpu.dot_dimension_numbers<[1], [0], [0], [1], [0, 0, 1, 1], [], []>} : vector<256x24xf32>, vector<24x8xf32>, vector<256x8xf32> -> vector<256x8xf32>
    %57 = arith.addf %47, %56 : vector<256x8xf32>
    %58 = vector.extract_strided_slice %46 {offsets = [1, 0, 0], sizes = [16, 18, 8], strides = [1, 1, 1]} : vector<18x18x8xf32> to vector<16x18x8xf32>
    %59 = vector.extract_strided_slice %58 {offsets = [0, 0, 0], sizes = [16, 16, 8], strides = [1, 1, 1]} : vector<16x18x8xf32> to vector<16x16x8xf32>
    %60 = vector.extract_strided_slice %58 {offsets = [0, 1, 0], sizes = [16, 16, 8], strides = [1, 1, 1]} : vector<16x18x8xf32> to vector<16x16x8xf32>
    %61 = vector.extract_strided_slice %58 {offsets = [0, 2, 0], sizes = [16, 16, 8], strides = [1, 1, 1]} : vector<16x18x8xf32> to vector<16x16x8xf32>
    %62 = tpu.concatenate %59, %60, %61 in 2 : vector<16x16x8xf32>, vector<16x16x8xf32>, vector<16x16x8xf32> -> vector<16x16x24xf32>
    %63 = vector.shape_cast %62 : vector<16x16x24xf32> to vector<256x24xf32>
    %c1 = arith.constant 1 : index
    %c0_39 = arith.constant 0 : index
    %c0_40 = arith.constant 0 : index
    %64 = vector.load %arg6[%c1, %c0_39, %c0_40] : memref<3x24x8xf32, #tpu.memory_space<vmem>>, vector<1x24x8xf32>
    %65 = vector.shape_cast %64 : vector<1x24x8xf32> to vector<24x8xf32>
    %cst_41 = arith.constant dense<0.000000e+00> : vector<256x8xf32>
    %66 = tpu.matmul %63, %65, %cst_41 {dimension_numbers = #tpu.dot_dimension_numbers<[1], [0], [0], [1], [0, 0, 1, 1], [], []>} : vector<256x24xf32>, vector<24x8xf32>, vector<256x8xf32> -> vector<256x8xf32>
    %67 = arith.addf %57, %66 : vector<256x8xf32>
    %68 = vector.extract_strided_slice %46 {offsets = [2, 0, 0], sizes = [16, 18, 8], strides = [1, 1, 1]} : vector<18x18x8xf32> to vector<16x18x8xf32>
    %69 = vector.extract_strided_slice %68 {offsets = [0, 0, 0], sizes = [16, 16, 8], strides = [1, 1, 1]} : vector<16x18x8xf32> to vector<16x16x8xf32>
    %70 = vector.extract_strided_slice %68 {offsets = [0, 1, 0], sizes = [16, 16, 8], strides = [1, 1, 1]} : vector<16x18x8xf32> to vector<16x16x8xf32>
    %71 = vector.extract_strided_slice %68 {offsets = [0, 2, 0], sizes = [16, 16, 8], strides = [1, 1, 1]} : vector<16x18x8xf32> to vector<16x16x8xf32>
    %72 = tpu.concatenate %69, %70, %71 in 2 : vector<16x16x8xf32>, vector<16x16x8xf32>, vector<16x16x8xf32> -> vector<16x16x24xf32>
    %73 = vector.shape_cast %72 : vector<16x16x24xf32> to vector<256x24xf32>
    %c2 = arith.constant 2 : index
    %c0_42 = arith.constant 0 : index
    %c0_43 = arith.constant 0 : index
    %74 = vector.load %arg6[%c2, %c0_42, %c0_43] : memref<3x24x8xf32, #tpu.memory_space<vmem>>, vector<1x24x8xf32>
    %75 = vector.shape_cast %74 : vector<1x24x8xf32> to vector<24x8xf32>
    %cst_44 = arith.constant dense<0.000000e+00> : vector<256x8xf32>
    %76 = tpu.matmul %73, %75, %cst_44 {dimension_numbers = #tpu.dot_dimension_numbers<[1], [0], [0], [1], [0, 0, 1, 1], [], []>} : vector<256x24xf32>, vector<24x8xf32>, vector<256x8xf32> -> vector<256x8xf32>
    %77 = arith.addf %67, %76 : vector<256x8xf32>
    %c0_45 = arith.constant 0 : index
    %c0_46 = arith.constant 0 : index
    %c0_47 = arith.constant 0 : index
    %78 = vector.load %arg7[%c0_45, %c0_46, %c0_47] : memref<1x256x8xf32, #tpu.memory_space<vmem>>, vector<1x256x8xf32>
    %79 = vector.shape_cast %78 : vector<1x256x8xf32> to vector<256x8xf32>
    %80 = vector.shape_cast %77 : vector<256x8xf32> to vector<1x256x8xf32>
    tpu.vector_store %arg7[%c0_45, %c0_46, %c0_47], %80 {strides = array<i32>} : memref<1x256x8xf32, #tpu.memory_space<vmem>>, vector<1x256x8xf32>,
    %cst_48 = arith.constant dense<0.000000e+00> : vector<8xf32>
    %81 = vector.multi_reduction <add>, %77, %cst_48 [0] : vector<256x8xf32> to vector<8xf32>
    %82 = vector.shape_cast %81 : vector<8xf32> to vector<1x8xf32>
    %83 = arith.mulf %77, %77 : vector<256x8xf32>
    %cst_49 = arith.constant dense<0.000000e+00> : vector<8xf32>
    %84 = vector.multi_reduction <add>, %83, %cst_49 [0] : vector<256x8xf32> to vector<8xf32>
    %85 = vector.shape_cast %84 : vector<8xf32> to vector<1x8xf32>
    %86 = tpu.concatenate %82, %85 in 0 : vector<1x8xf32>, vector<1x8xf32> -> vector<2x8xf32>
    %c0_50 = arith.constant 0 : index
    %c0_51 = arith.constant 0 : index
    %c0_52 = arith.constant 0 : index
    %c0_53 = arith.constant 0 : index
    %87 = vector.load %arg8[%c0_50, %c0_51, %c0_52, %c0_53] : memref<1x1x2x8xf32, #tpu.memory_space<vmem>>, vector<1x1x2x8xf32>
    %88 = vector.shape_cast %87 : vector<1x1x2x8xf32> to vector<2x8xf32>
    %89 = vector.shape_cast %86 : vector<2x8xf32> to vector<1x1x2x8xf32>
    tpu.vector_store %arg8[%c0_50, %c0_51, %c0_52, %c0_53], %89 {strides = array<i32>} : memref<1x1x2x8xf32, #tpu.memory_space<vmem>>, vector<1x1x2x8xf32>,
    return
  }
  func.func @transform_0(%arg0: i32, %arg1: i32, %arg2: i32) -> (i32, i32, i32, i32) {
    %c0_i32 = arith.constant 0 : i32
    %c0_i32_0 = arith.constant 0 : i32
    %c0_i32_1 = arith.constant 0 : i32
    %c0_i32_2 = arith.constant 0 : i32
    return %arg0, %c0_i32, %c0_i32_0, %c0_i32_1 : i32, i32, i32, i32
  }
  func.func @transform_1(%arg0: i32, %arg1: i32, %arg2: i32) -> (i32, i32, i32) {
    %c0_i32 = arith.constant 0 : i32
    %c0_i32_0 = arith.constant 0 : i32
    %c0_i32_1 = arith.constant 0 : i32
    %c0_i32_2 = arith.constant 0 : i32
    return %c0_i32, %c0_i32_0, %c0_i32_1 : i32, i32, i32
  }
  func.func @transform_2(%arg0: i32, %arg1: i32, %arg2: i32) -> (i32, i32, i32) {
    %c0_i32 = arith.constant 0 : i32
    %c0_i32_0 = arith.constant 0 : i32
    %c0_i32_1 = arith.constant 0 : i32
    %c0_i32_2 = arith.constant 0 : i32
    return %c0_i32, %c0_i32_0, %c0_i32_1 : i32, i32, i32
  }
  func.func @transform_3(%arg0: i32, %arg1: i32, %arg2: i32) -> (i32, i32, i32) {
    %c0_i32 = arith.constant 0 : i32
    %c0_i32_0 = arith.constant 0 : i32
    %c0_i32_1 = arith.constant 0 : i32
    return %c0_i32, %c0_i32_0, %arg2 : i32, i32, i32
  }
  func.func @transform_4(%arg0: i32, %arg1: i32, %arg2: i32) -> (i32, i32, i32) {
    %c0_i32 = arith.constant 0 : i32
    return %arg0, %arg1, %arg2 : i32, i32, i32
  }
  func.func @transform_5(%arg0: i32, %arg1: i32, %arg2: i32) -> (i32, i32, i32, i32) {
    %c0_i32 = arith.constant 0 : i32
    %c0_i32_0 = arith.constant 0 : i32
    return %arg0, %arg1, %c0_i32, %arg2 : i32, i32, i32, i32
  }
}

module attributes {stable_mosaic.version = 11 : i64} {
  func.func @_scale_shift_relu_kernel(%arg0: i32, %arg1: memref<32x128xf32, #tpu.memory_space<vmem>>, %arg2: memref<1x128xf32, #tpu.memory_space<vmem>>, %arg3: memref<1x128xf32, #tpu.memory_space<vmem>>, %arg4: memref<32x128xf32, #tpu.memory_space<vmem>>) attributes {dimension_semantics = [#tpu.dimension_semantics<parallel>], iteration_bounds = array<i64: 1>, scalar_prefetch = 0 : i64, scratch_operands = 0 : i64, tpu.core_type = #tpu.core_type<tc>, window_params = [{transform_indices = @transform_0, window_bounds = array<i64: 32, 128>}, {pipeline_mode = #tpu.pipeline_mode<synchronous>, transform_indices = @transform_1, window_bounds = array<i64: 1, 128>}, {pipeline_mode = #tpu.pipeline_mode<synchronous>, transform_indices = @transform_2, window_bounds = array<i64: 1, 128>}, {transform_indices = @transform_3, window_bounds = array<i64: 32, 128>}]} {
    %c0 = arith.constant 0 : index
    %c0_0 = arith.constant 0 : index
    %0 = vector.load %arg1[%c0, %c0_0] : memref<32x128xf32, #tpu.memory_space<vmem>>, vector<32x128xf32>
    %c0_1 = arith.constant 0 : index
    %c0_2 = arith.constant 0 : index
    %1 = vector.load %arg2[%c0_1, %c0_2] : memref<1x128xf32, #tpu.memory_space<vmem>>, vector<1x128xf32>
    %2 = vector.broadcast %1 : vector<1x128xf32> to vector<32x128xf32>
    %3 = arith.mulf %0, %2 : vector<32x128xf32>
    %c0_3 = arith.constant 0 : index
    %c0_4 = arith.constant 0 : index
    %4 = vector.load %arg3[%c0_3, %c0_4] : memref<1x128xf32, #tpu.memory_space<vmem>>, vector<1x128xf32>
    %5 = vector.broadcast %4 : vector<1x128xf32> to vector<32x128xf32>
    %6 = arith.addf %3, %5 : vector<32x128xf32>
    %cst = arith.constant 0.000000e+00 : f32
    %7 = vector.broadcast %cst : f32 to vector<32x128xf32>
    %8 = arith.maximumf %6, %7 : vector<32x128xf32>
    %c0_5 = arith.constant 0 : index
    %c0_6 = arith.constant 0 : index
    %9 = vector.load %arg4[%c0_5, %c0_6] : memref<32x128xf32, #tpu.memory_space<vmem>>, vector<32x128xf32>
    tpu.vector_store %arg4[%c0_5, %c0_6], %8 {strides = array<i32>} : memref<32x128xf32, #tpu.memory_space<vmem>>, vector<32x128xf32>,
    return
  }
  func.func @transform_0(%arg0: i32) -> (i32, i32) {
    %c0_i32 = arith.constant 0 : i32
    %c0_i32_0 = arith.constant 0 : i32
    return %arg0, %c0_i32 : i32, i32
  }
  func.func @transform_1(%arg0: i32) -> (i32, i32) {
    %c0_i32 = arith.constant 0 : i32
    %c0_i32_0 = arith.constant 0 : i32
    %c0_i32_1 = arith.constant 0 : i32
    return %c0_i32, %c0_i32_0 : i32, i32
  }
  func.func @transform_2(%arg0: i32) -> (i32, i32) {
    %c0_i32 = arith.constant 0 : i32
    %c0_i32_0 = arith.constant 0 : i32
    %c0_i32_1 = arith.constant 0 : i32
    return %c0_i32, %c0_i32_0 : i32, i32
  }
  func.func @transform_3(%arg0: i32) -> (i32, i32) {
    %c0_i32 = arith.constant 0 : i32
    %c0_i32_0 = arith.constant 0 : i32
    return %arg0, %c0_i32 : i32, i32
  }
}

</mosaic_0001>

<llo_original>
// kernel: tile.18
$region0: #{tile.18}
  #allocation0 [shape = 's32[1]{0}', space=sflag, size = 0x4, scoped, tag = 'scoped memory for tile.18']
  %s0 = inlined_call_operand.vmem [shape: f32[8], index: 0, kind: input, shape index: {}]
  %s1 = inlined_call_operand.vmem [shape: f32[16,8], index: 1, kind: output, shape index: {}]
  // Predicated region
  $region2: #{tile.18} parent=0 // pred_check
    _
  $region3: #{tile.18} parent=0 // pred_check_branch
    %3 = sbr.rel (0) target = $region5
  $region4: #{tile.18} parent=0 // pred_region
    _
  $region5: #{tile.18} parent=0 // pred_fallthru
    _
  %v4 = vld [vmem:[%s0] ss:$0 sm:$0xff]
  %5 = vst [vmem:[%s1] sm:$0xff] %v4
  %s6 = scalar_lea.vmem %s1, 8
  %7 = vst [vmem:[%s6] sm:$0xff] %v4

// kernel: tile.19
$region0: #{tile.19}
  %s0 = inlined_call_operand.vmem [shape: f32[16,8], index: 0, kind: input, shape index: {}]
  %s1 = inlined_call_operand.vmem [shape: f32[1,128], index: 1, kind: output, shape index: {}]
  $region1: #{tile.19} parent=0
    #allocation0 [shape = 'u8[4096]{0}', space=vmem, size = 0x1000, scoped, tag = 'scoped mem for output reshape']
    %v2 = vld [vmem:[%s0] sm:$0x1]
    %vm3 = vcmask 64512
    %4 = vst.msk [vmem:[#allocation0] sm:$0x1] %vm3, %v2
    %s5 = scalar_lea.vmem %s0, 15
    %v6 = vld [vmem:[%s5] sm:$0x1]
    %7 = vrot.lane.b32.xlu0 %v6, 120
    %v8 = vpop.permute.xlu0 %7
    %vm9 = vcmask 1048512
    %10 = vst.msk [vmem:[#allocation0] sm:$0x1] %vm9, %v8
    %s11 = scalar_lea.vmem %s0, 14
    %v12 = vld [vmem:[%s11] sm:$0x1]
    %13 = vrot.lane.b32.xlu0 %v12, 112
    %v14 = vpop.permute.xlu0 %13
    %vm15 = vcmask 982912
    %16 = vst.msk [vmem:[#allocation0] sm:$0x1] %vm15, %v14
    %s17 = scalar_lea.vmem %s0, 13
    %v18 = vld [vmem:[%s17] sm:$0x1]
    %19 = vrot.lane.b32.xlu0 %v18, 104
    %v20 = vpop.permute.xlu0 %19
    %vm21 = vcmask 917312
    %22 = vst.msk [vmem:[#allocation0] sm:$0x1] %vm21, %v20
    %s23 = scalar_lea.vmem %s0, 12
    %v24 = vld [vmem:[%s23] sm:$0x1]
    %25 = vrot.lane.b32.xlu0 %v24, 96
    %v26 = vpop.permute.xlu0 %25
    %vm27 = vcmask 851712
    %28 = vst.msk [vmem:[#allocation0] sm:$0x1] %vm27, %v26
    %s29 = scalar_lea.vmem %s0, 11
    %v30 = vld [vmem:[%s29] sm:$0x1]
    %31 = vrot.lane.b32.xlu0 %v30, 88
    %v32 = vpop.permute.xlu0 %31
    %vm33 = vcmask 786112
    %34 = vst.msk [vmem:[#allocation0] sm:$0x1] %vm33, %v32
    %s35 = scalar_lea.vmem %s0, 10
    %v36 = vld [vmem:[%s35] sm:$0x1]
    %37 = vrot.lane.b32.xlu0 %v36, 80
    %v38 = vpop.permute.xlu0 %37
    %vm39 = vcmask 720512
    %40 = vst.msk [vmem:[#allocation0] sm:$0x1] %vm39, %v38
    %s41 = scalar_lea.vmem %s0, 9
    %v42 = vld [vmem:[%s41] sm:$0x1]
    %43 = vrot.lane.b32.xlu0 %v42, 72
    %v44 = vpop.permute.xlu0 %43
    %vm45 = vcmask 654912
    %46 = vst.msk [vmem:[#allocation0] sm:$0x1] %vm45, %v44
    %s47 = scalar_lea.vmem %s0, 8
    %v48 = vld [vmem:[%s47] sm:$0x1]
    %49 = vrot.lane.b32.xlu0 %v48, 64
    %v50 = vpop.permute.xlu0 %49
    %vm51 = vcmask 589312
    %52 = vst.msk [vmem:[#allocation0] sm:$0x1] %vm51, %v50
    %s53 = scalar_lea.vmem %s0, 7
    %v54 = vld [vmem:[%s53] sm:$0x1]
    %55 = vrot.lane.b32.xlu0 %v54, 56
    %v56 = vpop.permute.xlu0 %55
    %vm57 = vcmask 523712
    %58 = vst.msk [vmem:[#allocation0] sm:$0x1] %vm57, %v56
    %s59 = scalar_lea.vmem %s0, 6
    %v60 = vld [vmem:[%s59] sm:$0x1]
    %61 = vrot.lane.b32.xlu0 %v60, 48
    %v62 = vpop.permute.xlu0 %61
    %vm63 = vcmask 458112
    %64 = vst.msk [vmem:[#allocation0] sm:$0x1] %vm63, %v62
    %s65 = scalar_lea.vmem %s0, 5
    %v66 = vld [vmem:[%s65] sm:$0x1]
    %67 = vrot.lane.b32.xlu0 %v66, 40
    %v68 = vpop.permute.xlu0 %67
    %vm69 = vcmask 392512
    %70 = vst.msk [vmem:[#allocation0] sm:$0x1] %vm69, %v68
    %s71 = scalar_lea.vmem %s0, 4
    %v72 = vld [vmem:[%s71] sm:$0x1]
    %73 = vrot.lane.b32.xlu0 %v72, 32
    %v74 = vpop.permute.xlu0 %73
    %vm75 = vcmask 326912
    %76 = vst.msk [vmem:[#allocation0] sm:$0x1] %vm75, %v74
    %s77 = scalar_lea.vmem %s0, 3
    %v78 = vld [vmem:[%s77] sm:$0x1]
    %79 = vrot.lane.b32.xlu0 %v78, 24
    %v80 = vpop.permute.xlu0 %79
    %vm81 = vcmask 261312
    %82 = vst.msk [vmem:[#allocation0] sm:$0x1] %vm81, %v80
    %s83 = scalar_lea.vmem %s0, 2
    %v84 = vld [vmem:[%s83] sm:$0x1]
    %85 = vrot.lane.b32.xlu0 %v84, 16
    %v86 = vpop.permute.xlu0 %85
    %vm87 = vcmask 195712
    %88 = vst.msk [vmem:[#allocation0] sm:$0x1] %vm87, %v86
    %s89 = scalar_lea.vmem %s0, 1
    %v90 = vld [vmem:[%s89] sm:$0x1]
    %91 = vrot.lane.b32.xlu0 %v90, 8
    %v92 = vpop.permute.xlu0 %91
    %vm93 = vcmask 130112
    %94 = vst.msk [vmem:[#allocation0] sm:$0x1] %vm93, %v92
    %s96 = ssub.s32 2, 1
    %v97 = vld [vmem:[#allocation0] sm:%s96]
    %s99 = ssub.s32 2, 1
    %100 = vst [vmem:[%s1] sm:%s99] %v97

// kernel: double_conv_forward.5
$region0: #{double_conv_forward.5}
  #allocation0 [shape = 'u32[]', space=smem, size = 0x4, offset = 0x4, fixed_abs, tag = 'smem constant byte address 0x4 - core index']
  #allocation1 [shape = 'u32[72,128]{1,0:T(1,128)}', space=vmem, size = 0x9000, scoped, tag = 'internal scratch']
  %s0 = inlined_call_operand.vmem [shape: f32[32,128], index: 0, kind: input, shape index: {}]
  %s1 = inlined_call_operand.vmem [shape: f32[1,128], index: 1, kind: input, shape index: {}]
  %s2 = inlined_call_operand.vmem [shape: f32[1,128], index: 2, kind: input, shape index: {}]
  %s3 = inlined_call_operand.vmem [shape: f32[32,128], index: 3, kind: output, shape index: {}]
  %s4 = sld [smem:[#allocation0]]
  $region22: #{double_conv_forward.5} parent=0
    _
  %s6 = ssub.s32 1, %s4
  %s7 = scalar_select 0, %s6, %s4
  // Predicated region
  $region2: #{double_conv_forward.5} parent=0 // pred_check
    _
  $region3: #{double_conv_forward.5} parent=0 // pred_check_branch
    %9 = sbr.rel (0) target = $region5
  $region4: #{double_conv_forward.5} parent=0 // pred_region
    _
  $region5: #{double_conv_forward.5} parent=0 // pred_fallthru
    _
  // Predicated region
  $region6: #{double_conv_forward.5} parent=0 // pred_check
    _
  $region7: #{double_conv_forward.5} parent=0 // pred_check_branch
    %11 = sbr.rel (0) target = $region9
  $region8: #{double_conv_forward.5} parent=0 // pred_region
    _
  $region9: #{double_conv_forward.5} parent=0 // pred_fallthru
    _
  // Predicated region
  $region10: #{double_conv_forward.5} parent=0 // pred_check
    _
  $region11: #{double_conv_forward.5} parent=0 // pred_check_branch
    %13 = sbr.rel (0) target = $region13
  $region12: #{double_conv_forward.5} parent=0 // pred_region
    _
  $region13: #{double_conv_forward.5} parent=0 // pred_fallthru
    _
  %v14 = vld [vmem:[%s0] sm:$0xff]
  %v15 = vld [vmem:[%s0 + $0x8] sm:$0xff]
  %v16 = vld [vmem:[%s0 + $0x10] sm:$0xff]
  %v17 = vld [vmem:[%s0 + $0x18] sm:$0xff]
  %v18 = vld [vmem:[%s1] sm:$0x1]
  %v20 = vperm.slane %v18, 0
  %v22 = vmul.f32 %v14, %v20
  %v23 = vmul.f32 %v15, %v20
  %v24 = vmul.f32 %v16, %v20
  %v25 = vmul.f32 %v17, %v20
  %v26 = vld [vmem:[%s2] sm:$0x1]
  %v28 = vperm.slane %v26, 0
  %v30 = vadd.f32 %v22, %v28
  %v31 = vadd.f32 %v23, %v28
  %v32 = vadd.f32 %v24, %v28
  %v33 = vadd.f32 %v25, %v28
  %v34 = vmax.f32 %v30, 0.0
  %v35 = vmax.f32 %v31, 0.0
  %v36 = vmax.f32 %v32, 0.0
  %v37 = vmax.f32 %v33, 0.0
  %38 = vst [vmem:[%s3] sm:$0xff] %v34
  %39 = vst [vmem:[%s3 + $0x8] sm:$0xff] %v35
  %40 = vst [vmem:[%s3 + $0x10] sm:$0xff] %v36
  %41 = vst [vmem:[%s3 + $0x18] sm:$0xff] %v37
  // Predicated region
  $region14: #{double_conv_forward.5} parent=0 // pred_check
    _
  $region15: #{double_conv_forward.5} parent=0 // pred_check_branch
    %43 = sbr.rel (0) target = $region17
  $region16: #{double_conv_forward.5} parent=0 // pred_region
    _
  $region17: #{double_conv_forward.5} parent=0 // pred_fallthru
    _
  // Predicated region
  $region18: #{double_conv_forward.5} parent=0 // pred_check
    _
  $region19: #{double_conv_forward.5} parent=0 // pred_check_branch
    %45 = sbr.rel (0) target = $region21
  $region20: #{double_conv_forward.5} parent=0 // pred_region
    _
  $region21: #{double_conv_forward.5} parent=0 // pred_fallthru
    _

// kernel: double_conv_forward.3
$region0: #{double_conv_forward.3}
  #allocation0 [shape = 'u32[]', space=smem, size = 0x4, offset = 0x4, fixed_abs, tag = 'smem constant byte address 0x4 - core index']
  #allocation1 [shape = 'u32[72,128]{1,0:T(1,128)}', space=vmem, size = 0x9000, scoped, tag = 'internal scratch']
  %s0 = inlined_call_operand.vmem [shape: f32[2,16,16,4], index: 0, kind: input, shape index: {}]
  %s1 = inlined_call_operand.vmem [shape: f32[3,12,8], index: 1, kind: input, shape index: {}]
  %s2 = inlined_call_operand.vmem [shape: f32[2,256,8], index: 2, kind: output, shape index: {0}]
  %s3 = inlined_call_operand.vmem [shape: f32[2,1,2,8], index: 3, kind: output, shape index: {1}]
  %4 = xla_tuple %s2, %s3
  %s5 = sld [smem:[#allocation0]]
  $region49: #{double_conv_forward.3} parent=0
    _
  %s7 = ssub.s32 1, %s5
  %s8 = scalar_select 0, %s7, %s5
  loop: start=0, step=1, limit=4
  $region2: #{double_conv_forward.3} parent=0 // loop_pre_header
    _
  $region3: #{double_conv_forward.3} parent=0 // loop_header
    %s10 = sphi 0, %s14
    %p11 = scmp.ge.s32.totalorder %s10, 4
    %s17 = sphi 0, %s36
    %s18 = sphi 0, %s32
    %s19 = sphi 0, %s28
    %s20 = sphi 0, %s17
    %s21 = sphi 0, %s18
    %s22 = sphi 0, %s19
    %s23 = sphi 0, %s20
    %s24 = sphi 0, %s21
    %s25 = sphi 0, %s22
    %s39 = sphi 0, %s41
    %s42 = sphi 0, %s39
    %s43 = sphi 0, %s42
    %s59 = sphi 0, %s43
    %s65 = sphi 0, %s67
    %s68 = sphi 0, %s65
    %s69 = sphi 0, %s68
    %s85 = sphi 0, %s69
    %s95 = sphi 0, %s97
    %s98 = sphi 0, %s95
    %s99 = sphi 0, %s98
    %s115 = sphi 0, %s99
    %s125 = sphi 0, %s127
    %s128 = sphi 0, %s125
    %s129 = sphi 0, %s128
    %s145 = sphi 0, %s129
  $region4: #{double_conv_forward.3} parent=0 // loop_header_branch
    %13 = sbr.rel (%p11) target = $region8
  $region5: #{double_conv_forward.3} parent=0 // loop_body
    %s15 = ssub.s32 %s10, 1
    %s16 = ssub.s32 %s10, 2
    %s26 = sadd.s32 1, %s19
    %p27 = scmp.ge.s32.totalorder %s26, 1
    %s28 = scalar_select %p27, 0, %s26
    %s29 = sadd.s32 1, %s18
    %s30 = scalar_select %p27, %s29, %s18
    %p31 = scmp.ge.s32.totalorder %s30, 1
    %s32 = scalar_select %p31, 0, %s30
    %s33 = sadd.s32 1, %s17
    %s34 = scalar_select %p31, %s33, %s17
    %p35 = scmp.ge.s32.totalorder %s34, 2
    %s36 = scalar_select %p35, 0, %s34
    %s37 = ssub.s32 %s17, %s36
    %p38 = scmp.eq.s32.totalorder %s37, 0
    %s40 = sadd.s32 %s39, 1
    %s41 = scalar_select %p38, %s39, %s40
    %p44 = pneg %p38
    %p45 = scmp.eq.s32.totalorder %s10, 1
    %p46 = por %p44, %p45
    %p47 = scmp.ne.s32.totalorder %s39, %s42
    %p48 = scmp.eq.s32.totalorder %s10, 0
    %p49 = por %p47, %p48
    %p50 = scmp.ne.s32.totalorder %s39, %s42
    %p51 = scmp.eq.s32.totalorder %s15, 1
    %p52 = por %p50, %p51
    %p53 = scmp.ne.s32.totalorder %s42, %s43
    %p54 = scmp.eq.s32.totalorder %s15, 0
    %p55 = por %p53, %p54
    %p56 = scmp.ne.s32.totalorder %s42, %s43
    %p57 = scmp.eq.s32.totalorder %s16, 1
    %p58 = por %p56, %p57
    %p60 = scmp.ne.s32.totalorder %s43, %s59
    %p61 = scmp.eq.s32.totalorder %s16, 0
    %p62 = por %p60, %p61
    %s63 = ssub.s32 %s19, %s28
    %p64 = scmp.eq.s32.totalorder %s63, 0
    %s66 = sadd.s32 %s65, 1
    %s67 = scalar_select %p64, %s65, %s66
    %p70 = pneg %p64
    %p71 = scmp.eq.s32.totalorder %s10, 1
    %p72 = por %p70, %p71
    %p73 = scmp.ne.s32.totalorder %s65, %s68
    %p74 = scmp.eq.s32.totalorder %s10, 0
    %p75 = por %p73, %p74
    %p76 = scmp.ne.s32.totalorder %s65, %s68
    %p77 = scmp.eq.s32.totalorder %s15, 1
    %p78 = por %p76, %p77
    %p79 = scmp.ne.s32.totalorder %s68, %s69
    %p80 = scmp.eq.s32.totalorder %s15, 0
    %p81 = por %p79, %p80
    %p82 = scmp.ne.s32.totalorder %s68, %s69
    %p83 = scmp.eq.s32.totalorder %s16, 1
    %p84 = por %p82, %p83
    %p86 = scmp.ne.s32.totalorder %s69, %s85
    %p87 = scmp.eq.s32.totalorder %s16, 0
    %p88 = por %p86, %p87
    %s89 = ssub.s32 %s17, %s36
    %s90 = ssub.s32 %s18, %s32
    %s91 = sor.u32 %s89, %s90
    %s92 = ssub.s32 %s19, %s28
    %s93 = sor.u32 %s91, %s92
    %p94 = scmp.eq.s32.totalorder %s93, 0
    %s96 = sadd.s32 %s95, 1
    %s97 = scalar_select %p94, %s95, %s96
    %p100 = pneg %p94
    %p101 = scmp.eq.s32.totalorder %s10, 1
    %p102 = por %p100, %p101
    %p103 = scmp.ne.s32.totalorder %s95, %s98
    %p104 = scmp.eq.s32.totalorder %s10, 0
    %p105 = por %p103, %p104
    %p106 = scmp.ne.s32.totalorder %s95, %s98
    %p107 = scmp.eq.s32.totalorder %s15, 1
    %p108 = por %p106, %p107
    %p109 = scmp.ne.s32.totalorder %s98, %s99
    %p110 = scmp.eq.s32.totalorder %s15, 0
    %p111 = por %p109, %p110
    %p112 = scmp.ne.s32.totalorder %s98, %s99
    %p113 = scmp.eq.s32.totalorder %s16, 1
    %p114 = por %p112, %p113
    %p116 = scmp.ne.s32.totalorder %s99, %s115
    %p117 = scmp.eq.s32.totalorder %s16, 0
    %p118 = por %p116, %p117
    %s119 = ssub.s32 %s17, %s36
    %s120 = ssub.s32 %s18, %s32
    %s121 = sor.u32 %s119, %s120
    %s122 = ssub.s32 %s19, %s28
    %s123 = sor.u32 %s121, %s122
    %p124 = scmp.eq.s32.totalorder %s123, 0
    %s126 = sadd.s32 %s125, 1
    %s127 = scalar_select %p124, %s125, %s126
    %p130 = pneg %p124
    %p131 = scmp.eq.s32.totalorder %s10, 1
    %p132 = por %p130, %p131
    %p133 = scmp.ne.s32.totalorder %s125, %s128
    %p134 = scmp.eq.s32.totalorder %s10, 0
    %p135 = por %p133, %p134
    %p136 = scmp.ne.s32.totalorder %s125, %s128
    %p137 = scmp.eq.s32.totalorder %s15, 1
    %p138 = por %p136, %p137
    %p139 = scmp.ne.s32.totalorder %s128, %s129
    %p140 = scmp.eq.s32.totalorder %s15, 0
    %p141 = por %p139, %p140
    %p142 = scmp.ne.s32.totalorder %s128, %s129
    %p143 = scmp.eq.s32.totalorder %s16, 1
    %p144 = por %p142, %p143
    %p146 = scmp.ne.s32.totalorder %s129, %s145
    %p147 = scmp.eq.s32.totalorder %s16, 0
    %p148 = por %p146, %p147
    %p149 = scmp.le.s32.totalorder 1, %s10
    %p150 = scmp.lt.s32.totalorder %s10, 3
    %p151 = pnand %p149, %p150
    %p152 = pneg %p151
    // Predicated region
    $region9: #{double_conv_forward.3} parent=5 // pred_check
      _
    $region10: #{double_conv_forward.3} parent=5 // pred_check_branch
      %154 = sbr.rel (%p151) target = $region12
    $region11: #{double_conv_forward.3} parent=5 // pred_region
      %s155 = ssub.s32 %s10, 1
      // Predicated region
      $region13: #{double_conv_forward.3} parent=11 // pred_check
        %p156 = pneg %p81
      $region14: #{double_conv_forward.3} parent=11 // pred_check_branch
        %158 = sbr.rel (%p156) target = $region16
      $region15: #{double_conv_forward.3} parent=11 // pred_region
        %p159 = scmp.lt.s32.totalorder %s22, 0
        %s160 = scalar_select %p159, %s22, 0
        %s161 = smul.addr %s160, 8
        %s162 = scalar_lea.vmem %s1, %s161
      $region16: #{double_conv_forward.3} parent=11 // pred_fallthru
        _
    $region12: #{double_conv_forward.3} parent=5 // pred_fallthru
      _
    %p163 = scmp.lt.s32.totalorder %s10, 2
    // Predicated region
    $region17: #{double_conv_forward.3} parent=5 // pred_check
      %p164 = pneg %p163
    $region18: #{double_conv_forward.3} parent=5 // pred_check_branch
      %166 = sbr.rel (%p164) target = $region20
    $region19: #{double_conv_forward.3} parent=5 // pred_region
      // Predicated region
      $region21: #{double_conv_forward.3} parent=19 // pred_check
        %p167 = pneg %p49
      $region22: #{double_conv_forward.3} parent=19 // pred_check_branch
        %169 = sbr.rel (%p167) target = $region24
      $region23: #{double_conv_forward.3} parent=19 // pred_region
        %p170 = scmp.lt.s32.totalorder %s17, 1
        %s171 = scalar_select %p170, %s17, 1
        %s172 = smul.addr %s171, 32
        %s173 = smul.addr %s172, 8
        %s174 = scalar_lea.vmem %s0, %s173
      $region24: #{double_conv_forward.3} parent=19 // pred_fallthru
        _
    $region20: #{double_conv_forward.3} parent=5 // pred_fallthru
      _
    %p175 = scmp.le.s32.totalorder 1, %s10
    %p176 = scmp.lt.s32.totalorder %s10, 3
    %p177 = pnand %p175, %p176
    %p178 = pneg %p177
    // Predicated region
    $region25: #{double_conv_forward.3} parent=5 // pred_check
      _
    $region26: #{double_conv_forward.3} parent=5 // pred_check_branch
      %180 = sbr.rel (%p177) target = $region28
    $region27: #{double_conv_forward.3} parent=5 // pred_region
      %s181 = ssub.s32 %s10, 1
      %p182 = scmp.lt.s32.totalorder %s20, 1
      %s183 = scalar_select %p182, %s20, 1
      %s184 = smul.addr %s183, 32
      %s185 = smul.addr %s184, 8
      %s186 = scalar_lea.vmem %s0, %s185
      %p187 = pneg %p55
      %p188 = pneg %p52
      %p189 = scmp.lt.s32.totalorder %s22, 0
      %s190 = scalar_select %p189, %s22, 0
      %s191 = smul.addr %s190, 8
      %s192 = scalar_lea.vmem %s1, %s191
      %p193 = pneg %p81
      %p194 = pneg %p78
      %p195 = pneg %p111
      %p196 = pneg %p108
      %s197 = smul.u32 32, %s21
      %p198 = scmp.lt.s32.totalorder %s20, 1
      %s199 = scalar_select %p198, %s20, 1
      %p200 = scmp.lt.s32.totalorder %s197, 31
      %s201 = scalar_select %p200, %s197, 31
      %p202 = scmp.lt.s32.totalorder %s22, 0
      %s203 = scalar_select %p202, %s22, 0
      %s204 = sadd.s32 %s203, %s201
      %s205 = smul.addr %s199, 32
      %s206 = sadd.s32 %s204, %s205
      %s207 = smul.addr %s206, 8
      %s208 = scalar_lea.vmem %s2, %s207
      %p209 = pneg %p141
      %p210 = pneg %p138
      %p211 = scmp.lt.s32.totalorder %s20, 1
      %s212 = scalar_select %p211, %s20, 1
      %p213 = scmp.lt.s32.totalorder %s21, 0
      %s214 = scalar_select %p213, %s21, 0
      %p215 = scmp.lt.s32.totalorder %s22, 0
      %s216 = scalar_select %p215, %s22, 0
      %s217 = sadd.s32 %s216, %s214
      %s218 = sadd.s32 %s217, %s212
      %s219 = smul.addr %s218, 2
      %s220 = scalar_lea.vmem %s3, %s219
      %p221 = scmp.lt.s32.totalorder %s20, 1
      %s222 = scalar_select %p221, %s20, 1
      %s223 = smul.addr %s222, 32
      %s224 = smul.addr %s223, 8
      %s225 = scalar_lea.vmem %s0, %s224
      %p226 = scmp.lt.s32.totalorder %s22, 0
      %s227 = scalar_select %p226, %s22, 0
      %s228 = smul.addr %s227, 8
      %s229 = scalar_lea.vmem %s1, %s228
      %s230 = smul.u32 32, %s21
      %p231 = scmp.lt.s32.totalorder %s20, 1
      %s232 = scalar_select %p231, %s20, 1
      %p233 = scmp.lt.s32.totalorder %s230, 31
      %s234 = scalar_select %p233, %s230, 31
      %p235 = scmp.lt.s32.totalorder %s22, 0
      %s236 = scalar_select %p235, %s22, 0
      %s237 = sadd.s32 %s236, %s234
      %s238 = smul.addr %s232, 32
      %s239 = sadd.s32 %s237, %s238
      %s240 = smul.addr %s239, 8
      %s241 = scalar_lea.vmem %s2, %s240
      %s242 = smul.u32 32, %s21
      %p243 = scmp.lt.s32.totalorder %s20, 1
      %s244 = scalar_select %p243, %s20, 1
      %p245 = scmp.lt.s32.totalorder %s21, 0
      %s246 = scalar_select %p245, %s21, 0
      %p247 = scmp.lt.s32.totalorder %s22, 0
      %s248 = scalar_select %p247, %s22, 0
      %s249 = sadd.s32 %s248, %s246
      %s250 = sadd.s32 %s249, %s244
      %s251 = smul.addr %s250, 2
      %s252 = scalar_lea.vmem %s3, %s251
      %s253 = smul.u32 %s21, 16
      %s254 = smul.u32 %s253, 16
      %s255 = scalar_lea.vmem %s225, %s254
      %v256 = vld [vmem:[%s255] sm:$0xff]
      %v257 = vld [vmem:[%s255 + $0x8] sm:$0xff]
      %v258 = vld [vmem:[%s255 + $0x10] sm:$0xff]
      %v259 = vld [vmem:[%s255 + $0x18] sm:$0xff]
      %v260 = vld [vmem:[%s255 + $0x20] sm:$0xff]
      %v261 = vld [vmem:[%s255 + $0x28] sm:$0xff]
      %v262 = vld [vmem:[%s255 + $0x30] sm:$0xff]
      %v263 = vld [vmem:[%s255 + $0x38] sm:$0xff]
      %v264 = vld [vmem:[%s255 + $0x40] sm:$0xff]
      %v265 = vld [vmem:[%s255 + $0x48] sm:$0xff]
      %v266 = vld [vmem:[%s255 + $0x50] sm:$0xff]
      %v267 = vld [vmem:[%s255 + $0x58] sm:$0xff]
      %v268 = vld [vmem:[%s255 + $0x60] sm:$0xff]
      %v269 = vld [vmem:[%s255 + $0x68] sm:$0xff]
      %v270 = vld [vmem:[%s255 + $0x70] sm:$0xff]
      %v271 = vld [vmem:[%s255 + $0x78] sm:$0xff]
      %v272 = vld [vmem:[%s255 + $0x80] sm:$0xff]
      %v273 = vld [vmem:[%s255 + $0x88] sm:$0xff]
      %v274 = vld [vmem:[%s255 + $0x90] sm:$0xff]
      %v275 = vld [vmem:[%s255 + $0x98] sm:$0xff]
      %v276 = vld [vmem:[%s255 + $0xa0] sm:$0xff]
      %v277 = vld [vmem:[%s255 + $0xa8] sm:$0xff]
      %v278 = vld [vmem:[%s255 + $0xb0] sm:$0xff]
      %v279 = vld [vmem:[%s255 + $0xb8] sm:$0xff]
      %v280 = vld [vmem:[%s255 + $0xc0] sm:$0xff]
      %v281 = vld [vmem:[%s255 + $0xc8] sm:$0xff]
      %v282 = vld [vmem:[%s255 + $0xd0] sm:$0xff]
      %v283 = vld [vmem:[%s255 + $0xd8] sm:$0xff]
      %v284 = vld [vmem:[%s255 + $0xe0] sm:$0xff]
      %v285 = vld [vmem:[%s255 + $0xe8] sm:$0xff]
      %v286 = vld [vmem:[%s255 + $0xf0] sm:$0xff]
      %v287 = vld [vmem:[%s255 + $0xf8] sm:$0xff]
      %s288 = ssub.s32 %s253, 1
      %p289 = scmp.gt.s32.totalorder %s288, 0
      %s290 = scalar_select %p289, %s288, 0
      %s291 = smul.u32 %s290, 16
      %s292 = scalar_lea.vmem %s225, %s291
      %v293 = vld [vmem:[%s292] sm:$0xff]
      %v294 = vld [vmem:[%s292 + $0x8] sm:$0xff]
      %p295 = scmp.eq.s32.totalorder %s21, 0
      %s296 = scalar_select %p295, 1, 0
      %v297 = vstv %s296
      %vm298 = vcmp.eq.s32.totalorder %v297, 1
      %v299 = vsel %vm298, 0.0, %v293
      %v300 = vsel %vm298, 0.0, %v294
      %s301 = sadd.s32 %s253, 16
      %p302 = scmp.lt.s32.totalorder %s301, 15
      %s303 = scalar_select %p302, %s301, 15
      %s304 = smul.u32 %s303, 16
      %s305 = scalar_lea.vmem %s225, %s304
      %v306 = vld [vmem:[%s305] sm:$0xff]
      %v307 = vld [vmem:[%s305 + $0x8] sm:$0xff]
      %v308 = vsel %vm298, 0.0, %v306
      %v309 = vsel %vm298, 0.0, %v307
      %vm346 = vcmask 1040384
      %v347 = vrot.slane %v299, 7
      %v348 = vrot.slane %v300, 7
      %v349 = vsel %vm346, %v347, %v348
      %v350 = vrot.slane %v256, 7
      %v351 = vrot.slane %v257, 7
      %v352 = vsel %vm346, %v350, %v351
      %v353 = vrot.slane %v258, 7
      %v354 = vrot.slane %v259, 7
      %v355 = vsel %vm346, %v353, %v354
      %v356 = vrot.slane %v260, 7
      %v357 = vrot.slane %v261, 7
      %v358 = vsel %vm346, %v356, %v357
      %v359 = vrot.slane %v262, 7
      %v360 = vrot.slane %v263, 7
      %v361 = vsel %vm346, %v359, %v360
      %v362 = vrot.slane %v264, 7
      %v363 = vrot.slane %v265, 7
      %v364 = vsel %vm346, %v362, %v363
      %v365 = vrot.slane %v266, 7
      %v366 = vrot.slane %v267, 7
      %v367 = vsel %vm346, %v365, %v366
      %v368 = vrot.slane %v268, 7
      %v369 = vrot.slane %v269, 7
      %v370 = vsel %vm346, %v368, %v369
      %v371 = vrot.slane %v270, 7
      %v372 = vrot.slane %v271, 7
      %v373 = vsel %vm346, %v371, %v372
      %v374 = vrot.slane %v272, 7
      %v375 = vrot.slane %v273, 7
      %v376 = vsel %vm346, %v374, %v375
      %v377 = vrot.slane %v274, 7
      %v378 = vrot.slane %v275, 7
      %v379 = vsel %vm346, %v377, %v378
      %v380 = vrot.slane %v276, 7
      %v381 = vrot.slane %v277, 7
      %v382 = vsel %vm346, %v380, %v381
      %v383 = vrot.slane %v278, 7
      %v384 = vrot.slane %v279, 7
      %v385 = vsel %vm346, %v383, %v384
      %v386 = vrot.slane %v280, 7
      %v387 = vrot.slane %v281, 7
      %v388 = vsel %vm346, %v386, %v387
      %v389 = vrot.slane %v282, 7
      %v390 = vrot.slane %v283, 7
      %v391 = vsel %vm346, %v389, %v390
      %v392 = vrot.slane %v284, 7
      %v393 = vrot.slane %v285, 7
      %v394 = vsel %vm346, %v392, %v393
      %v395 = vrot.slane %v286, 7
      %v396 = vrot.slane %v287, 7
      %v397 = vsel %vm346, %v395, %v396
      %v398 = vrot.slane %v308, 7
      %v399 = vrot.slane %v309, 7
      %v400 = vsel %vm346, %v398, %v399
      %v455 = vsel %vm346, 0.0, %v347
      %v456 = vsel %vm346, 0.0, %v350
      %v457 = vsel %vm346, 0.0, %v353
      %v458 = vsel %vm346, 0.0, %v356
      %v459 = vsel %vm346, 0.0, %v359
      %v460 = vsel %vm346, 0.0, %v362
      %v461 = vsel %vm346, 0.0, %v365
      %v462 = vsel %vm346, 0.0, %v368
      %v463 = vsel %vm346, 0.0, %v371
      %v464 = vsel %vm346, 0.0, %v374
      %v465 = vsel %vm346, 0.0, %v377
      %v466 = vsel %vm346, 0.0, %v380
      %v467 = vsel %vm346, 0.0, %v383
      %v468 = vsel %vm346, 0.0, %v386
      %v469 = vsel %vm346, 0.0, %v389
      %v470 = vsel %vm346, 0.0, %v392
      %v471 = vsel %vm346, 0.0, %v395
      %v472 = vsel %vm346, 0.0, %v398
      %v473 = vsel %vm346, %v348, 0.0
      %v474 = vsel %vm346, %v351, 0.0
      %v475 = vsel %vm346, %v354, 0.0
      %v476 = vsel %vm346, %v357, 0.0
      %v477 = vsel %vm346, %v360, 0.0
      %v478 = vsel %vm346, %v363, 0.0
      %v479 = vsel %vm346, %v366, 0.0
      %v480 = vsel %vm346, %v369, 0.0
      %v481 = vsel %vm346, %v372, 0.0
      %v482 = vsel %vm346, %v375, 0.0
      %v483 = vsel %vm346, %v378, 0.0
      %v484 = vsel %vm346, %v381, 0.0
      %v485 = vsel %vm346, %v384, 0.0
      %v486 = vsel %vm346, %v387, 0.0
      %v487 = vsel %vm346, %v390, 0.0
      %v488 = vsel %vm346, %v393, 0.0
      %v489 = vsel %vm346, %v396, 0.0
      %v490 = vsel %vm346, %v399, 0.0
      %vm523 = vcmask 1046528
      %v524 = vrot.slane %v455, 1
      %v525 = vrot.slane %v349, 1
      %v526 = vsel %vm523, %v524, %v525
      %v527 = vrot.slane %v473, 1
      %v528 = vsel %vm523, %v525, %v527
      %v529 = vrot.slane %v456, 1
      %v530 = vrot.slane %v352, 1
      %v531 = vsel %vm523, %v529, %v530
      %v532 = vrot.slane %v474, 1
      %v533 = vsel %vm523, %v530, %v532
      %v534 = vrot.slane %v457, 1
      %v535 = vrot.slane %v355, 1
      %v536 = vsel %vm523, %v534, %v535
      %v537 = vrot.slane %v475, 1
      %v538 = vsel %vm523, %v535, %v537
      %v539 = vrot.slane %v458, 1
      %v540 = vrot.slane %v358, 1
      %v541 = vsel %vm523, %v539, %v540
      %v542 = vrot.slane %v476, 1
      %v543 = vsel %vm523, %v540, %v542
      %v544 = vrot.slane %v459, 1
      %v545 = vrot.slane %v361, 1
      %v546 = vsel %vm523, %v544, %v545
      %v547 = vrot.slane %v477, 1
      %v548 = vsel %vm523, %v545, %v547
      %v549 = vrot.slane %v460, 1
      %v550 = vrot.slane %v364, 1
      %v551 = vsel %vm523, %v549, %v550
      %v552 = vrot.slane %v478, 1
      %v553 = vsel %vm523, %v550, %v552
      %v554 = vrot.slane %v461, 1
      %v555 = vrot.slane %v367, 1
      %v556 = vsel %vm523, %v554, %v555
      %v557 = vrot.slane %v479, 1
      %v558 = vsel %vm523, %v555, %v557
      %v559 = vrot.slane %v462, 1
      %v560 = vrot.slane %v370, 1
      %v561 = vsel %vm523, %v559, %v560
      %v562 = vrot.slane %v480, 1
      %v563 = vsel %vm523, %v560, %v562
      %v564 = vrot.slane %v463, 1
      %v565 = vrot.slane %v373, 1
      %v566 = vsel %vm523, %v564, %v565
      %v567 = vrot.slane %v481, 1
      %v568 = vsel %vm523, %v565, %v567
      %v569 = vrot.slane %v464, 1
      %v570 = vrot.slane %v376, 1
      %v571 = vsel %vm523, %v569, %v570
      %v572 = vrot.slane %v482, 1
      %v573 = vsel %vm523, %v570, %v572
      %v574 = vrot.slane %v465, 1
      %v575 = vrot.slane %v379, 1
      %v576 = vsel %vm523, %v574, %v575
      %v577 = vrot.slane %v483, 1
      %v578 = vsel %vm523, %v575, %v577
      %v579 = vrot.slane %v466, 1
      %v580 = vrot.slane %v382, 1
      %v581 = vsel %vm523, %v579, %v580
      %v582 = vrot.slane %v484, 1
      %v583 = vsel %vm523, %v580, %v582
      %v584 = vrot.slane %v467, 1
      %v585 = vrot.slane %v385, 1
      %v586 = vsel %vm523, %v584, %v585
      %v587 = vrot.slane %v485, 1
      %v588 = vsel %vm523, %v585, %v587
      %v589 = vrot.slane %v468, 1
      %v590 = vrot.slane %v388, 1
      %v591 = vsel %vm523, %v589, %v590
      %v592 = vrot.slane %v486, 1
      %v593 = vsel %vm523, %v590, %v592
      %v594 = vrot.slane %v469, 1
      %v595 = vrot.slane %v391, 1
      %v596 = vsel %vm523, %v594, %v595
      %v597 = vrot.slane %v487, 1
      %v598 = vsel %vm523, %v595, %v597
      %v599 = vrot.slane %v470, 1
      %v600 = vrot.slane %v394, 1
      %v601 = vsel %vm523, %v599, %v600
      %v602 = vrot.slane %v488, 1
      %v603 = vsel %vm523, %v600, %v602
      %604 = vrot.lane.b32.xlu0 %v526, 4
      %v605 = vpop.permute.xlu0 %604
      %606 = vrot.lane.b32.xlu0 %v528, 4
      %v607 = vpop.permute.xlu0 %606
      %608 = vrot.lane.b32.xlu0 %v531, 4
      %v609 = vpop.permute.xlu0 %608
      %610 = vrot.lane.b32.xlu0 %v533, 4
      %v611 = vpop.permute.xlu0 %610
      %612 = vrot.lane.b32.xlu0 %v536, 4
      %v613 = vpop.permute.xlu0 %612
      %614 = vrot.lane.b32.xlu0 %v538, 4
      %v615 = vpop.permute.xlu0 %614
      %616 = vrot.lane.b32.xlu0 %v541, 4
      %v617 = vpop.permute.xlu0 %616
      %618 = vrot.lane.b32.xlu0 %v543, 4
      %v619 = vpop.permute.xlu0 %618
      %620 = vrot.lane.b32.xlu0 %v546, 4
      %v621 = vpop.permute.xlu0 %620
      %622 = vrot.lane.b32.xlu0 %v548, 4
      %v623 = vpop.permute.xlu0 %622
      %624 = vrot.lane.b32.xlu0 %v551, 4
      %v625 = vpop.permute.xlu0 %624
      %626 = vrot.lane.b32.xlu0 %v553, 4
      %v627 = vpop.permute.xlu0 %626
      %628 = vrot.lane.b32.xlu0 %v556, 4
      %v629 = vpop.permute.xlu0 %628
      %630 = vrot.lane.b32.xlu0 %v558, 4
      %v631 = vpop.permute.xlu0 %630
      %632 = vrot.lane.b32.xlu0 %v561, 4
      %v633 = vpop.permute.xlu0 %632
      %634 = vrot.lane.b32.xlu0 %v563, 4
      %v635 = vpop.permute.xlu0 %634
      %636 = vrot.lane.b32.xlu0 %v566, 4
      %v637 = vpop.permute.xlu0 %636
      %638 = vrot.lane.b32.xlu0 %v568, 4
      %v639 = vpop.permute.xlu0 %638
      %640 = vrot.lane.b32.xlu0 %v571, 4
      %v641 = vpop.permute.xlu0 %640
      %642 = vrot.lane.b32.xlu0 %v573, 4
      %v643 = vpop.permute.xlu0 %642
      %644 = vrot.lane.b32.xlu0 %v576, 4
      %v645 = vpop.permute.xlu0 %644
      %646 = vrot.lane.b32.xlu0 %v578, 4
      %v647 = vpop.permute.xlu0 %646
      %648 = vrot.lane.b32.xlu0 %v581, 4
      %v649 = vpop.permute.xlu0 %648
      %650 = vrot.lane.b32.xlu0 %v583, 4
      %v651 = vpop.permute.xlu0 %650
      %652 = vrot.lane.b32.xlu0 %v586, 4
      %v653 = vpop.permute.xlu0 %652
      %654 = vrot.lane.b32.xlu0 %v588, 4
      %v655 = vpop.permute.xlu0 %654
      %656 = vrot.lane.b32.xlu0 %v591, 4
      %v657 = vpop.permute.xlu0 %656
      %658 = vrot.lane.b32.xlu0 %v593, 4
      %v659 = vpop.permute.xlu0 %658
      %660 = vrot.lane.b32.xlu0 %v596, 4
      %v661 = vpop.permute.xlu0 %660
      %662 = vrot.lane.b32.xlu0 %v598, 4
      %v663 = vpop.permute.xlu0 %662
      %664 = vrot.lane.b32.xlu0 %v601, 4
      %v665 = vpop.permute.xlu0 %664
      %666 = vrot.lane.b32.xlu0 %v603, 4
      %v667 = vpop.permute.xlu0 %666
      %vm700 = vcmask 1045504
      %v701 = vrot.slane %v455, 2
      %v702 = vrot.slane %v349, 2
      %v703 = vsel %vm700, %v701, %v702
      %v704 = vrot.slane %v473, 2
      %v705 = vsel %vm700, %v702, %v704
      %v706 = vrot.slane %v456, 2
      %v707 = vrot.slane %v352, 2
      %v708 = vsel %vm700, %v706, %v707
      %v709 = vrot.slane %v474, 2
      %v710 = vsel %vm700, %v707, %v709
      %v711 = vrot.slane %v457, 2
      %v712 = vrot.slane %v355, 2
      %v713 = vsel %vm700, %v711, %v712
      %v714 = vrot.slane %v475, 2
      %v715 = vsel %vm700, %v712, %v714
      %v716 = vrot.slane %v458, 2
      %v717 = vrot.slane %v358, 2
      %v718 = vsel %vm700, %v716, %v717
      %v719 = vrot.slane %v476, 2
      %v720 = vsel %vm700, %v717, %v719
      %v721 = vrot.slane %v459, 2
      %v722 = vrot.slane %v361, 2
      %v723 = vsel %vm700, %v721, %v722
      %v724 = vrot.slane %v477, 2
      %v725 = vsel %vm700, %v722, %v724
      %v726 = vrot.slane %v460, 2
      %v727 = vrot.slane %v364, 2
      %v728 = vsel %vm700, %v726, %v727
      %v729 = vrot.slane %v478, 2
      %v730 = vsel %vm700, %v727, %v729
      %v731 = vrot.slane %v461, 2
      %v732 = vrot.slane %v367, 2
      %v733 = vsel %vm700, %v731, %v732
      %v734 = vrot.slane %v479, 2
      %v735 = vsel %vm700, %v732, %v734
      %v736 = vrot.slane %v462, 2
      %v737 = vrot.slane %v370, 2
      %v738 = vsel %vm700, %v736, %v737
      %v739 = vrot.slane %v480, 2
      %v740 = vsel %vm700, %v737, %v739
      %v741 = vrot.slane %v463, 2
      %v742 = vrot.slane %v373, 2
      %v743 = vsel %vm700, %v741, %v742
      %v744 = vrot.slane %v481, 2
      %v745 = vsel %vm700, %v742, %v744
      %v746 = vrot.slane %v464, 2
      %v747 = vrot.slane %v376, 2
      %v748 = vsel %vm700, %v746, %v747
      %v749 = vrot.slane %v482, 2
      %v750 = vsel %vm700, %v747, %v749
      %v751 = vrot.slane %v465, 2
      %v752 = vrot.slane %v379, 2
      %v753 = vsel %vm700, %v751, %v752
      %v754 = vrot.slane %v483, 2
      %v755 = vsel %vm700, %v752, %v754
      %v756 = vrot.slane %v466, 2
      %v757 = vrot.slane %v382, 2
      %v758 = vsel %vm700, %v756, %v757
      %v759 = vrot.slane %v484, 2
      %v760 = vsel %vm700, %v757, %v759
      %v761 = vrot.slane %v467, 2
      %v762 = vrot.slane %v385, 2
      %v763 = vsel %vm700, %v761, %v762
      %v764 = vrot.slane %v485, 2
      %v765 = vsel %vm700, %v762, %v764
      %v766 = vrot.slane %v468, 2
      %v767 = vrot.slane %v388, 2
      %v768 = vsel %vm700, %v766, %v767
      %v769 = vrot.slane %v486, 2
      %v770 = vsel %vm700, %v767, %v769
      %v771 = vrot.slane %v469, 2
      %v772 = vrot.slane %v391, 2
      %v773 = vsel %vm700, %v771, %v772
      %v774 = vrot.slane %v487, 2
      %v775 = vsel %vm700, %v772, %v774
      %v776 = vrot.slane %v470, 2
      %v777 = vrot.slane %v394, 2
      %v778 = vsel %vm700, %v776, %v777
      %v779 = vrot.slane %v488, 2
      %v780 = vsel %vm700, %v777, %v779
      %781 = vrot.lane.b32.xlu0 %v703, 8
      %v782 = vpop.permute.xlu0 %781
      %783 = vrot.lane.b32.xlu0 %v705, 8
      %v784 = vpop.permute.xlu0 %783
      %785 = vrot.lane.b32.xlu0 %v708, 8
      %v786 = vpop.permute.xlu0 %785
      %787 = vrot.lane.b32.xlu0 %v710, 8
      %v788 = vpop.permute.xlu0 %787
      %789 = vrot.lane.b32.xlu0 %v713, 8
      %v790 = vpop.permute.xlu0 %789
      %791 = vrot.lane.b32.xlu0 %v715, 8
      %v792 = vpop.permute.xlu0 %791
      %793 = vrot.lane.b32.xlu0 %v718, 8
      %v794 = vpop.permute.xlu0 %793
      %795 = vrot.lane.b32.xlu0 %v720, 8
      %v796 = vpop.permute.xlu0 %795
      %797 = vrot.lane.b32.xlu0 %v723, 8
      %v798 = vpop.permute.xlu0 %797
      %799 = vrot.lane.b32.xlu0 %v725, 8
      %v800 = vpop.permute.xlu0 %799
      %801 = vrot.lane.b32.xlu0 %v728, 8
      %v802 = vpop.permute.xlu0 %801
      %803 = vrot.lane.b32.xlu0 %v730, 8
      %v804 = vpop.permute.xlu0 %803
      %805 = vrot.lane.b32.xlu0 %v733, 8
      %v806 = vpop.permute.xlu0 %805
      %807 = vrot.lane.b32.xlu0 %v735, 8
      %v808 = vpop.permute.xlu0 %807
      %809 = vrot.lane.b32.xlu0 %v738, 8
      %v810 = vpop.permute.xlu0 %809
      %811 = vrot.lane.b32.xlu0 %v740, 8
      %v812 = vpop.permute.xlu0 %811
      %813 = vrot.lane.b32.xlu0 %v743, 8
      %v814 = vpop.permute.xlu0 %813
      %815 = vrot.lane.b32.xlu0 %v745, 8
      %v816 = vpop.permute.xlu0 %815
      %817 = vrot.lane.b32.xlu0 %v748, 8
      %v818 = vpop.permute.xlu0 %817
      %819 = vrot.lane.b32.xlu0 %v750, 8
      %v820 = vpop.permute.xlu0 %819
      %821 = vrot.lane.b32.xlu0 %v753, 8
      %v822 = vpop.permute.xlu0 %821
      %823 = vrot.lane.b32.xlu0 %v755, 8
      %v824 = vpop.permute.xlu0 %823
      %825 = vrot.lane.b32.xlu0 %v758, 8
      %v826 = vpop.permute.xlu0 %825
      %827 = vrot.lane.b32.xlu0 %v760, 8
      %v828 = vpop.permute.xlu0 %827
      %829 = vrot.lane.b32.xlu0 %v763, 8
      %v830 = vpop.permute.xlu0 %829
      %831 = vrot.lane.b32.xlu0 %v765, 8
      %v832 = vpop.permute.xlu0 %831
      %833 = vrot.lane.b32.xlu0 %v768, 8
      %v834 = vpop.permute.xlu0 %833
      %835 = vrot.lane.b32.xlu0 %v770, 8
      %v836 = vpop.permute.xlu0 %835
      %837 = vrot.lane.b32.xlu0 %v773, 8
      %v838 = vpop.permute.xlu0 %837
      %839 = vrot.lane.b32.xlu0 %v775, 8
      %v840 = vpop.permute.xlu0 %839
      %841 = vrot.lane.b32.xlu0 %v778, 8
      %v842 = vpop.permute.xlu0 %841
      %843 = vrot.lane.b32.xlu0 %v780, 8
      %v844 = vpop.permute.xlu0 %843
      %vm877 = vcmask 31744
      %v878 = vsel %vm877, %v455, %v605
      %v879 = vsel %vm877, %v349, %v607
      %v880 = vsel %vm877, %v456, %v609
      %v881 = vsel %vm877, %v352, %v611
      %v882 = vsel %vm877, %v457, %v613
      %v883 = vsel %vm877, %v355, %v615
      %v884 = vsel %vm877, %v458, %v617
      %v885 = vsel %vm877, %v358, %v619
      %v886 = vsel %vm877, %v459, %v621
      %v887 = vsel %vm877, %v361, %v623
      %v888 = vsel %vm877, %v460, %v625
      %v889 = vsel %vm877, %v364, %v627
      %v890 = vsel %vm877, %v461, %v629
      %v891 = vsel %vm877, %v367, %v631
      %v892 = vsel %vm877, %v462, %v633
      %v893 = vsel %vm877, %v370, %v635
      %v894 = vsel %vm877, %v463, %v637
      %v895 = vsel %vm877, %v373, %v639
      %v896 = vsel %vm877, %v464, %v641
      %v897 = vsel %vm877, %v376, %v643
      %v898 = vsel %vm877, %v465, %v645
      %v899 = vsel %vm877, %v379, %v647
      %v900 = vsel %vm877, %v466, %v649
      %v901 = vsel %vm877, %v382, %v651
      %v902 = vsel %vm877, %v467, %v653
      %v903 = vsel %vm877, %v385, %v655
      %v904 = vsel %vm877, %v468, %v657
      %v905 = vsel %vm877, %v388, %v659
      %v906 = vsel %vm877, %v469, %v661
      %v907 = vsel %vm877, %v391, %v663
      %v908 = vsel %vm877, %v470, %v665
      %v909 = vsel %vm877, %v394, %v667
      %vm910 = vcmask 64512
      %v911 = vsel %vm910, %v878, %v782
      %v912 = vsel %vm910, %v879, %v784
      %v913 = vsel %vm910, %v880, %v786
      %v914 = vsel %vm910, %v881, %v788
      %v915 = vsel %vm910, %v882, %v790
      %v916 = vsel %vm910, %v883, %v792
      %v917 = vsel %vm910, %v884, %v794
      %v918 = vsel %vm910, %v885, %v796
      %v919 = vsel %vm910, %v886, %v798
      %v920 = vsel %vm910, %v887, %v800
      %v921 = vsel %vm910, %v888, %v802
      %v922 = vsel %vm910, %v889, %v804
      %v923 = vsel %vm910, %v890, %v806
      %v924 = vsel %vm910, %v891, %v808
      %v925 = vsel %vm910, %v892, %v810
      %v926 = vsel %vm910, %v893, %v812
      %v927 = vsel %vm910, %v894, %v814
      %v928 = vsel %vm910, %v895, %v816
      %v929 = vsel %vm910, %v896, %v818
      %v930 = vsel %vm910, %v897, %v820
      %v931 = vsel %vm910, %v898, %v822
      %v932 = vsel %vm910, %v899, %v824
      %v933 = vsel %vm910, %v900, %v826
      %v934 = vsel %vm910, %v901, %v828
      %v935 = vsel %vm910, %v902, %v830
      %v936 = vsel %vm910, %v903, %v832
      %v937 = vsel %vm910, %v904, %v834
      %v938 = vsel %vm910, %v905, %v836
      %v939 = vsel %vm910, %v906, %v838
      %v940 = vsel %vm910, %v907, %v840
      %v941 = vsel %vm910, %v908, %v842
      %v942 = vsel %vm910, %v909, %v844
      %v943 = vld [vmem:[%s229] sm:$0xff]
      %v944 = vld [vmem:[%s229 + $0x8] sm:$0xf]
      %v947 = vrot.slane %v471, 1
      %v948 = vrot.slane %v397, 1
      %v949 = vsel %vm523, %v947, %v948
      %v950 = vrot.slane %v489, 1
      %v951 = vsel %vm523, %v948, %v950
      %952 = vrot.lane.b32.xlu0 %v949, 4
      %v953 = vpop.permute.xlu0 %952
      %954 = vrot.lane.b32.xlu0 %v951, 4
      %v955 = vpop.permute.xlu0 %954
      %v958 = vrot.slane %v471, 2
      %v959 = vrot.slane %v397, 2
      %v960 = vsel %vm700, %v958, %v959
      %v961 = vrot.slane %v489, 2
      %v962 = vsel %vm700, %v959, %v961
      %963 = vrot.lane.b32.xlu0 %v960, 8
      %v964 = vpop.permute.xlu0 %963
      %965 = vrot.lane.b32.xlu0 %v962, 8
      %v966 = vpop.permute.xlu0 %965
      %v969 = vsel %vm877, %v471, %v953
      %v970 = vsel %vm877, %v397, %v955
      %v971 = vsel %vm910, %v969, %v964
      %v972 = vsel %vm910, %v970, %v966
      %s973 = scalar_lea.vmem %s229, 16
      %v974 = vld [vmem:[%s973] sm:$0xff]
      %v975 = vld [vmem:[%s973 + $0x8] sm:$0xf]
      %vm976 = vcmask 97280
      %v978 = vsel %vm976, %v913, 0
      %v981 = vsel %vm976, %v914, 0
      %v984 = vsel %vm976, %v915, 0
      %v987 = vsel %vm976, %v916, 0
      %v990 = vsel %vm976, %v917, 0
      %v993 = vsel %vm976, %v918, 0
      %v996 = vsel %vm976, %v919, 0
      %v999 = vsel %vm976, %v920, 0
      %v1002 = vsel %vm976, %v921, 0
      %v1005 = vsel %vm976, %v922, 0
      %v1008 = vsel %vm976, %v923, 0
      %v1011 = vsel %vm976, %v924, 0
      %v1014 = vsel %vm976, %v925, 0
      %v1017 = vsel %vm976, %v926, 0
      %v1020 = vsel %vm976, %v927, 0
      %v1023 = vsel %vm976, %v928, 0
      %v1026 = vsel %vm976, %v929, 0
      %v1029 = vsel %vm976, %v930, 0
      %v1032 = vsel %vm976, %v931, 0
      %v1035 = vsel %vm976, %v932, 0
      %v1038 = vsel %vm976, %v933, 0
      %v1041 = vsel %vm976, %v934, 0
      %v1044 = vsel %vm976, %v935, 0
      %v1047 = vsel %vm976, %v936, 0
      %v1050 = vsel %vm976, %v937, 0
      %v1053 = vsel %vm976, %v938, 0
      %v1056 = vsel %vm976, %v939, 0
      %v1059 = vsel %vm976, %v940, 0
      %v1062 = vsel %vm976, %v941, 0
      %v1065 = vsel %vm976, %v942, 0
      %v1068 = vsel %vm976, %v971, 0
      %v1071 = vsel %vm976, %v972, 0
      %vm1073 = vcmask 1043456
      %v1075 = vsel %vm1073, %v975, 0
      %1077 = vmatpush.msra.mxu0 0.0
      %1078 = vmatpush.msra.mxu0 0.0
      %1079 = vmatpush.msra.mxu0 0.0
      %1080 = vmatpush.msra.mxu0 0.0
      %1081 = vmatpush.msra.mxu0 0.0
      %1082 = vmatpush.msra.mxu0 0.0
      %1083 = vmatpush.msra.mxu0 0.0
      %1084 = vmatpush.msra.mxu0 0.0
      %1085 = vmatpush.msra.mxu0 0.0
      %1086 = vmatpush.msra.mxu0 0.0
      %1087 = vmatpush.msra.mxu0 0.0
      %1088 = vmatpush.msra.mxu0 0.0
      %1089 = vmatpush.msra.mxu0 0.0
      %1090 = vmatpush.msra.mxu0 0.0
      %1091 = vmatpush.msra.mxu0 %v1075
      %1092 = vmatpush.msra.mxu0 %v974
      %1093 = vmatmul.f32.gmra.mxu0 %v978
      %v1094 = vpop.f32.mrf.mxu0
      %v1095 = vadd.f32 0.0, %v1094
      %1096 = vmatmul.f32.gmra.mxu0 %v981
      %v1097 = vpop.f32.mrf.mxu0
      %v1098 = vadd.f32 0.0, %v1097
      %1099 = vmatmul.f32.gmra.mxu0 %v984
      %v1100 = vpop.f32.mrf.mxu0
      %v1101 = vadd.f32 0.0, %v1100
      %1102 = vmatmul.f32.gmra.mxu0 %v987
      %v1103 = vpop.f32.mrf.mxu0
      %v1104 = vadd.f32 0.0, %v1103
      %1105 = vmatmul.f32.gmra.mxu0 %v990
      %v1106 = vpop.f32.mrf.mxu0
      %v1107 = vadd.f32 0.0, %v1106
      %1108 = vmatmul.f32.gmra.mxu0 %v993
      %v1109 = vpop.f32.mrf.mxu0
      %v1110 = vadd.f32 0.0, %v1109
      %1111 = vmatmul.f32.gmra.mxu0 %v996
      %v1112 = vpop.f32.mrf.mxu0
      %v1113 = vadd.f32 0.0, %v1112
      %1114 = vmatmul.f32.gmra.mxu0 %v999
      %v1115 = vpop.f32.mrf.mxu0
      %v1116 = vadd.f32 0.0, %v1115
      %1117 = vmatmul.f32.gmra.mxu0 %v1002
      %v1118 = vpop.f32.mrf.mxu0
      %v1119 = vadd.f32 0.0, %v1118
      %1120 = vmatmul.f32.gmra.mxu0 %v1005
      %v1121 = vpop.f32.mrf.mxu0
      %v1122 = vadd.f32 0.0, %v1121
      %1123 = vmatmul.f32.gmra.mxu0 %v1008
      %v1124 = vpop.f32.mrf.mxu0
      %v1125 = vadd.f32 0.0, %v1124
      %1126 = vmatmul.f32.gmra.mxu0 %v1011
      %v1127 = vpop.f32.mrf.mxu0
      %v1128 = vadd.f32 0.0, %v1127
      %1129 = vmatmul.f32.gmra.mxu0 %v1014
      %v1130 = vpop.f32.mrf.mxu0
      %v1131 = vadd.f32 0.0, %v1130
      %1132 = vmatmul.f32.gmra.mxu0 %v1017
      %v1133 = vpop.f32.mrf.mxu0
      %v1134 = vadd.f32 0.0, %v1133
      %1135 = vmatmul.f32.gmra.mxu0 %v1020
      %v1136 = vpop.f32.mrf.mxu0
      %v1137 = vadd.f32 0.0, %v1136
      %1138 = vmatmul.f32.gmra.mxu0 %v1023
      %v1139 = vpop.f32.mrf.mxu0
      %v1140 = vadd.f32 0.0, %v1139
      %1141 = vmatmul.f32.gmra.mxu0 %v1026
      %v1142 = vpop.f32.mrf.mxu0
      %v1143 = vadd.f32 0.0, %v1142
      %1144 = vmatmul.f32.gmra.mxu0 %v1029
      %v1145 = vpop.f32.mrf.mxu0
      %v1146 = vadd.f32 0.0, %v1145
      %1147 = vmatmul.f32.gmra.mxu0 %v1032
      %v1148 = vpop.f32.mrf.mxu0
      %v1149 = vadd.f32 0.0, %v1148
      %1150 = vmatmul.f32.gmra.mxu0 %v1035
      %v1151 = vpop.f32.mrf.mxu0
      %v1152 = vadd.f32 0.0, %v1151
      %1153 = vmatmul.f32.gmra.mxu0 %v1038
      %v1154 = vpop.f32.mrf.mxu0
      %v1155 = vadd.f32 0.0, %v1154
      %1156 = vmatmul.f32.gmra.mxu0 %v1041
      %v1157 = vpop.f32.mrf.mxu0
      %v1158 = vadd.f32 0.0, %v1157
      %1159 = vmatmul.f32.gmra.mxu0 %v1044
      %v1160 = vpop.f32.mrf.mxu0
      %v1161 = vadd.f32 0.0, %v1160
      %1162 = vmatmul.f32.gmra.mxu0 %v1047
      %v1163 = vpop.f32.mrf.mxu0
      %v1164 = vadd.f32 0.0, %v1163
      %1165 = vmatmul.f32.gmra.mxu0 %v1050
      %v1166 = vpop.f32.mrf.mxu0
      %v1167 = vadd.f32 0.0, %v1166
      %1168 = vmatmul.f32.gmra.mxu0 %v1053
      %v1169 = vpop.f32.mrf.mxu0
      %v1170 = vadd.f32 0.0, %v1169
      %1171 = vmatmul.f32.gmra.mxu0 %v1056
      %v1172 = vpop.f32.mrf.mxu0
      %v1173 = vadd.f32 0.0, %v1172
      %1174 = vmatmul.f32.gmra.mxu0 %v1059
      %v1175 = vpop.f32.mrf.mxu0
      %v1176 = vadd.f32 0.0, %v1175
      %1177 = vmatmul.f32.gmra.mxu0 %v1062
      %v1178 = vpop.f32.mrf.mxu0
      %v1179 = vadd.f32 0.0, %v1178
      %1180 = vmatmul.f32.gmra.mxu0 %v1065
      %v1181 = vpop.f32.mrf.mxu0
      %v1182 = vadd.f32 0.0, %v1181
      %1183 = vmatmul.f32.gmra.mxu0 %v1068
      %v1184 = vpop.f32.mrf.mxu0
      %v1185 = vadd.f32 0.0, %v1184
      %1186 = vmatmul.f32.gmra.mxu0 %v1071
      %v1187 = vpop.f32.mrf.mxu0
      %v1188 = vadd.f32 0.0, %v1187
      %1189 = vdwg.mxu0
      %v1191 = vsel %vm976, %v911, 0
      %v1194 = vsel %vm976, %v912, 0
      %v1197 = vsel %vm1073, %v944, 0
      %1199 = vmatpush.msra.mxu0 0.0
      %1200 = vmatpush.msra.mxu0 0.0
      %1201 = vmatpush.msra.mxu0 0.0
      %1202 = vmatpush.msra.mxu0 0.0
      %1203 = vmatpush.msra.mxu0 0.0
      %1204 = vmatpush.msra.mxu0 0.0
      %1205 = vmatpush.msra.mxu0 0.0
      %1206 = vmatpush.msra.mxu0 0.0
      %1207 = vmatpush.msra.mxu0 0.0
      %1208 = vmatpush.msra.mxu0 0.0
      %1209 = vmatpush.msra.mxu0 0.0
      %1210 = vmatpush.msra.mxu0 0.0
      %1211 = vmatpush.msra.mxu0 0.0
      %1212 = vmatpush.msra.mxu0 0.0
      %1213 = vmatpush.msra.mxu0 %v1197
      %1214 = vmatpush.msra.mxu0 %v943
      %1215 = vmatmul.f32.gmra.mxu0 %v1191
      %v1216 = vpop.f32.mrf.mxu0
      %v1217 = vadd.f32 %v1095, %v1216
      %1218 = vmatmul.f32.gmra.mxu0 %v1194
      %v1219 = vpop.f32.mrf.mxu0
      %v1220 = vadd.f32 %v1098, %v1219
      %1221 = vmatmul.f32.gmra.mxu0 %v978
      %v1222 = vpop.f32.mrf.mxu0
      %v1223 = vadd.f32 %v1101, %v1222
      %1224 = vmatmul.f32.gmra.mxu0 %v981
      %v1225 = vpop.f32.mrf.mxu0
      %v1226 = vadd.f32 %v1104, %v1225
      %1227 = vmatmul.f32.gmra.mxu0 %v984
      %v1228 = vpop.f32.mrf.mxu0
      %v1229 = vadd.f32 %v1107, %v1228
      %1230 = vmatmul.f32.gmra.mxu0 %v987
      %v1231 = vpop.f32.mrf.mxu0
      %v1232 = vadd.f32 %v1110, %v1231
      %1233 = vmatmul.f32.gmra.mxu0 %v990
      %v1234 = vpop.f32.mrf.mxu0
      %v1235 = vadd.f32 %v1113, %v1234
      %1236 = vmatmul.f32.gmra.mxu0 %v993
      %v1237 = vpop.f32.mrf.mxu0
      %v1238 = vadd.f32 %v1116, %v1237
      %1239 = vmatmul.f32.gmra.mxu0 %v996
      %v1240 = vpop.f32.mrf.mxu0
      %v1241 = vadd.f32 %v1119, %v1240
      %1242 = vmatmul.f32.gmra.mxu0 %v999
      %v1243 = vpop.f32.mrf.mxu0
      %v1244 = vadd.f32 %v1122, %v1243
      %1245 = vmatmul.f32.gmra.mxu0 %v1002
      %v1246 = vpop.f32.mrf.mxu0
      %v1247 = vadd.f32 %v1125, %v1246
      %1248 = vmatmul.f32.gmra.mxu0 %v1005
      %v1249 = vpop.f32.mrf.mxu0
      %v1250 = vadd.f32 %v1128, %v1249
      %1251 = vmatmul.f32.gmra.mxu0 %v1008
      %v1252 = vpop.f32.mrf.mxu0
      %v1253 = vadd.f32 %v1131, %v1252
      %1254 = vmatmul.f32.gmra.mxu0 %v1011
      %v1255 = vpop.f32.mrf.mxu0
      %v1256 = vadd.f32 %v1134, %v1255
      %1257 = vmatmul.f32.gmra.mxu0 %v1014
      %v1258 = vpop.f32.mrf.mxu0
      %v1259 = vadd.f32 %v1137, %v1258
      %1260 = vmatmul.f32.gmra.mxu0 %v1017
      %v1261 = vpop.f32.mrf.mxu0
      %v1262 = vadd.f32 %v1140, %v1261
      %1263 = vmatmul.f32.gmra.mxu0 %v1020
      %v1264 = vpop.f32.mrf.mxu0
      %v1265 = vadd.f32 %v1143, %v1264
      %1266 = vmatmul.f32.gmra.mxu0 %v1023
      %v1267 = vpop.f32.mrf.mxu0
      %v1268 = vadd.f32 %v1146, %v1267
      %1269 = vmatmul.f32.gmra.mxu0 %v1026
      %v1270 = vpop.f32.mrf.mxu0
      %v1271 = vadd.f32 %v1149, %v1270
      %1272 = vmatmul.f32.gmra.mxu0 %v1029
      %v1273 = vpop.f32.mrf.mxu0
      %v1274 = vadd.f32 %v1152, %v1273
      %1275 = vmatmul.f32.gmra.mxu0 %v1032
      %v1276 = vpop.f32.mrf.mxu0
      %v1277 = vadd.f32 %v1155, %v1276
      %1278 = vmatmul.f32.gmra.mxu0 %v1035
      %v1279 = vpop.f32.mrf.mxu0
      %v1280 = vadd.f32 %v1158, %v1279
      %1281 = vmatmul.f32.gmra.mxu0 %v1038
      %v1282 = vpop.f32.mrf.mxu0
      %v1283 = vadd.f32 %v1161, %v1282
      %1284 = vmatmul.f32.gmra.mxu0 %v1041
      %v1285 = vpop.f32.mrf.mxu0
      %v1286 = vadd.f32 %v1164, %v1285
      %1287 = vmatmul.f32.gmra.mxu0 %v1044
      %v1288 = vpop.f32.mrf.mxu0
      %v1289 = vadd.f32 %v1167, %v1288
      %1290 = vmatmul.f32.gmra.mxu0 %v1047
      %v1291 = vpop.f32.mrf.mxu0
      %v1292 = vadd.f32 %v1170, %v1291
      %1293 = vmatmul.f32.gmra.mxu0 %v1050
      %v1294 = vpop.f32.mrf.mxu0
      %v1295 = vadd.f32 %v1173, %v1294
      %1296 = vmatmul.f32.gmra.mxu0 %v1053
      %v1297 = vpop.f32.mrf.mxu0
      %v1298 = vadd.f32 %v1176, %v1297
      %1299 = vmatmul.f32.gmra.mxu0 %v1056
      %v1300 = vpop.f32.mrf.mxu0
      %v1301 = vadd.f32 %v1179, %v1300
      %1302 = vmatmul.f32.gmra.mxu0 %v1059
      %v1303 = vpop.f32.mrf.mxu0
      %v1304 = vadd.f32 %v1182, %v1303
      %1305 = vmatmul.f32.gmra.mxu0 %v1062
      %v1306 = vpop.f32.mrf.mxu0
      %v1307 = vadd.f32 %v1185, %v1306
      %1308 = vmatmul.f32.gmra.mxu0 %v1065
      %v1309 = vpop.f32.mrf.mxu0
      %v1310 = vadd.f32 %v1188, %v1309
      %1311 = vdwg.mxu0
      %v1314 = vrot.slane %v472, 1
      %v1315 = vrot.slane %v400, 1
      %v1316 = vsel %vm523, %v1314, %v1315
      %v1317 = vrot.slane %v490, 1
      %v1318 = vsel %vm523, %v1315, %v1317
      %1319 = vrot.lane.b32.xlu0 %v1316, 4
      %v1320 = vpop.permute.xlu0 %1319
      %1321 = vrot.lane.b32.xlu0 %v1318, 4
      %v1322 = vpop.permute.xlu0 %1321
      %v1325 = vrot.slane %v472, 2
      %v1326 = vrot.slane %v400, 2
      %v1327 = vsel %vm700, %v1325, %v1326
      %v1328 = vrot.slane %v490, 2
      %v1329 = vsel %vm700, %v1326, %v1328
      %1330 = vrot.lane.b32.xlu0 %v1327, 8
      %v1331 = vpop.permute.xlu0 %1330
      %1332 = vrot.lane.b32.xlu0 %v1329, 8
      %v1333 = vpop.permute.xlu0 %1332
      %v1336 = vsel %vm877, %v472, %v1320
      %v1337 = vsel %vm877, %v400, %v1322
      %v1338 = vsel %vm910, %v1336, %v1331
      %v1339 = vsel %vm910, %v1337, %v1333
      %s1340 = scalar_lea.vmem %s229, 32
      %v1341 = vld [vmem:[%s1340] sm:$0xff]
      %v1342 = vld [vmem:[%s1340 + $0x8] sm:$0xf]
      %v1344 = vsel %vm976, %v1338, 0
      %v1347 = vsel %vm976, %v1339, 0
      %v1350 = vsel %vm1073, %v1342, 0
      %1352 = vmatpush.msra.mxu0 0.0
      %1353 = vmatpush.msra.mxu0 0.0
      %1354 = vmatpush.msra.mxu0 0.0
      %1355 = vmatpush.msra.mxu0 0.0
      %1356 = vmatpush.msra.mxu0 0.0
      %1357 = vmatpush.msra.mxu0 0.0
      %1358 = vmatpush.msra.mxu0 0.0
      %1359 = vmatpush.msra.mxu0 0.0
      %1360 = vmatpush.msra.mxu0 0.0
      %1361 = vmatpush.msra.mxu0 0.0
      %1362 = vmatpush.msra.mxu0 0.0
      %1363 = vmatpush.msra.mxu0 0.0
      %1364 = vmatpush.msra.mxu0 0.0
      %1365 = vmatpush.msra.mxu0 0.0
      %1366 = vmatpush.msra.mxu0 %v1350
      %1367 = vmatpush.msra.mxu0 %v1341
      %1368 = vmatmul.f32.gmra.mxu0 %v984
      %v1369 = vpop.f32.mrf.mxu0
      %v1370 = vadd.f32 0.0, %v1369
      %1371 = vmatmul.f32.gmra.mxu0 %v987
      %v1372 = vpop.f32.mrf.mxu0
      %v1373 = vadd.f32 0.0, %v1372
      %1374 = vmatmul.f32.gmra.mxu0 %v990
      %v1375 = vpop.f32.mrf.mxu0
      %v1376 = vadd.f32 0.0, %v1375
      %1377 = vmatmul.f32.gmra.mxu0 %v993
      %v1378 = vpop.f32.mrf.mxu0
      %v1379 = vadd.f32 0.0, %v1378
      %1380 = vmatmul.f32.gmra.mxu0 %v996
      %v1381 = vpop.f32.mrf.mxu0
      %v1382 = vadd.f32 0.0, %v1381
      %1383 = vmatmul.f32.gmra.mxu0 %v999
      %v1384 = vpop.f32.mrf.mxu0
      %v1385 = vadd.f32 0.0, %v1384
      %1386 = vmatmul.f32.gmra.mxu0 %v1002
      %v1387 = vpop.f32.mrf.mxu0
      %v1388 = vadd.f32 0.0, %v1387
      %1389 = vmatmul.f32.gmra.mxu0 %v1005
      %v1390 = vpop.f32.mrf.mxu0
      %v1391 = vadd.f32 0.0, %v1390
      %1392 = vmatmul.f32.gmra.mxu0 %v1008
      %v1393 = vpop.f32.mrf.mxu0
      %v1394 = vadd.f32 0.0, %v1393
      %1395 = vmatmul.f32.gmra.mxu0 %v1011
      %v1396 = vpop.f32.mrf.mxu0
      %v1397 = vadd.f32 0.0, %v1396
      %1398 = vmatmul.f32.gmra.mxu0 %v1014
      %v1399 = vpop.f32.mrf.mxu0
      %v1400 = vadd.f32 0.0, %v1399
      %1401 = vmatmul.f32.gmra.mxu0 %v1017
      %v1402 = vpop.f32.mrf.mxu0
      %v1403 = vadd.f32 0.0, %v1402
      %1404 = vmatmul.f32.gmra.mxu0 %v1020
      %v1405 = vpop.f32.mrf.mxu0
      %v1406 = vadd.f32 0.0, %v1405
      %1407 = vmatmul.f32.gmra.mxu0 %v1023
      %v1408 = vpop.f32.mrf.mxu0
      %v1409 = vadd.f32 0.0, %v1408
      %1410 = vmatmul.f32.gmra.mxu0 %v1026
      %v1411 = vpop.f32.mrf.mxu0
      %v1412 = vadd.f32 0.0, %v1411
      %1413 = vmatmul.f32.gmra.mxu0 %v1029
      %v1414 = vpop.f32.mrf.mxu0
      %v1415 = vadd.f32 0.0, %v1414
      %1416 = vmatmul.f32.gmra.mxu0 %v1032
      %v1417 = vpop.f32.mrf.mxu0
      %v1418 = vadd.f32 0.0, %v1417
      %1419 = vmatmul.f32.gmra.mxu0 %v1035
      %v1420 = vpop.f32.mrf.mxu0
      %v1421 = vadd.f32 0.0, %v1420
      %1422 = vmatmul.f32.gmra.mxu0 %v1038
      %v1423 = vpop.f32.mrf.mxu0
      %v1424 = vadd.f32 0.0, %v1423
      %1425 = vmatmul.f32.gmra.mxu0 %v1041
      %v1426 = vpop.f32.mrf.mxu0
      %v1427 = vadd.f32 0.0, %v1426
      %1428 = vmatmul.f32.gmra.mxu0 %v1044
      %v1429 = vpop.f32.mrf.mxu0
      %v1430 = vadd.f32 0.0, %v1429
      %1431 = vmatmul.f32.gmra.mxu0 %v1047
      %v1432 = vpop.f32.mrf.mxu0
      %v1433 = vadd.f32 0.0, %v1432
      %1434 = vmatmul.f32.gmra.mxu0 %v1050
      %v1435 = vpop.f32.mrf.mxu0
      %v1436 = vadd.f32 0.0, %v1435
      %1437 = vmatmul.f32.gmra.mxu0 %v1053
      %v1438 = vpop.f32.mrf.mxu0
      %v1439 = vadd.f32 0.0, %v1438
      %1440 = vmatmul.f32.gmra.mxu0 %v1056
      %v1441 = vpop.f32.mrf.mxu0
      %v1442 = vadd.f32 0.0, %v1441
      %1443 = vmatmul.f32.gmra.mxu0 %v1059
      %v1444 = vpop.f32.mrf.mxu0
      %v1445 = vadd.f32 0.0, %v1444
      %1446 = vmatmul.f32.gmra.mxu0 %v1062
      %v1447 = vpop.f32.mrf.mxu0
      %v1448 = vadd.f32 0.0, %v1447
      %1449 = vmatmul.f32.gmra.mxu0 %v1065
      %v1450 = vpop.f32.mrf.mxu0
      %v1451 = vadd.f32 0.0, %v1450
      %1452 = vmatmul.f32.gmra.mxu0 %v1068
      %v1453 = vpop.f32.mrf.mxu0
      %v1454 = vadd.f32 0.0, %v1453
      %1455 = vmatmul.f32.gmra.mxu0 %v1071
      %v1456 = vpop.f32.mrf.mxu0
      %v1457 = vadd.f32 0.0, %v1456
      %1458 = vmatmul.f32.gmra.mxu0 %v1344
      %v1459 = vpop.f32.mrf.mxu0
      %v1460 = vadd.f32 0.0, %v1459
      %1461 = vmatmul.f32.gmra.mxu0 %v1347
      %v1462 = vpop.f32.mrf.mxu0
      %v1463 = vadd.f32 0.0, %v1462
      %1464 = vdwg.mxu0
      %v1465 = vadd.f32 %v1217, %v1370
      %v1466 = vadd.f32 %v1220, %v1373
      %v1467 = vadd.f32 %v1223, %v1376
      %v1468 = vadd.f32 %v1226, %v1379
      %v1469 = vadd.f32 %v1229, %v1382
      %v1470 = vadd.f32 %v1232, %v1385
      %v1471 = vadd.f32 %v1235, %v1388
      %v1472 = vadd.f32 %v1238, %v1391
      %v1473 = vadd.f32 %v1241, %v1394
      %v1474 = vadd.f32 %v1244, %v1397
      %v1475 = vadd.f32 %v1247, %v1400
      %v1476 = vadd.f32 %v1250, %v1403
      %v1477 = vadd.f32 %v1253, %v1406
      %v1478 = vadd.f32 %v1256, %v1409
      %v1479 = vadd.f32 %v1259, %v1412
      %v1480 = vadd.f32 %v1262, %v1415
      %v1481 = vadd.f32 %v1265, %v1418
      %v1482 = vadd.f32 %v1268, %v1421
      %v1483 = vadd.f32 %v1271, %v1424
      %v1484 = vadd.f32 %v1274, %v1427
      %v1485 = vadd.f32 %v1277, %v1430
      %v1486 = vadd.f32 %v1280, %v1433
      %v1487 = vadd.f32 %v1283, %v1436
      %v1488 = vadd.f32 %v1286, %v1439
      %v1489 = vadd.f32 %v1289, %v1442
      %v1490 = vadd.f32 %v1292, %v1445
      %v1491 = vadd.f32 %v1295, %v1448
      %v1492 = vadd.f32 %v1298, %v1451
      %v1493 = vadd.f32 %v1301, %v1454
      %v1494 = vadd.f32 %v1304, %v1457
      %v1495 = vadd.f32 %v1307, %v1460
      %v1496 = vadd.f32 %v1310, %v1463
      %1497 = vst.msk [vmem:[%s241] sm:$0xff] %vm910, %v1465
      %1498 = vst.msk [vmem:[%s241 + $0x8] sm:$0xff] %vm910, %v1466
      %1499 = vst.msk [vmem:[%s241 + $0x10] sm:$0xff] %vm910, %v1467
      %1500 = vst.msk [vmem:[%s241 + $0x18] sm:$0xff] %vm910, %v1468
      %1501 = vst.msk [vmem:[%s241 + $0x20] sm:$0xff] %vm910, %v1469
      %1502 = vst.msk [vmem:[%s241 + $0x28] sm:$0xff] %vm910, %v1470
      %1503 = vst.msk [vmem:[%s241 + $0x30] sm:$0xff] %vm910, %v1471
      %1504 = vst.msk [vmem:[%s241 + $0x38] sm:$0xff] %vm910, %v1472
      %1505 = vst.msk [vmem:[%s241 + $0x40] sm:$0xff] %vm910, %v1473
      %1506 = vst.msk [vmem:[%s241 + $0x48] sm:$0xff] %vm910, %v1474
      %1507 = vst.msk [vmem:[%s241 + $0x50] sm:$0xff] %vm910, %v1475
      %1508 = vst.msk [vmem:[%s241 + $0x58] sm:$0xff] %vm910, %v1476
      %1509 = vst.msk [vmem:[%s241 + $0x60] sm:$0xff] %vm910, %v1477
      %1510 = vst.msk [vmem:[%s241 + $0x68] sm:$0xff] %vm910, %v1478
      %1511 = vst.msk [vmem:[%s241 + $0x70] sm:$0xff] %vm910, %v1479
      %1512 = vst.msk [vmem:[%s241 + $0x78] sm:$0xff] %vm910, %v1480
      %1513 = vst.msk [vmem:[%s241 + $0x80] sm:$0xff] %vm910, %v1481
      %1514 = vst.msk [vmem:[%s241 + $0x88] sm:$0xff] %vm910, %v1482
      %1515 = vst.msk [vmem:[%s241 + $0x90] sm:$0xff] %vm910, %v1483
      %1516 = vst.msk [vmem:[%s241 + $0x98] sm:$0xff] %vm910, %v1484
      %1517 = vst.msk [vmem:[%s241 + $0xa0] sm:$0xff] %vm910, %v1485
      %1518 = vst.msk [vmem:[%s241 + $0xa8] sm:$0xff] %vm910, %v1486
      %1519 = vst.msk [vmem:[%s241 + $0xb0] sm:$0xff] %vm910, %v1487
      %1520 = vst.msk [vmem:[%s241 + $0xb8] sm:$0xff] %vm910, %v1488
      %1521 = vst.msk [vmem:[%s241 + $0xc0] sm:$0xff] %vm910, %v1489
      %1522 = vst.msk [vmem:[%s241 + $0xc8] sm:$0xff] %vm910, %v1490
      %1523 = vst.msk [vmem:[%s241 + $0xd0] sm:$0xff] %vm910, %v1491
      %1524 = vst.msk [vmem:[%s241 + $0xd8] sm:$0xff] %vm910, %v1492
      %1525 = vst.msk [vmem:[%s241 + $0xe0] sm:$0xff] %vm910, %v1493
      %1526 = vst.msk [vmem:[%s241 + $0xe8] sm:$0xff] %vm910, %v1494
      %1527 = vst.msk [vmem:[%s241 + $0xf0] sm:$0xff] %vm910, %v1495
      %1528 = vst.msk [vmem:[%s241 + $0xf8] sm:$0xff] %vm910, %v1496
      %v1529 = vsel %vm910, %v1465, 0.0
      %v1530 = vsel %vm910, %v1466, 0.0
      %v1531 = vadd.f32 %v1529, %v1530
      %v1532 = vsel %vm910, %v1467, 0.0
      %v1533 = vadd.f32 %v1531, %v1532
      %v1534 = vsel %vm910, %v1468, 0.0
      %v1535 = vadd.f32 %v1533, %v1534
      %v1536 = vsel %vm910, %v1469, 0.0
      %v1537 = vadd.f32 %v1535, %v1536
      %v1538 = vsel %vm910, %v1470, 0.0
      %v1539 = vadd.f32 %v1537, %v1538
      %v1540 = vsel %vm910, %v1471, 0.0
      %v1541 = vadd.f32 %v1539, %v1540
      %v1542 = vsel %vm910, %v1472, 0.0
      %v1543 = vadd.f32 %v1541, %v1542
      %v1544 = vsel %vm910, %v1473, 0.0
      %v1545 = vadd.f32 %v1543, %v1544
      %v1546 = vsel %vm910, %v1474, 0.0
      %v1547 = vadd.f32 %v1545, %v1546
      %v1548 = vsel %vm910, %v1475, 0.0
      %v1549 = vadd.f32 %v1547, %v1548
      %v1550 = vsel %vm910, %v1476, 0.0
      %v1551 = vadd.f32 %v1549, %v1550
      %v1552 = vsel %vm910, %v1477, 0.0
      %v1553 = vadd.f32 %v1551, %v1552
      %v1554 = vsel %vm910, %v1478, 0.0
      %v1555 = vadd.f32 %v1553, %v1554
      %v1556 = vsel %vm910, %v1479, 0.0
      %v1557 = vadd.f32 %v1555, %v1556
      %v1558 = vsel %vm910, %v1480, 0.0
      %v1559 = vadd.f32 %v1557, %v1558
      %v1560 = vsel %vm910, %v1481, 0.0
      %v1561 = vadd.f32 %v1559, %v1560
      %v1562 = vsel %vm910, %v1482, 0.0
      %v1563 = vadd.f32 %v1561, %v1562
      %v1564 = vsel %vm910, %v1483, 0.0
      %v1565 = vadd.f32 %v1563, %v1564
      %v1566 = vsel %vm910, %v1484, 0.0
      %v1567 = vadd.f32 %v1565, %v1566
      %v1568 = vsel %vm910, %v1485, 0.0
      %v1569 = vadd.f32 %v1567, %v1568
      %v1570 = vsel %vm910, %v1486, 0.0
      %v1571 = vadd.f32 %v1569, %v1570
      %v1572 = vsel %vm910, %v1487, 0.0
      %v1573 = vadd.f32 %v1571, %v1572
      %v1574 = vsel %vm910, %v1488, 0.0
      %v1575 = vadd.f32 %v1573, %v1574
      %v1576 = vsel %vm910, %v1489, 0.0
      %v1577 = vadd.f32 %v1575, %v1576
      %v1578 = vsel %vm910, %v1490, 0.0
      %v1579 = vadd.f32 %v1577, %v1578
      %v1580 = vsel %vm910, %v1491, 0.0
      %v1581 = vadd.f32 %v1579, %v1580
      %v1582 = vsel %vm910, %v1492, 0.0
      %v1583 = vadd.f32 %v1581, %v1582
      %v1584 = vsel %vm910, %v1493, 0.0
      %v1585 = vadd.f32 %v1583, %v1584
      %v1586 = vsel %vm910, %v1494, 0.0
      %v1587 = vadd.f32 %v1585, %v1586
      %v1588 = vsel %vm910, %v1495, 0.0
      %v1589 = vadd.f32 %v1587, %v1588
      %v1590 = vsel %vm910, %v1496, 0.0
      %v1591 = vadd.f32 %v1589, %v1590
      %v1592 = vrot.slane %v1591, 4
      %v1593 = vadd.f32 %v1591, %v1592
      %v1594 = vrot.slane %v1593, 2
      %v1595 = vadd.f32 %v1593, %v1594
      %v1596 = vrot.slane %v1595, 1
      %v1597 = vadd.f32 %v1595, %v1596
      %v1598 = vmul.f32 %v1465, %v1465
      %v1599 = vmul.f32 %v1466, %v1466
      %v1600 = vmul.f32 %v1467, %v1467
      %v1601 = vmul.f32 %v1468, %v1468
      %v1602 = vmul.f32 %v1469, %v1469
      %v1603 = vmul.f32 %v1470, %v1470
      %v1604 = vmul.f32 %v1471, %v1471
      %v1605 = vmul.f32 %v1472, %v1472
      %v1606 = vmul.f32 %v1473, %v1473
      %v1607 = vmul.f32 %v1474, %v1474
      %v1608 = vmul.f32 %v1475, %v1475
      %v1609 = vmul.f32 %v1476, %v1476
      %v1610 = vmul.f32 %v1477, %v1477
      %v1611 = vmul.f32 %v1478, %v1478
      %v1612 = vmul.f32 %v1479, %v1479
      %v1613 = vmul.f32 %v1480, %v1480
      %v1614 = vmul.f32 %v1481, %v1481
      %v1615 = vmul.f32 %v1482, %v1482
      %v1616 = vmul.f32 %v1483, %v1483
      %v1617 = vmul.f32 %v1484, %v1484
      %v1618 = vmul.f32 %v1485, %v1485
      %v1619 = vmul.f32 %v1486, %v1486
      %v1620 = vmul.f32 %v1487, %v1487
      %v1621 = vmul.f32 %v1488, %v1488
      %v1622 = vmul.f32 %v1489, %v1489
      %v1623 = vmul.f32 %v1490, %v1490
      %v1624 = vmul.f32 %v1491, %v1491
      %v1625 = vmul.f32 %v1492, %v1492
      %v1626 = vmul.f32 %v1493, %v1493
      %v1627 = vmul.f32 %v1494, %v1494
      %v1628 = vmul.f32 %v1495, %v1495
      %v1629 = vmul.f32 %v1496, %v1496
      %v1630 = vsel %vm910, %v1598, 0.0
      %v1631 = vsel %vm910, %v1599, 0.0
      %v1632 = vadd.f32 %v1630, %v1631
      %v1633 = vsel %vm910, %v1600, 0.0
      %v1634 = vadd.f32 %v1632, %v1633
      %v1635 = vsel %vm910, %v1601, 0.0
      %v1636 = vadd.f32 %v1634, %v1635
      %v1637 = vsel %vm910, %v1602, 0.0
      %v1638 = vadd.f32 %v1636, %v1637
      %v1639 = vsel %vm910, %v1603, 0.0
      %v1640 = vadd.f32 %v1638, %v1639
      %v1641 = vsel %vm910, %v1604, 0.0
      %v1642 = vadd.f32 %v1640, %v1641
      %v1643 = vsel %vm910, %v1605, 0.0
      %v1644 = vadd.f32 %v1642, %v1643
      %v1645 = vsel %vm910, %v1606, 0.0
      %v1646 = vadd.f32 %v1644, %v1645
      %v1647 = vsel %vm910, %v1607, 0.0
      %v1648 = vadd.f32 %v1646, %v1647
      %v1649 = vsel %vm910, %v1608, 0.0
      %v1650 = vadd.f32 %v1648, %v1649
      %v1651 = vsel %vm910, %v1609, 0.0
      %v1652 = vadd.f32 %v1650, %v1651
      %v1653 = vsel %vm910, %v1610, 0.0
      %v1654 = vadd.f32 %v1652, %v1653
      %v1655 = vsel %vm910, %v1611, 0.0
      %v1656 = vadd.f32 %v1654, %v1655
      %v1657 = vsel %vm910, %v1612, 0.0
      %v1658 = vadd.f32 %v1656, %v1657
      %v1659 = vsel %vm910, %v1613, 0.0
      %v1660 = vadd.f32 %v1658, %v1659
      %v1661 = vsel %vm910, %v1614, 0.0
      %v1662 = vadd.f32 %v1660, %v1661
      %v1663 = vsel %vm910, %v1615, 0.0
      %v1664 = vadd.f32 %v1662, %v1663
      %v1665 = vsel %vm910, %v1616, 0.0
      %v1666 = vadd.f32 %v1664, %v1665
      %v1667 = vsel %vm910, %v1617, 0.0
      %v1668 = vadd.f32 %v1666, %v1667
      %v1669 = vsel %vm910, %v1618, 0.0
      %v1670 = vadd.f32 %v1668, %v1669
      %v1671 = vsel %vm910, %v1619, 0.0
      %v1672 = vadd.f32 %v1670, %v1671
      %v1673 = vsel %vm910, %v1620, 0.0
      %v1674 = vadd.f32 %v1672, %v1673
      %v1675 = vsel %vm910, %v1621, 0.0
      %v1676 = vadd.f32 %v1674, %v1675
      %v1677 = vsel %vm910, %v1622, 0.0
      %v1678 = vadd.f32 %v1676, %v1677
      %v1679 = vsel %vm910, %v1623, 0.0
      %v1680 = vadd.f32 %v1678, %v1679
      %v1681 = vsel %vm910, %v1624, 0.0
      %v1682 = vadd.f32 %v1680, %v1681
      %v1683 = vsel %vm910, %v1625, 0.0
      %v1684 = vadd.f32 %v1682, %v1683
      %v1685 = vsel %vm910, %v1626, 0.0
      %v1686 = vadd.f32 %v1684, %v1685
      %v1687 = vsel %vm910, %v1627, 0.0
      %v1688 = vadd.f32 %v1686, %v1687
      %v1689 = vsel %vm910, %v1628, 0.0
      %v1690 = vadd.f32 %v1688, %v1689
      %v1691 = vsel %vm910, %v1629, 0.0
      %v1692 = vadd.f32 %v1690, %v1691
      %v1693 = vrot.slane %v1692, 4
      %v1694 = vadd.f32 %v1692, %v1693
      %v1695 = vrot.slane %v1694, 2
      %v1696 = vadd.f32 %v1694, %v1695
      %v1697 = vrot.slane %v1696, 1
      %v1698 = vadd.f32 %v1696, %v1697
      %v1699 = vsel %vm346, %v1597, %v1698
      %vm1700 = vcmask 58368
      %1701 = vst.msk [vmem:[%s252] sm:$0x3] %vm1700, %v1699
      %s1702 = smul.u32 32, %s21
      %p1703 = scmp.lt.s32.totalorder %s20, 1
      %s1704 = scalar_select %p1703, %s20, 1
      %p1705 = scmp.lt.s32.totalorder %s1702, 31
      %s1706 = scalar_select %p1705, %s1702, 31
      %p1707 = scmp.lt.s32.totalorder %s22, 0
      %s1708 = scalar_select %p1707, %s22, 0
      %s1709 = sadd.s32 %s1708, %s1706
      %s1710 = smul.addr %s1704, 32
      %s1711 = sadd.s32 %s1709, %s1710
      %s1712 = smul.addr %s1711, 8
      %s1713 = scalar_lea.vmem %s2, %s1712
      %p1714 = scmp.lt.s32.totalorder %s20, 1
      %s1715 = scalar_select %p1714, %s20, 1
      %p1716 = scmp.lt.s32.totalorder %s21, 0
      %s1717 = scalar_select %p1716, %s21, 0
      %p1718 = scmp.lt.s32.totalorder %s22, 0
      %s1719 = scalar_select %p1718, %s22, 0
      %s1720 = sadd.s32 %s1719, %s1717
      %s1721 = sadd.s32 %s1720, %s1715
      %s1722 = smul.addr %s1721, 2
      %s1723 = scalar_lea.vmem %s3, %s1722
      // Predicated region
      $region29: #{double_conv_forward.3} parent=27 // pred_check
        %p1724 = pneg %p108
      $region30: #{double_conv_forward.3} parent=27 // pred_check_branch
        %1726 = sbr.rel (%p1724) target = $region32
      $region31: #{double_conv_forward.3} parent=27 // pred_region
        %s1727 = smul.u32 32, %s21
      $region32: #{double_conv_forward.3} parent=27 // pred_fallthru
        _
      // Predicated region
      $region33: #{double_conv_forward.3} parent=27 // pred_check
        %p1728 = pneg %p138
      $region34: #{double_conv_forward.3} parent=27 // pred_check_branch
        %1730 = sbr.rel (%p1728) target = $region36
      $region35: #{double_conv_forward.3} parent=27 // pred_region
        _
      $region36: #{double_conv_forward.3} parent=27 // pred_fallthru
        _
    $region28: #{double_conv_forward.3} parent=5 // pred_fallthru
      _
    %p1731 = scmp.le.s32.totalorder 2, %s10
    // Predicated region
    $region37: #{double_conv_forward.3} parent=5 // pred_check
      %p1732 = pneg %p1731
    $region38: #{double_conv_forward.3} parent=5 // pred_check_branch
      %1734 = sbr.rel (%p1732) target = $region40
    $region39: #{double_conv_forward.3} parent=5 // pred_region
      %s1735 = ssub.s32 %s10, 2
      // Predicated region
      $region41: #{double_conv_forward.3} parent=39 // pred_check
        %p1736 = pneg %p114
      $region42: #{double_conv_forward.3} parent=39 // pred_check_branch
        %1738 = sbr.rel (%p1736) target = $region44
      $region43: #{double_conv_forward.3} parent=39 // pred_region
        %s1739 = smul.u32 32, %s24
        %p1740 = scmp.lt.s32.totalorder %s23, 1
        %s1741 = scalar_select %p1740, %s23, 1
        %p1742 = scmp.lt.s32.totalorder %s1739, 31
        %s1743 = scalar_select %p1742, %s1739, 31
        %p1744 = scmp.lt.s32.totalorder %s25, 0
        %s1745 = scalar_select %p1744, %s25, 0
        %s1746 = sadd.s32 %s1745, %s1743
        %s1747 = smul.addr %s1741, 32
        %s1748 = sadd.s32 %s1746, %s1747
        %s1749 = smul.addr %s1748, 8
        %s1750 = scalar_lea.vmem %s2, %s1749
      $region44: #{double_conv_forward.3} parent=39 // pred_fallthru
        _
      // Predicated region
      $region45: #{double_conv_forward.3} parent=39 // pred_check
        %p1751 = pneg %p144
      $region46: #{double_conv_forward.3} parent=39 // pred_check_branch
        %1753 = sbr.rel (%p1751) target = $region48
      $region47: #{double_conv_forward.3} parent=39 // pred_region
        %p1754 = scmp.lt.s32.totalorder %s23, 1
        %s1755 = scalar_select %p1754, %s23, 1
        %p1756 = scmp.lt.s32.totalorder %s24, 0
        %s1757 = scalar_select %p1756, %s24, 0
        %p1758 = scmp.lt.s32.totalorder %s25, 0
        %s1759 = scalar_select %p1758, %s25, 0
        %s1760 = sadd.s32 %s1759, %s1757
        %s1761 = sadd.s32 %s1760, %s1755
        %s1762 = smul.addr %s1761, 2
        %s1763 = scalar_lea.vmem %s3, %s1762
      $region48: #{double_conv_forward.3} parent=39 // pred_fallthru
        _
    $region40: #{double_conv_forward.3} parent=5 // pred_fallthru
      _
  $region6: #{double_conv_forward.3} parent=0 // loop_footer
    %s14 = sadd.s32 1, %s10
  $region7: #{double_conv_forward.3} parent=0 // loop_footer_branch
    %9 = sbr.rel target = $region3
  $region8: #{double_conv_forward.3} parent=0 // loop_exit
    _

// kernel: double_conv_forward.4
$region0: #{double_conv_forward.4}
  #allocation0 [shape = 'u32[]', space=smem, size = 0x4, offset = 0x4, fixed_abs, tag = 'smem constant byte address 0x4 - core index']
  #allocation1 [shape = 'u32[72,128]{1,0:T(1,128)}', space=vmem, size = 0x9000, scoped, tag = 'internal scratch']
  %s0 = inlined_call_operand.vmem [shape: f32[2,16,16,8], index: 0, kind: input, shape index: {}]
  %s1 = inlined_call_operand.vmem [shape: f32[1,1,8], index: 1, kind: input, shape index: {}]
  %s2 = inlined_call_operand.vmem [shape: f32[1,1,8], index: 2, kind: input, shape index: {}]
  %s3 = inlined_call_operand.vmem [shape: f32[3,24,8], index: 3, kind: input, shape index: {}]
  %s4 = inlined_call_operand.vmem [shape: f32[2,256,8], index: 4, kind: output, shape index: {0}]
  %s5 = inlined_call_operand.vmem [shape: f32[2,1,2,8], index: 5, kind: output, shape index: {1}]
  %6 = xla_tuple %s4, %s5
  %s7 = sld [smem:[#allocation0]]
  $region57: #{double_conv_forward.4} parent=0
    _
  %s9 = ssub.s32 1, %s7
  %s10 = scalar_select 0, %s9, %s7
  loop: start=0, step=1, limit=4
  $region2: #{double_conv_forward.4} parent=0 // loop_pre_header
    _
  $region3: #{double_conv_forward.4} parent=0 // loop_header
    %s12 = sphi 0, %s16
    %p13 = scmp.ge.s32.totalorder %s12, 4
    %s19 = sphi 0, %s38
    %s20 = sphi 0, %s34
    %s21 = sphi 0, %s30
    %s22 = sphi 0, %s19
    %s23 = sphi 0, %s20
    %s24 = sphi 0, %s21
    %s25 = sphi 0, %s22
    %s26 = sphi 0, %s23
    %s27 = sphi 0, %s24
    %s41 = sphi 0, %s43
    %s44 = sphi 0, %s41
    %s45 = sphi 0, %s44
    %s61 = sphi 0, %s45
    %s65 = sphi 0, %s65
    %s67 = sphi 0, %s65
    %s68 = sphi 0, %s67
    %s82 = sphi 0, %s68
    %s86 = sphi 0, %s86
    %s88 = sphi 0, %s86
    %s89 = sphi 0, %s88
    %s103 = sphi 0, %s89
    %s109 = sphi 0, %s111
    %s112 = sphi 0, %s109
    %s113 = sphi 0, %s112
    %s129 = sphi 0, %s113
    %s139 = sphi 0, %s141
    %s142 = sphi 0, %s139
    %s143 = sphi 0, %s142
    %s159 = sphi 0, %s143
    %s169 = sphi 0, %s171
    %s172 = sphi 0, %s169
    %s173 = sphi 0, %s172
    %s189 = sphi 0, %s173
  $region4: #{double_conv_forward.4} parent=0 // loop_header_branch
    %15 = sbr.rel (%p13) target = $region8
  $region5: #{double_conv_forward.4} parent=0 // loop_body
    %s17 = ssub.s32 %s12, 1
    %s18 = ssub.s32 %s12, 2
    %s28 = sadd.s32 1, %s21
    %p29 = scmp.ge.s32.totalorder %s28, 1
    %s30 = scalar_select %p29, 0, %s28
    %s31 = sadd.s32 1, %s20
    %s32 = scalar_select %p29, %s31, %s20
    %p33 = scmp.ge.s32.totalorder %s32, 1
    %s34 = scalar_select %p33, 0, %s32
    %s35 = sadd.s32 1, %s19
    %s36 = scalar_select %p33, %s35, %s19
    %p37 = scmp.ge.s32.totalorder %s36, 2
    %s38 = scalar_select %p37, 0, %s36
    %s39 = ssub.s32 %s19, %s38
    %p40 = scmp.eq.s32.totalorder %s39, 0
    %s42 = sadd.s32 %s41, 1
    %s43 = scalar_select %p40, %s41, %s42
    %p46 = pneg %p40
    %p47 = scmp.eq.s32.totalorder %s12, 1
    %p48 = por %p46, %p47
    %p49 = scmp.ne.s32.totalorder %s41, %s44
    %p50 = scmp.eq.s32.totalorder %s12, 0
    %p51 = por %p49, %p50
    %p52 = scmp.ne.s32.totalorder %s41, %s44
    %p53 = scmp.eq.s32.totalorder %s17, 1
    %p54 = por %p52, %p53
    %p55 = scmp.ne.s32.totalorder %s44, %s45
    %p56 = scmp.eq.s32.totalorder %s17, 0
    %p57 = por %p55, %p56
    %p58 = scmp.ne.s32.totalorder %s44, %s45
    %p59 = scmp.eq.s32.totalorder %s18, 1
    %p60 = por %p58, %p59
    %p62 = scmp.ne.s32.totalorder %s45, %s61
    %p63 = scmp.eq.s32.totalorder %s18, 0
    %p64 = por %p62, %p63
    %s66 = sadd.s32 %s65, 1
    %p69 = scmp.eq.s32.totalorder %s12, 1
    %p70 = scmp.ne.s32.totalorder %s65, %s67
    %p71 = scmp.eq.s32.totalorder %s12, 0
    %p72 = por %p70, %p71
    %p73 = scmp.ne.s32.totalorder %s65, %s67
    %p74 = scmp.eq.s32.totalorder %s17, 1
    %p75 = por %p73, %p74
    %p76 = scmp.ne.s32.totalorder %s67, %s68
    %p77 = scmp.eq.s32.totalorder %s17, 0
    %p78 = por %p76, %p77
    %p79 = scmp.ne.s32.totalorder %s67, %s68
    %p80 = scmp.eq.s32.totalorder %s18, 1
    %p81 = por %p79, %p80
    %p83 = scmp.ne.s32.totalorder %s68, %s82
    %p84 = scmp.eq.s32.totalorder %s18, 0
    %p85 = por %p83, %p84
    %s87 = sadd.s32 %s86, 1
    %p90 = scmp.eq.s32.totalorder %s12, 1
    %p91 = scmp.ne.s32.totalorder %s86, %s88
    %p92 = scmp.eq.s32.totalorder %s12, 0
    %p93 = por %p91, %p92
    %p94 = scmp.ne.s32.totalorder %s86, %s88
    %p95 = scmp.eq.s32.totalorder %s17, 1
    %p96 = por %p94, %p95
    %p97 = scmp.ne.s32.totalorder %s88, %s89
    %p98 = scmp.eq.s32.totalorder %s17, 0
    %p99 = por %p97, %p98
    %p100 = scmp.ne.s32.totalorder %s88, %s89
    %p101 = scmp.eq.s32.totalorder %s18, 1
    %p102 = por %p100, %p101
    %p104 = scmp.ne.s32.totalorder %s89, %s103
    %p105 = scmp.eq.s32.totalorder %s18, 0
    %p106 = por %p104, %p105
    %s107 = ssub.s32 %s21, %s30
    %p108 = scmp.eq.s32.totalorder %s107, 0
    %s110 = sadd.s32 %s109, 1
    %s111 = scalar_select %p108, %s109, %s110
    %p114 = pneg %p108
    %p115 = scmp.eq.s32.totalorder %s12, 1
    %p116 = por %p114, %p115
    %p117 = scmp.ne.s32.totalorder %s109, %s112
    %p118 = scmp.eq.s32.totalorder %s12, 0
    %p119 = por %p117, %p118
    %p120 = scmp.ne.s32.totalorder %s109, %s112
    %p121 = scmp.eq.s32.totalorder %s17, 1
    %p122 = por %p120, %p121
    %p123 = scmp.ne.s32.totalorder %s112, %s113
    %p124 = scmp.eq.s32.totalorder %s17, 0
    %p125 = por %p123, %p124
    %p126 = scmp.ne.s32.totalorder %s112, %s113
    %p127 = scmp.eq.s32.totalorder %s18, 1
    %p128 = por %p126, %p127
    %p130 = scmp.ne.s32.totalorder %s113, %s129
    %p131 = scmp.eq.s32.totalorder %s18, 0
    %p132 = por %p130, %p131
    %s133 = ssub.s32 %s19, %s38
    %s134 = ssub.s32 %s20, %s34
    %s135 = sor.u32 %s133, %s134
    %s136 = ssub.s32 %s21, %s30
    %s137 = sor.u32 %s135, %s136
    %p138 = scmp.eq.s32.totalorder %s137, 0
    %s140 = sadd.s32 %s139, 1
    %s141 = scalar_select %p138, %s139, %s140
    %p144 = pneg %p138
    %p145 = scmp.eq.s32.totalorder %s12, 1
    %p146 = por %p144, %p145
    %p147 = scmp.ne.s32.totalorder %s139, %s142
    %p148 = scmp.eq.s32.totalorder %s12, 0
    %p149 = por %p147, %p148
    %p150 = scmp.ne.s32.totalorder %s139, %s142
    %p151 = scmp.eq.s32.totalorder %s17, 1
    %p152 = por %p150, %p151
    %p153 = scmp.ne.s32.totalorder %s142, %s143
    %p154 = scmp.eq.s32.totalorder %s17, 0
    %p155 = por %p153, %p154
    %p156 = scmp.ne.s32.totalorder %s142, %s143
    %p157 = scmp.eq.s32.totalorder %s18, 1
    %p158 = por %p156, %p157
    %p160 = scmp.ne.s32.totalorder %s143, %s159
    %p161 = scmp.eq.s32.totalorder %s18, 0
    %p162 = por %p160, %p161
    %s163 = ssub.s32 %s19, %s38
    %s164 = ssub.s32 %s20, %s34
    %s165 = sor.u32 %s163, %s164
    %s166 = ssub.s32 %s21, %s30
    %s167 = sor.u32 %s165, %s166
    %p168 = scmp.eq.s32.totalorder %s167, 0
    %s170 = sadd.s32 %s169, 1
    %s171 = scalar_select %p168, %s169, %s170
    %p174 = pneg %p168
    %p175 = scmp.eq.s32.totalorder %s12, 1
    %p176 = por %p174, %p175
    %p177 = scmp.ne.s32.totalorder %s169, %s172
    %p178 = scmp.eq.s32.totalorder %s12, 0
    %p179 = por %p177, %p178
    %p180 = scmp.ne.s32.totalorder %s169, %s172
    %p181 = scmp.eq.s32.totalorder %s17, 1
    %p182 = por %p180, %p181
    %p183 = scmp.ne.s32.totalorder %s172, %s173
    %p184 = scmp.eq.s32.totalorder %s17, 0
    %p185 = por %p183, %p184
    %p186 = scmp.ne.s32.totalorder %s172, %s173
    %p187 = scmp.eq.s32.totalorder %s18, 1
    %p188 = por %p186, %p187
    %p190 = scmp.ne.s32.totalorder %s173, %s189
    %p191 = scmp.eq.s32.totalorder %s18, 0
    %p192 = por %p190, %p191
    %p193 = scmp.le.s32.totalorder 1, %s12
    %p194 = scmp.lt.s32.totalorder %s12, 3
    %p195 = pnand %p193, %p194
    %p196 = pneg %p195
    // Predicated region
    $region9: #{double_conv_forward.4} parent=5 // pred_check
      _
    $region10: #{double_conv_forward.4} parent=5 // pred_check_branch
      %198 = sbr.rel (%p195) target = $region12
    $region11: #{double_conv_forward.4} parent=5 // pred_region
      %s199 = ssub.s32 %s12, 1
      // Predicated region
      $region13: #{double_conv_forward.4} parent=11 // pred_check
        %p200 = pneg %p78
      $region14: #{double_conv_forward.4} parent=11 // pred_check_branch
        %202 = sbr.rel (%p200) target = $region16
      $region15: #{double_conv_forward.4} parent=11 // pred_region
        _
      $region16: #{double_conv_forward.4} parent=11 // pred_fallthru
        _
      // Predicated region
      $region17: #{double_conv_forward.4} parent=11 // pred_check
        %p203 = pneg %p99
      $region18: #{double_conv_forward.4} parent=11 // pred_check_branch
        %205 = sbr.rel (%p203) target = $region20
      $region19: #{double_conv_forward.4} parent=11 // pred_region
        _
      $region20: #{double_conv_forward.4} parent=11 // pred_fallthru
        _
      // Predicated region
      $region21: #{double_conv_forward.4} parent=11 // pred_check
        %p206 = pneg %p125
      $region22: #{double_conv_forward.4} parent=11 // pred_check_branch
        %208 = sbr.rel (%p206) target = $region24
      $region23: #{double_conv_forward.4} parent=11 // pred_region
        %p209 = scmp.lt.s32.totalorder %s24, 0
        %s210 = scalar_select %p209, %s24, 0
        %s211 = smul.addr %s210, 8
        %s212 = scalar_lea.vmem %s3, %s211
      $region24: #{double_conv_forward.4} parent=11 // pred_fallthru
        _
    $region12: #{double_conv_forward.4} parent=5 // pred_fallthru
      _
    %p213 = scmp.lt.s32.totalorder %s12, 2
    // Predicated region
    $region25: #{double_conv_forward.4} parent=5 // pred_check
      %p214 = pneg %p213
    $region26: #{double_conv_forward.4} parent=5 // pred_check_branch
      %216 = sbr.rel (%p214) target = $region28
    $region27: #{double_conv_forward.4} parent=5 // pred_region
      // Predicated region
      $region29: #{double_conv_forward.4} parent=27 // pred_check
        %p217 = pneg %p51
      $region30: #{double_conv_forward.4} parent=27 // pred_check_branch
        %219 = sbr.rel (%p217) target = $region32
      $region31: #{double_conv_forward.4} parent=27 // pred_region
        %p220 = scmp.lt.s32.totalorder %s19, 1
        %s221 = scalar_select %p220, %s19, 1
        %s222 = smul.addr %s221, 32
        %s223 = smul.addr %s222, 8
        %s224 = scalar_lea.vmem %s0, %s223
      $region32: #{double_conv_forward.4} parent=27 // pred_fallthru
        _
    $region28: #{double_conv_forward.4} parent=5 // pred_fallthru
      _
    %p225 = scmp.le.s32.totalorder 1, %s12
    %p226 = scmp.lt.s32.totalorder %s12, 3
    %p227 = pnand %p225, %p226
    %p228 = pneg %p227
    // Predicated region
    $region33: #{double_conv_forward.4} parent=5 // pred_check
      _
    $region34: #{double_conv_forward.4} parent=5 // pred_check_branch
      %230 = sbr.rel (%p227) target = $region36
    $region35: #{double_conv_forward.4} parent=5 // pred_region
      %s231 = ssub.s32 %s12, 1
      %p232 = scmp.lt.s32.totalorder %s22, 1
      %s233 = scalar_select %p232, %s22, 1
      %s234 = smul.addr %s233, 32
      %s235 = smul.addr %s234, 8
      %s236 = scalar_lea.vmem %s0, %s235
      %p237 = pneg %p57
      %p238 = pneg %p54
      %p239 = pneg %p78
      %p240 = pneg %p75
      %p241 = pneg %p99
      %p242 = pneg %p96
      %p243 = scmp.lt.s32.totalorder %s24, 0
      %s244 = scalar_select %p243, %s24, 0
      %s245 = smul.addr %s244, 8
      %s246 = scalar_lea.vmem %s3, %s245
      %p247 = pneg %p125
      %p248 = pneg %p122
      %p249 = pneg %p155
      %p250 = pneg %p152
      %s251 = smul.u32 32, %s23
      %p252 = scmp.lt.s32.totalorder %s22, 1
      %s253 = scalar_select %p252, %s22, 1
      %p254 = scmp.lt.s32.totalorder %s251, 31
      %s255 = scalar_select %p254, %s251, 31
      %p256 = scmp.lt.s32.totalorder %s24, 0
      %s257 = scalar_select %p256, %s24, 0
      %s258 = sadd.s32 %s257, %s255
      %s259 = smul.addr %s253, 32
      %s260 = sadd.s32 %s258, %s259
      %s261 = smul.addr %s260, 8
      %s262 = scalar_lea.vmem %s4, %s261
      %p263 = pneg %p185
      %p264 = pneg %p182
      %p265 = scmp.lt.s32.totalorder %s22, 1
      %s266 = scalar_select %p265, %s22, 1
      %p267 = scmp.lt.s32.totalorder %s23, 0
      %s268 = scalar_select %p267, %s23, 0
      %p269 = scmp.lt.s32.totalorder %s24, 0
      %s270 = scalar_select %p269, %s24, 0
      %s271 = sadd.s32 %s270, %s268
      %s272 = sadd.s32 %s271, %s266
      %s273 = smul.addr %s272, 2
      %s274 = scalar_lea.vmem %s5, %s273
      %p275 = scmp.lt.s32.totalorder %s22, 1
      %s276 = scalar_select %p275, %s22, 1
      %s277 = smul.addr %s276, 32
      %s278 = smul.addr %s277, 8
      %s279 = scalar_lea.vmem %s0, %s278
      %p280 = scmp.lt.s32.totalorder %s24, 0
      %s281 = scalar_select %p280, %s24, 0
      %s282 = smul.addr %s281, 8
      %s283 = scalar_lea.vmem %s3, %s282
      %s284 = smul.u32 32, %s23
      %p285 = scmp.lt.s32.totalorder %s22, 1
      %s286 = scalar_select %p285, %s22, 1
      %p287 = scmp.lt.s32.totalorder %s284, 31
      %s288 = scalar_select %p287, %s284, 31
      %p289 = scmp.lt.s32.totalorder %s24, 0
      %s290 = scalar_select %p289, %s24, 0
      %s291 = sadd.s32 %s290, %s288
      %s292 = smul.addr %s286, 32
      %s293 = sadd.s32 %s291, %s292
      %s294 = smul.addr %s293, 8
      %s295 = scalar_lea.vmem %s4, %s294
      %s296 = smul.u32 32, %s23
      %p297 = scmp.lt.s32.totalorder %s22, 1
      %s298 = scalar_select %p297, %s22, 1
      %p299 = scmp.lt.s32.totalorder %s23, 0
      %s300 = scalar_select %p299, %s23, 0
      %p301 = scmp.lt.s32.totalorder %s24, 0
      %s302 = scalar_select %p301, %s24, 0
      %s303 = sadd.s32 %s302, %s300
      %s304 = sadd.s32 %s303, %s298
      %s305 = smul.addr %s304, 2
      %s306 = scalar_lea.vmem %s5, %s305
      %s307 = smul.u32 %s23, 16
      %s308 = smul.u32 %s307, 16
      %s309 = scalar_lea.vmem %s279, %s308
      %v310 = vld [vmem:[%s309] sm:$0xff]
      %v311 = vld [vmem:[%s309 + $0x8] sm:$0xff]
      %v312 = vld [vmem:[%s309 + $0x10] sm:$0xff]
      %v313 = vld [vmem:[%s309 + $0x18] sm:$0xff]
      %v314 = vld [vmem:[%s309 + $0x20] sm:$0xff]
      %v315 = vld [vmem:[%s309 + $0x28] sm:$0xff]
      %v316 = vld [vmem:[%s309 + $0x30] sm:$0xff]
      %v317 = vld [vmem:[%s309 + $0x38] sm:$0xff]
      %v318 = vld [vmem:[%s309 + $0x40] sm:$0xff]
      %v319 = vld [vmem:[%s309 + $0x48] sm:$0xff]
      %v320 = vld [vmem:[%s309 + $0x50] sm:$0xff]
      %v321 = vld [vmem:[%s309 + $0x58] sm:$0xff]
      %v322 = vld [vmem:[%s309 + $0x60] sm:$0xff]
      %v323 = vld [vmem:[%s309 + $0x68] sm:$0xff]
      %v324 = vld [vmem:[%s309 + $0x70] sm:$0xff]
      %v325 = vld [vmem:[%s309 + $0x78] sm:$0xff]
      %v326 = vld [vmem:[%s309 + $0x80] sm:$0xff]
      %v327 = vld [vmem:[%s309 + $0x88] sm:$0xff]
      %v328 = vld [vmem:[%s309 + $0x90] sm:$0xff]
      %v329 = vld [vmem:[%s309 + $0x98] sm:$0xff]
      %v330 = vld [vmem:[%s309 + $0xa0] sm:$0xff]
      %v331 = vld [vmem:[%s309 + $0xa8] sm:$0xff]
      %v332 = vld [vmem:[%s309 + $0xb0] sm:$0xff]
      %v333 = vld [vmem:[%s309 + $0xb8] sm:$0xff]
      %v334 = vld [vmem:[%s309 + $0xc0] sm:$0xff]
      %v335 = vld [vmem:[%s309 + $0xc8] sm:$0xff]
      %v336 = vld [vmem:[%s309 + $0xd0] sm:$0xff]
      %v337 = vld [vmem:[%s309 + $0xd8] sm:$0xff]
      %v338 = vld [vmem:[%s309 + $0xe0] sm:$0xff]
      %v339 = vld [vmem:[%s309 + $0xe8] sm:$0xff]
      %v340 = vld [vmem:[%s309 + $0xf0] sm:$0xff]
      %v341 = vld [vmem:[%s309 + $0xf8] sm:$0xff]
      %v342 = vld [vmem:[%s1] sm:$0x1]
      %v344 = vperm.slane %v342, 0
      %v346 = vmul.f32 %v310, %v344
      %v347 = vmul.f32 %v311, %v344
      %v348 = vmul.f32 %v312, %v344
      %v349 = vmul.f32 %v313, %v344
      %v350 = vmul.f32 %v314, %v344
      %v351 = vmul.f32 %v315, %v344
      %v352 = vmul.f32 %v316, %v344
      %v353 = vmul.f32 %v317, %v344
      %v354 = vmul.f32 %v318, %v344
      %v355 = vmul.f32 %v319, %v344
      %v356 = vmul.f32 %v320, %v344
      %v357 = vmul.f32 %v321, %v344
      %v358 = vmul.f32 %v322, %v344
      %v359 = vmul.f32 %v323, %v344
      %v360 = vmul.f32 %v324, %v344
      %v361 = vmul.f32 %v325, %v344
      %v362 = vmul.f32 %v326, %v344
      %v363 = vmul.f32 %v327, %v344
      %v364 = vmul.f32 %v328, %v344
      %v365 = vmul.f32 %v329, %v344
      %v366 = vmul.f32 %v330, %v344
      %v367 = vmul.f32 %v331, %v344
      %v368 = vmul.f32 %v332, %v344
      %v369 = vmul.f32 %v333, %v344
      %v370 = vmul.f32 %v334, %v344
      %v371 = vmul.f32 %v335, %v344
      %v372 = vmul.f32 %v336, %v344
      %v373 = vmul.f32 %v337, %v344
      %v374 = vmul.f32 %v338, %v344
      %v375 = vmul.f32 %v339, %v344
      %v376 = vmul.f32 %v340, %v344
      %v377 = vmul.f32 %v341, %v344
      %v378 = vld [vmem:[%s2] sm:$0x1]
      %v380 = vperm.slane %v378, 0
      %v382 = vadd.f32 %v346, %v380
      %v383 = vadd.f32 %v347, %v380
      %v384 = vadd.f32 %v348, %v380
      %v385 = vadd.f32 %v349, %v380
      %v386 = vadd.f32 %v350, %v380
      %v387 = vadd.f32 %v351, %v380
      %v388 = vadd.f32 %v352, %v380
      %v389 = vadd.f32 %v353, %v380
      %v390 = vadd.f32 %v354, %v380
      %v391 = vadd.f32 %v355, %v380
      %v392 = vadd.f32 %v356, %v380
      %v393 = vadd.f32 %v357, %v380
      %v394 = vadd.f32 %v358, %v380
      %v395 = vadd.f32 %v359, %v380
      %v396 = vadd.f32 %v360, %v380
      %v397 = vadd.f32 %v361, %v380
      %v398 = vadd.f32 %v362, %v380
      %v399 = vadd.f32 %v363, %v380
      %v400 = vadd.f32 %v364, %v380
      %v401 = vadd.f32 %v365, %v380
      %v402 = vadd.f32 %v366, %v380
      %v403 = vadd.f32 %v367, %v380
      %v404 = vadd.f32 %v368, %v380
      %v405 = vadd.f32 %v369, %v380
      %v406 = vadd.f32 %v370, %v380
      %v407 = vadd.f32 %v371, %v380
      %v408 = vadd.f32 %v372, %v380
      %v409 = vadd.f32 %v373, %v380
      %v410 = vadd.f32 %v374, %v380
      %v411 = vadd.f32 %v375, %v380
      %v412 = vadd.f32 %v376, %v380
      %v413 = vadd.f32 %v377, %v380
      %v414 = vmax.f32 %v382, 0.0
      %v415 = vmax.f32 %v383, 0.0
      %v416 = vmax.f32 %v384, 0.0
      %v417 = vmax.f32 %v385, 0.0
      %v418 = vmax.f32 %v386, 0.0
      %v419 = vmax.f32 %v387, 0.0
      %v420 = vmax.f32 %v388, 0.0
      %v421 = vmax.f32 %v389, 0.0
      %v422 = vmax.f32 %v390, 0.0
      %v423 = vmax.f32 %v391, 0.0
      %v424 = vmax.f32 %v392, 0.0
      %v425 = vmax.f32 %v393, 0.0
      %v426 = vmax.f32 %v394, 0.0
      %v427 = vmax.f32 %v395, 0.0
      %v428 = vmax.f32 %v396, 0.0
      %v429 = vmax.f32 %v397, 0.0
      %v430 = vmax.f32 %v398, 0.0
      %v431 = vmax.f32 %v399, 0.0
      %v432 = vmax.f32 %v400, 0.0
      %v433 = vmax.f32 %v401, 0.0
      %v434 = vmax.f32 %v402, 0.0
      %v435 = vmax.f32 %v403, 0.0
      %v436 = vmax.f32 %v404, 0.0
      %v437 = vmax.f32 %v405, 0.0
      %v438 = vmax.f32 %v406, 0.0
      %v439 = vmax.f32 %v407, 0.0
      %v440 = vmax.f32 %v408, 0.0
      %v441 = vmax.f32 %v409, 0.0
      %v442 = vmax.f32 %v410, 0.0
      %v443 = vmax.f32 %v411, 0.0
      %v444 = vmax.f32 %v412, 0.0
      %v445 = vmax.f32 %v413, 0.0
      %s446 = ssub.s32 %s307, 1
      %p447 = scmp.gt.s32.totalorder %s446, 0
      %s448 = scalar_select %p447, %s446, 0
      %s449 = smul.u32 %s448, 16
      %s450 = scalar_lea.vmem %s279, %s449
      %v451 = vld [vmem:[%s450] sm:$0xff]
      %v452 = vld [vmem:[%s450 + $0x8] sm:$0xff]
      %v453 = vmul.f32 %v451, %v344
      %v454 = vmul.f32 %v452, %v344
      %v455 = vadd.f32 %v453, %v380
      %v456 = vadd.f32 %v454, %v380
      %v457 = vmax.f32 %v455, 0.0
      %v458 = vmax.f32 %v456, 0.0
      %p459 = scmp.eq.s32.totalorder %s23, 0
      %s460 = scalar_select %p459, 1, 0
      %v461 = vstv %s460
      %vm462 = vcmp.eq.s32.totalorder %v461, 1
      %v463 = vsel %vm462, 0.0, %v457
      %v464 = vsel %vm462, 0.0, %v458
      %s465 = sadd.s32 %s307, 16
      %p466 = scmp.lt.s32.totalorder %s465, 15
      %s467 = scalar_select %p466, %s465, 15
      %s468 = smul.u32 %s467, 16
      %s469 = scalar_lea.vmem %s279, %s468
      %v470 = vld [vmem:[%s469] sm:$0xff]
      %v471 = vld [vmem:[%s469 + $0x8] sm:$0xff]
      %v472 = vmul.f32 %v470, %v344
      %v473 = vmul.f32 %v471, %v344
      %v474 = vadd.f32 %v472, %v380
      %v475 = vadd.f32 %v473, %v380
      %v476 = vmax.f32 %v474, 0.0
      %v477 = vmax.f32 %v475, 0.0
      %v478 = vsel %vm462, 0.0, %v476
      %v479 = vsel %vm462, 0.0, %v477
      %vm516 = vcmask 1040384
      %v517 = vrot.slane %v463, 7
      %v518 = vrot.slane %v464, 7
      %v519 = vsel %vm516, %v517, %v518
      %v520 = vrot.slane %v414, 7
      %v521 = vrot.slane %v415, 7
      %v522 = vsel %vm516, %v520, %v521
      %v523 = vrot.slane %v416, 7
      %v524 = vrot.slane %v417, 7
      %v525 = vsel %vm516, %v523, %v524
      %v526 = vrot.slane %v418, 7
      %v527 = vrot.slane %v419, 7
      %v528 = vsel %vm516, %v526, %v527
      %v529 = vrot.slane %v420, 7
      %v530 = vrot.slane %v421, 7
      %v531 = vsel %vm516, %v529, %v530
      %v532 = vrot.slane %v422, 7
      %v533 = vrot.slane %v423, 7
      %v534 = vsel %vm516, %v532, %v533
      %v535 = vrot.slane %v424, 7
      %v536 = vrot.slane %v425, 7
      %v537 = vsel %vm516, %v535, %v536
      %v538 = vrot.slane %v426, 7
      %v539 = vrot.slane %v427, 7
      %v540 = vsel %vm516, %v538, %v539
      %v541 = vrot.slane %v428, 7
      %v542 = vrot.slane %v429, 7
      %v543 = vsel %vm516, %v541, %v542
      %v544 = vrot.slane %v430, 7
      %v545 = vrot.slane %v431, 7
      %v546 = vsel %vm516, %v544, %v545
      %v547 = vrot.slane %v432, 7
      %v548 = vrot.slane %v433, 7
      %v549 = vsel %vm516, %v547, %v548
      %v550 = vrot.slane %v434, 7
      %v551 = vrot.slane %v435, 7
      %v552 = vsel %vm516, %v550, %v551
      %v553 = vrot.slane %v436, 7
      %v554 = vrot.slane %v437, 7
      %v555 = vsel %vm516, %v553, %v554
      %v556 = vrot.slane %v438, 7
      %v557 = vrot.slane %v439, 7
      %v558 = vsel %vm516, %v556, %v557
      %v559 = vrot.slane %v440, 7
      %v560 = vrot.slane %v441, 7
      %v561 = vsel %vm516, %v559, %v560
      %v562 = vrot.slane %v442, 7
      %v563 = vrot.slane %v443, 7
      %v564 = vsel %vm516, %v562, %v563
      %v565 = vrot.slane %v444, 7
      %v566 = vrot.slane %v445, 7
      %v567 = vsel %vm516, %v565, %v566
      %v568 = vrot.slane %v478, 7
      %v569 = vrot.slane %v479, 7
      %v570 = vsel %vm516, %v568, %v569
      %v625 = vsel %vm516, 0.0, %v517
      %v626 = vsel %vm516, 0.0, %v520
      %v627 = vsel %vm516, 0.0, %v523
      %v628 = vsel %vm516, 0.0, %v526
      %v629 = vsel %vm516, 0.0, %v529
      %v630 = vsel %vm516, 0.0, %v532
      %v631 = vsel %vm516, 0.0, %v535
      %v632 = vsel %vm516, 0.0, %v538
      %v633 = vsel %vm516, 0.0, %v541
      %v634 = vsel %vm516, 0.0, %v544
      %v635 = vsel %vm516, 0.0, %v547
      %v636 = vsel %vm516, 0.0, %v550
      %v637 = vsel %vm516, 0.0, %v553
      %v638 = vsel %vm516, 0.0, %v556
      %v639 = vsel %vm516, 0.0, %v559
      %v640 = vsel %vm516, 0.0, %v562
      %v641 = vsel %vm516, 0.0, %v565
      %v642 = vsel %vm516, 0.0, %v568
      %v643 = vsel %vm516, %v518, 0.0
      %v644 = vsel %vm516, %v521, 0.0
      %v645 = vsel %vm516, %v524, 0.0
      %v646 = vsel %vm516, %v527, 0.0
      %v647 = vsel %vm516, %v530, 0.0
      %v648 = vsel %vm516, %v533, 0.0
      %v649 = vsel %vm516, %v536, 0.0
      %v650 = vsel %vm516, %v539, 0.0
      %v651 = vsel %vm516, %v542, 0.0
      %v652 = vsel %vm516, %v545, 0.0
      %v653 = vsel %vm516, %v548, 0.0
      %v654 = vsel %vm516, %v551, 0.0
      %v655 = vsel %vm516, %v554, 0.0
      %v656 = vsel %vm516, %v557, 0.0
      %v657 = vsel %vm516, %v560, 0.0
      %v658 = vsel %vm516, %v563, 0.0
      %v659 = vsel %vm516, %v566, 0.0
      %v660 = vsel %vm516, %v569, 0.0
      %vm693 = vcmask 1046528
      %v694 = vrot.slane %v625, 1
      %v695 = vrot.slane %v519, 1
      %v696 = vsel %vm693, %v694, %v695
      %v697 = vrot.slane %v643, 1
      %v698 = vsel %vm693, %v695, %v697
      %v699 = vrot.slane %v626, 1
      %v700 = vrot.slane %v522, 1
      %v701 = vsel %vm693, %v699, %v700
      %v702 = vrot.slane %v644, 1
      %v703 = vsel %vm693, %v700, %v702
      %v704 = vrot.slane %v627, 1
      %v705 = vrot.slane %v525, 1
      %v706 = vsel %vm693, %v704, %v705
      %v707 = vrot.slane %v645, 1
      %v708 = vsel %vm693, %v705, %v707
      %v709 = vrot.slane %v628, 1
      %v710 = vrot.slane %v528, 1
      %v711 = vsel %vm693, %v709, %v710
      %v712 = vrot.slane %v646, 1
      %v713 = vsel %vm693, %v710, %v712
      %v714 = vrot.slane %v629, 1
      %v715 = vrot.slane %v531, 1
      %v716 = vsel %vm693, %v714, %v715
      %v717 = vrot.slane %v647, 1
      %v718 = vsel %vm693, %v715, %v717
      %v719 = vrot.slane %v630, 1
      %v720 = vrot.slane %v534, 1
      %v721 = vsel %vm693, %v719, %v720
      %v722 = vrot.slane %v648, 1
      %v723 = vsel %vm693, %v720, %v722
      %v724 = vrot.slane %v631, 1
      %v725 = vrot.slane %v537, 1
      %v726 = vsel %vm693, %v724, %v725
      %v727 = vrot.slane %v649, 1
      %v728 = vsel %vm693, %v725, %v727
      %v729 = vrot.slane %v632, 1
      %v730 = vrot.slane %v540, 1
      %v731 = vsel %vm693, %v729, %v730
      %v732 = vrot.slane %v650, 1
      %v733 = vsel %vm693, %v730, %v732
      %v734 = vrot.slane %v633, 1
      %v735 = vrot.slane %v543, 1
      %v736 = vsel %vm693, %v734, %v735
      %v737 = vrot.slane %v651, 1
      %v738 = vsel %vm693, %v735, %v737
      %v739 = vrot.slane %v634, 1
      %v740 = vrot.slane %v546, 1
      %v741 = vsel %vm693, %v739, %v740
      %v742 = vrot.slane %v652, 1
      %v743 = vsel %vm693, %v740, %v742
      %v744 = vrot.slane %v635, 1
      %v745 = vrot.slane %v549, 1
      %v746 = vsel %vm693, %v744, %v745
      %v747 = vrot.slane %v653, 1
      %v748 = vsel %vm693, %v745, %v747
      %v749 = vrot.slane %v636, 1
      %v750 = vrot.slane %v552, 1
      %v751 = vsel %vm693, %v749, %v750
      %v752 = vrot.slane %v654, 1
      %v753 = vsel %vm693, %v750, %v752
      %v754 = vrot.slane %v637, 1
      %v755 = vrot.slane %v555, 1
      %v756 = vsel %vm693, %v754, %v755
      %v757 = vrot.slane %v655, 1
      %v758 = vsel %vm693, %v755, %v757
      %v759 = vrot.slane %v638, 1
      %v760 = vrot.slane %v558, 1
      %v761 = vsel %vm693, %v759, %v760
      %v762 = vrot.slane %v656, 1
      %v763 = vsel %vm693, %v760, %v762
      %v764 = vrot.slane %v639, 1
      %v765 = vrot.slane %v561, 1
      %v766 = vsel %vm693, %v764, %v765
      %v767 = vrot.slane %v657, 1
      %v768 = vsel %vm693, %v765, %v767
      %v769 = vrot.slane %v640, 1
      %v770 = vrot.slane %v564, 1
      %v771 = vsel %vm693, %v769, %v770
      %v772 = vrot.slane %v658, 1
      %v773 = vsel %vm693, %v770, %v772
      %774 = vrot.lane.b32.xlu0 %v696, 8
      %v775 = vpop.permute.xlu0 %774
      %776 = vrot.lane.b32.xlu0 %v698, 8
      %v777 = vpop.permute.xlu0 %776
      %778 = vrot.lane.b32.xlu0 %v701, 8
      %v779 = vpop.permute.xlu0 %778
      %780 = vrot.lane.b32.xlu0 %v703, 8
      %v781 = vpop.permute.xlu0 %780
      %782 = vrot.lane.b32.xlu0 %v706, 8
      %v783 = vpop.permute.xlu0 %782
      %784 = vrot.lane.b32.xlu0 %v708, 8
      %v785 = vpop.permute.xlu0 %784
      %786 = vrot.lane.b32.xlu0 %v711, 8
      %v787 = vpop.permute.xlu0 %786
      %788 = vrot.lane.b32.xlu0 %v713, 8
      %v789 = vpop.permute.xlu0 %788
      %790 = vrot.lane.b32.xlu0 %v716, 8
      %v791 = vpop.permute.xlu0 %790
      %792 = vrot.lane.b32.xlu0 %v718, 8
      %v793 = vpop.permute.xlu0 %792
      %794 = vrot.lane.b32.xlu0 %v721, 8
      %v795 = vpop.permute.xlu0 %794
      %796 = vrot.lane.b32.xlu0 %v723, 8
      %v797 = vpop.permute.xlu0 %796
      %798 = vrot.lane.b32.xlu0 %v726, 8
      %v799 = vpop.permute.xlu0 %798
      %800 = vrot.lane.b32.xlu0 %v728, 8
      %v801 = vpop.permute.xlu0 %800
      %802 = vrot.lane.b32.xlu0 %v731, 8
      %v803 = vpop.permute.xlu0 %802
      %804 = vrot.lane.b32.xlu0 %v733, 8
      %v805 = vpop.permute.xlu0 %804
      %806 = vrot.lane.b32.xlu0 %v736, 8
      %v807 = vpop.permute.xlu0 %806
      %808 = vrot.lane.b32.xlu0 %v738, 8
      %v809 = vpop.permute.xlu0 %808
      %810 = vrot.lane.b32.xlu0 %v741, 8
      %v811 = vpop.permute.xlu0 %810
      %812 = vrot.lane.b32.xlu0 %v743, 8
      %v813 = vpop.permute.xlu0 %812
      %814 = vrot.lane.b32.xlu0 %v746, 8
      %v815 = vpop.permute.xlu0 %814
      %816 = vrot.lane.b32.xlu0 %v748, 8
      %v817 = vpop.permute.xlu0 %816
      %818 = vrot.lane.b32.xlu0 %v751, 8
      %v819 = vpop.permute.xlu0 %818
      %820 = vrot.lane.b32.xlu0 %v753, 8
      %v821 = vpop.permute.xlu0 %820
      %822 = vrot.lane.b32.xlu0 %v756, 8
      %v823 = vpop.permute.xlu0 %822
      %824 = vrot.lane.b32.xlu0 %v758, 8
      %v825 = vpop.permute.xlu0 %824
      %826 = vrot.lane.b32.xlu0 %v761, 8
      %v827 = vpop.permute.xlu0 %826
      %828 = vrot.lane.b32.xlu0 %v763, 8
      %v829 = vpop.permute.xlu0 %828
      %830 = vrot.lane.b32.xlu0 %v766, 8
      %v831 = vpop.permute.xlu0 %830
      %832 = vrot.lane.b32.xlu0 %v768, 8
      %v833 = vpop.permute.xlu0 %832
      %834 = vrot.lane.b32.xlu0 %v771, 8
      %v835 = vpop.permute.xlu0 %834
      %836 = vrot.lane.b32.xlu0 %v773, 8
      %v837 = vpop.permute.xlu0 %836
      %vm870 = vcmask 1045504
      %v871 = vrot.slane %v625, 2
      %v872 = vrot.slane %v519, 2
      %v873 = vsel %vm870, %v871, %v872
      %v874 = vrot.slane %v643, 2
      %v875 = vsel %vm870, %v872, %v874
      %v876 = vrot.slane %v626, 2
      %v877 = vrot.slane %v522, 2
      %v878 = vsel %vm870, %v876, %v877
      %v879 = vrot.slane %v644, 2
      %v880 = vsel %vm870, %v877, %v879
      %v881 = vrot.slane %v627, 2
      %v882 = vrot.slane %v525, 2
      %v883 = vsel %vm870, %v881, %v882
      %v884 = vrot.slane %v645, 2
      %v885 = vsel %vm870, %v882, %v884
      %v886 = vrot.slane %v628, 2
      %v887 = vrot.slane %v528, 2
      %v888 = vsel %vm870, %v886, %v887
      %v889 = vrot.slane %v646, 2
      %v890 = vsel %vm870, %v887, %v889
      %v891 = vrot.slane %v629, 2
      %v892 = vrot.slane %v531, 2
      %v893 = vsel %vm870, %v891, %v892
      %v894 = vrot.slane %v647, 2
      %v895 = vsel %vm870, %v892, %v894
      %v896 = vrot.slane %v630, 2
      %v897 = vrot.slane %v534, 2
      %v898 = vsel %vm870, %v896, %v897
      %v899 = vrot.slane %v648, 2
      %v900 = vsel %vm870, %v897, %v899
      %v901 = vrot.slane %v631, 2
      %v902 = vrot.slane %v537, 2
      %v903 = vsel %vm870, %v901, %v902
      %v904 = vrot.slane %v649, 2
      %v905 = vsel %vm870, %v902, %v904
      %v906 = vrot.slane %v632, 2
      %v907 = vrot.slane %v540, 2
      %v908 = vsel %vm870, %v906, %v907
      %v909 = vrot.slane %v650, 2
      %v910 = vsel %vm870, %v907, %v909
      %v911 = vrot.slane %v633, 2
      %v912 = vrot.slane %v543, 2
      %v913 = vsel %vm870, %v911, %v912
      %v914 = vrot.slane %v651, 2
      %v915 = vsel %vm870, %v912, %v914
      %v916 = vrot.slane %v634, 2
      %v917 = vrot.slane %v546, 2
      %v918 = vsel %vm870, %v916, %v917
      %v919 = vrot.slane %v652, 2
      %v920 = vsel %vm870, %v917, %v919
      %v921 = vrot.slane %v635, 2
      %v922 = vrot.slane %v549, 2
      %v923 = vsel %vm870, %v921, %v922
      %v924 = vrot.slane %v653, 2
      %v925 = vsel %vm870, %v922, %v924
      %v926 = vrot.slane %v636, 2
      %v927 = vrot.slane %v552, 2
      %v928 = vsel %vm870, %v926, %v927
      %v929 = vrot.slane %v654, 2
      %v930 = vsel %vm870, %v927, %v929
      %v931 = vrot.slane %v637, 2
      %v932 = vrot.slane %v555, 2
      %v933 = vsel %vm870, %v931, %v932
      %v934 = vrot.slane %v655, 2
      %v935 = vsel %vm870, %v932, %v934
      %v936 = vrot.slane %v638, 2
      %v937 = vrot.slane %v558, 2
      %v938 = vsel %vm870, %v936, %v937
      %v939 = vrot.slane %v656, 2
      %v940 = vsel %vm870, %v937, %v939
      %v941 = vrot.slane %v639, 2
      %v942 = vrot.slane %v561, 2
      %v943 = vsel %vm870, %v941, %v942
      %v944 = vrot.slane %v657, 2
      %v945 = vsel %vm870, %v942, %v944
      %v946 = vrot.slane %v640, 2
      %v947 = vrot.slane %v564, 2
      %v948 = vsel %vm870, %v946, %v947
      %v949 = vrot.slane %v658, 2
      %v950 = vsel %vm870, %v947, %v949
      %951 = vrot.lane.b32.xlu0 %v873, 16
      %v952 = vpop.permute.xlu0 %951
      %953 = vrot.lane.b32.xlu0 %v875, 16
      %v954 = vpop.permute.xlu0 %953
      %955 = vrot.lane.b32.xlu0 %v878, 16
      %v956 = vpop.permute.xlu0 %955
      %957 = vrot.lane.b32.xlu0 %v880, 16
      %v958 = vpop.permute.xlu0 %957
      %959 = vrot.lane.b32.xlu0 %v883, 16
      %v960 = vpop.permute.xlu0 %959
      %961 = vrot.lane.b32.xlu0 %v885, 16
      %v962 = vpop.permute.xlu0 %961
      %963 = vrot.lane.b32.xlu0 %v888, 16
      %v964 = vpop.permute.xlu0 %963
      %965 = vrot.lane.b32.xlu0 %v890, 16
      %v966 = vpop.permute.xlu0 %965
      %967 = vrot.lane.b32.xlu0 %v893, 16
      %v968 = vpop.permute.xlu0 %967
      %969 = vrot.lane.b32.xlu0 %v895, 16
      %v970 = vpop.permute.xlu0 %969
      %971 = vrot.lane.b32.xlu0 %v898, 16
      %v972 = vpop.permute.xlu0 %971
      %973 = vrot.lane.b32.xlu0 %v900, 16
      %v974 = vpop.permute.xlu0 %973
      %975 = vrot.lane.b32.xlu0 %v903, 16
      %v976 = vpop.permute.xlu0 %975
      %977 = vrot.lane.b32.xlu0 %v905, 16
      %v978 = vpop.permute.xlu0 %977
      %979 = vrot.lane.b32.xlu0 %v908, 16
      %v980 = vpop.permute.xlu0 %979
      %981 = vrot.lane.b32.xlu0 %v910, 16
      %v982 = vpop.permute.xlu0 %981
      %983 = vrot.lane.b32.xlu0 %v913, 16
      %v984 = vpop.permute.xlu0 %983
      %985 = vrot.lane.b32.xlu0 %v915, 16
      %v986 = vpop.permute.xlu0 %985
      %987 = vrot.lane.b32.xlu0 %v918, 16
      %v988 = vpop.permute.xlu0 %987
      %989 = vrot.lane.b32.xlu0 %v920, 16
      %v990 = vpop.permute.xlu0 %989
      %991 = vrot.lane.b32.xlu0 %v923, 16
      %v992 = vpop.permute.xlu0 %991
      %993 = vrot.lane.b32.xlu0 %v925, 16
      %v994 = vpop.permute.xlu0 %993
      %995 = vrot.lane.b32.xlu0 %v928, 16
      %v996 = vpop.permute.xlu0 %995
      %997 = vrot.lane.b32.xlu0 %v930, 16
      %v998 = vpop.permute.xlu0 %997
      %999 = vrot.lane.b32.xlu0 %v933, 16
      %v1000 = vpop.permute.xlu0 %999
      %1001 = vrot.lane.b32.xlu0 %v935, 16
      %v1002 = vpop.permute.xlu0 %1001
      %1003 = vrot.lane.b32.xlu0 %v938, 16
      %v1004 = vpop.permute.xlu0 %1003
      %1005 = vrot.lane.b32.xlu0 %v940, 16
      %v1006 = vpop.permute.xlu0 %1005
      %1007 = vrot.lane.b32.xlu0 %v943, 16
      %v1008 = vpop.permute.xlu0 %1007
      %1009 = vrot.lane.b32.xlu0 %v945, 16
      %v1010 = vpop.permute.xlu0 %1009
      %1011 = vrot.lane.b32.xlu0 %v948, 16
      %v1012 = vpop.permute.xlu0 %1011
      %1013 = vrot.lane.b32.xlu0 %v950, 16
      %v1014 = vpop.permute.xlu0 %1013
      %vm1047 = vcmask 64512
      %v1048 = vsel %vm1047, %v625, %v775
      %v1049 = vsel %vm1047, %v519, %v777
      %v1050 = vsel %vm1047, %v626, %v779
      %v1051 = vsel %vm1047, %v522, %v781
      %v1052 = vsel %vm1047, %v627, %v783
      %v1053 = vsel %vm1047, %v525, %v785
      %v1054 = vsel %vm1047, %v628, %v787
      %v1055 = vsel %vm1047, %v528, %v789
      %v1056 = vsel %vm1047, %v629, %v791
      %v1057 = vsel %vm1047, %v531, %v793
      %v1058 = vsel %vm1047, %v630, %v795
      %v1059 = vsel %vm1047, %v534, %v797
      %v1060 = vsel %vm1047, %v631, %v799
      %v1061 = vsel %vm1047, %v537, %v801
      %v1062 = vsel %vm1047, %v632, %v803
      %v1063 = vsel %vm1047, %v540, %v805
      %v1064 = vsel %vm1047, %v633, %v807
      %v1065 = vsel %vm1047, %v543, %v809
      %v1066 = vsel %vm1047, %v634, %v811
      %v1067 = vsel %vm1047, %v546, %v813
      %v1068 = vsel %vm1047, %v635, %v815
      %v1069 = vsel %vm1047, %v549, %v817
      %v1070 = vsel %vm1047, %v636, %v819
      %v1071 = vsel %vm1047, %v552, %v821
      %v1072 = vsel %vm1047, %v637, %v823
      %v1073 = vsel %vm1047, %v555, %v825
      %v1074 = vsel %vm1047, %v638, %v827
      %v1075 = vsel %vm1047, %v558, %v829
      %v1076 = vsel %vm1047, %v639, %v831
      %v1077 = vsel %vm1047, %v561, %v833
      %v1078 = vsel %vm1047, %v640, %v835
      %v1079 = vsel %vm1047, %v564, %v837
      %vm1080 = vcmask 130048
      %v1081 = vsel %vm1080, %v1048, %v952
      %v1082 = vsel %vm1080, %v1049, %v954
      %v1083 = vsel %vm1080, %v1050, %v956
      %v1084 = vsel %vm1080, %v1051, %v958
      %v1085 = vsel %vm1080, %v1052, %v960
      %v1086 = vsel %vm1080, %v1053, %v962
      %v1087 = vsel %vm1080, %v1054, %v964
      %v1088 = vsel %vm1080, %v1055, %v966
      %v1089 = vsel %vm1080, %v1056, %v968
      %v1090 = vsel %vm1080, %v1057, %v970
      %v1091 = vsel %vm1080, %v1058, %v972
      %v1092 = vsel %vm1080, %v1059, %v974
      %v1093 = vsel %vm1080, %v1060, %v976
      %v1094 = vsel %vm1080, %v1061, %v978
      %v1095 = vsel %vm1080, %v1062, %v980
      %v1096 = vsel %vm1080, %v1063, %v982
      %v1097 = vsel %vm1080, %v1064, %v984
      %v1098 = vsel %vm1080, %v1065, %v986
      %v1099 = vsel %vm1080, %v1066, %v988
      %v1100 = vsel %vm1080, %v1067, %v990
      %v1101 = vsel %vm1080, %v1068, %v992
      %v1102 = vsel %vm1080, %v1069, %v994
      %v1103 = vsel %vm1080, %v1070, %v996
      %v1104 = vsel %vm1080, %v1071, %v998
      %v1105 = vsel %vm1080, %v1072, %v1000
      %v1106 = vsel %vm1080, %v1073, %v1002
      %v1107 = vsel %vm1080, %v1074, %v1004
      %v1108 = vsel %vm1080, %v1075, %v1006
      %v1109 = vsel %vm1080, %v1076, %v1008
      %v1110 = vsel %vm1080, %v1077, %v1010
      %v1111 = vsel %vm1080, %v1078, %v1012
      %v1112 = vsel %vm1080, %v1079, %v1014
      %v1113 = vld [vmem:[%s283] sm:$0xff]
      %v1114 = vld [vmem:[%s283 + $0x8] sm:$0xff]
      %v1115 = vld [vmem:[%s283 + $0x10] sm:$0xff]
      %v1118 = vrot.slane %v641, 1
      %v1119 = vrot.slane %v567, 1
      %v1120 = vsel %vm693, %v1118, %v1119
      %v1121 = vrot.slane %v659, 1
      %v1122 = vsel %vm693, %v1119, %v1121
      %1123 = vrot.lane.b32.xlu0 %v1120, 8
      %v1124 = vpop.permute.xlu0 %1123
      %1125 = vrot.lane.b32.xlu0 %v1122, 8
      %v1126 = vpop.permute.xlu0 %1125
      %v1129 = vrot.slane %v641, 2
      %v1130 = vrot.slane %v567, 2
      %v1131 = vsel %vm870, %v1129, %v1130
      %v1132 = vrot.slane %v659, 2
      %v1133 = vsel %vm870, %v1130, %v1132
      %1134 = vrot.lane.b32.xlu0 %v1131, 16
      %v1135 = vpop.permute.xlu0 %1134
      %1136 = vrot.lane.b32.xlu0 %v1133, 16
      %v1137 = vpop.permute.xlu0 %1136
      %v1140 = vsel %vm1047, %v641, %v1124
      %v1141 = vsel %vm1047, %v567, %v1126
      %v1142 = vsel %vm1080, %v1140, %v1135
      %v1143 = vsel %vm1080, %v1141, %v1137
      %s1144 = scalar_lea.vmem %s283, 24
      %v1145 = vld [vmem:[%s1144] sm:$0xff]
      %v1146 = vld [vmem:[%s1144 + $0x8] sm:$0xff]
      %v1147 = vld [vmem:[%s1144 + $0x10] sm:$0xff]
      %vm1148 = vcmask 195584
      %v1150 = vsel %vm1148, %v1083, 0
      %v1153 = vsel %vm1148, %v1084, 0
      %v1156 = vsel %vm1148, %v1085, 0
      %v1159 = vsel %vm1148, %v1086, 0
      %v1162 = vsel %vm1148, %v1087, 0
      %v1165 = vsel %vm1148, %v1088, 0
      %v1168 = vsel %vm1148, %v1089, 0
      %v1171 = vsel %vm1148, %v1090, 0
      %v1174 = vsel %vm1148, %v1091, 0
      %v1177 = vsel %vm1148, %v1092, 0
      %v1180 = vsel %vm1148, %v1093, 0
      %v1183 = vsel %vm1148, %v1094, 0
      %v1186 = vsel %vm1148, %v1095, 0
      %v1189 = vsel %vm1148, %v1096, 0
      %v1192 = vsel %vm1148, %v1097, 0
      %v1195 = vsel %vm1148, %v1098, 0
      %v1198 = vsel %vm1148, %v1099, 0
      %v1201 = vsel %vm1148, %v1100, 0
      %v1204 = vsel %vm1148, %v1101, 0
      %v1207 = vsel %vm1148, %v1102, 0
      %v1210 = vsel %vm1148, %v1103, 0
      %v1213 = vsel %vm1148, %v1104, 0
      %v1216 = vsel %vm1148, %v1105, 0
      %v1219 = vsel %vm1148, %v1106, 0
      %v1222 = vsel %vm1148, %v1107, 0
      %v1225 = vsel %vm1148, %v1108, 0
      %v1228 = vsel %vm1148, %v1109, 0
      %v1231 = vsel %vm1148, %v1110, 0
      %v1234 = vsel %vm1148, %v1111, 0
      %v1237 = vsel %vm1148, %v1112, 0
      %v1240 = vsel %vm1148, %v1142, 0
      %v1243 = vsel %vm1148, %v1143, 0
      %1245 = vmatpush.msra.mxu0 0.0
      %1246 = vmatpush.msra.mxu0 0.0
      %1247 = vmatpush.msra.mxu0 0.0
      %1248 = vmatpush.msra.mxu0 0.0
      %1249 = vmatpush.msra.mxu0 0.0
      %1250 = vmatpush.msra.mxu0 0.0
      %1251 = vmatpush.msra.mxu0 0.0
      %1252 = vmatpush.msra.mxu0 0.0
      %1253 = vmatpush.msra.mxu0 0.0
      %1254 = vmatpush.msra.mxu0 0.0
      %1255 = vmatpush.msra.mxu0 0.0
      %1256 = vmatpush.msra.mxu0 0.0
      %1257 = vmatpush.msra.mxu0 0.0
      %1258 = vmatpush.msra.mxu0 %v1147
      %1259 = vmatpush.msra.mxu0 %v1146
      %1260 = vmatpush.msra.mxu0 %v1145
      %1261 = vmatmul.f32.gmra.mxu0 %v1150
      %v1262 = vpop.f32.mrf.mxu0
      %v1263 = vadd.f32 0.0, %v1262
      %1264 = vmatmul.f32.gmra.mxu0 %v1153
      %v1265 = vpop.f32.mrf.mxu0
      %v1266 = vadd.f32 0.0, %v1265
      %1267 = vmatmul.f32.gmra.mxu0 %v1156
      %v1268 = vpop.f32.mrf.mxu0
      %v1269 = vadd.f32 0.0, %v1268
      %1270 = vmatmul.f32.gmra.mxu0 %v1159
      %v1271 = vpop.f32.mrf.mxu0
      %v1272 = vadd.f32 0.0, %v1271
      %1273 = vmatmul.f32.gmra.mxu0 %v1162
      %v1274 = vpop.f32.mrf.mxu0
      %v1275 = vadd.f32 0.0, %v1274
      %1276 = vmatmul.f32.gmra.mxu0 %v1165
      %v1277 = vpop.f32.mrf.mxu0
      %v1278 = vadd.f32 0.0, %v1277
      %1279 = vmatmul.f32.gmra.mxu0 %v1168
      %v1280 = vpop.f32.mrf.mxu0
      %v1281 = vadd.f32 0.0, %v1280
      %1282 = vmatmul.f32.gmra.mxu0 %v1171
      %v1283 = vpop.f32.mrf.mxu0
      %v1284 = vadd.f32 0.0, %v1283
      %1285 = vmatmul.f32.gmra.mxu0 %v1174
      %v1286 = vpop.f32.mrf.mxu0
      %v1287 = vadd.f32 0.0, %v1286
      %1288 = vmatmul.f32.gmra.mxu0 %v1177
      %v1289 = vpop.f32.mrf.mxu0
      %v1290 = vadd.f32 0.0, %v1289
      %1291 = vmatmul.f32.gmra.mxu0 %v1180
      %v1292 = vpop.f32.mrf.mxu0
      %v1293 = vadd.f32 0.0, %v1292
      %1294 = vmatmul.f32.gmra.mxu0 %v1183
      %v1295 = vpop.f32.mrf.mxu0
      %v1296 = vadd.f32 0.0, %v1295
      %1297 = vmatmul.f32.gmra.mxu0 %v1186
      %v1298 = vpop.f32.mrf.mxu0
      %v1299 = vadd.f32 0.0, %v1298
      %1300 = vmatmul.f32.gmra.mxu0 %v1189
      %v1301 = vpop.f32.mrf.mxu0
      %v1302 = vadd.f32 0.0, %v1301
      %1303 = vmatmul.f32.gmra.mxu0 %v1192
      %v1304 = vpop.f32.mrf.mxu0
      %v1305 = vadd.f32 0.0, %v1304
      %1306 = vmatmul.f32.gmra.mxu0 %v1195
      %v1307 = vpop.f32.mrf.mxu0
      %v1308 = vadd.f32 0.0, %v1307
      %1309 = vmatmul.f32.gmra.mxu0 %v1198
      %v1310 = vpop.f32.mrf.mxu0
      %v1311 = vadd.f32 0.0, %v1310
      %1312 = vmatmul.f32.gmra.mxu0 %v1201
      %v1313 = vpop.f32.mrf.mxu0
      %v1314 = vadd.f32 0.0, %v1313
      %1315 = vmatmul.f32.gmra.mxu0 %v1204
      %v1316 = vpop.f32.mrf.mxu0
      %v1317 = vadd.f32 0.0, %v1316
      %1318 = vmatmul.f32.gmra.mxu0 %v1207
      %v1319 = vpop.f32.mrf.mxu0
      %v1320 = vadd.f32 0.0, %v1319
      %1321 = vmatmul.f32.gmra.mxu0 %v1210
      %v1322 = vpop.f32.mrf.mxu0
      %v1323 = vadd.f32 0.0, %v1322
      %1324 = vmatmul.f32.gmra.mxu0 %v1213
      %v1325 = vpop.f32.mrf.mxu0
      %v1326 = vadd.f32 0.0, %v1325
      %1327 = vmatmul.f32.gmra.mxu0 %v1216
      %v1328 = vpop.f32.mrf.mxu0
      %v1329 = vadd.f32 0.0, %v1328
      %1330 = vmatmul.f32.gmra.mxu0 %v1219
      %v1331 = vpop.f32.mrf.mxu0
      %v1332 = vadd.f32 0.0, %v1331
      %1333 = vmatmul.f32.gmra.mxu0 %v1222
      %v1334 = vpop.f32.mrf.mxu0
      %v1335 = vadd.f32 0.0, %v1334
      %1336 = vmatmul.f32.gmra.mxu0 %v1225
      %v1337 = vpop.f32.mrf.mxu0
      %v1338 = vadd.f32 0.0, %v1337
      %1339 = vmatmul.f32.gmra.mxu0 %v1228
      %v1340 = vpop.f32.mrf.mxu0
      %v1341 = vadd.f32 0.0, %v1340
      %1342 = vmatmul.f32.gmra.mxu0 %v1231
      %v1343 = vpop.f32.mrf.mxu0
      %v1344 = vadd.f32 0.0, %v1343
      %1345 = vmatmul.f32.gmra.mxu0 %v1234
      %v1346 = vpop.f32.mrf.mxu0
      %v1347 = vadd.f32 0.0, %v1346
      %1348 = vmatmul.f32.gmra.mxu0 %v1237
      %v1349 = vpop.f32.mrf.mxu0
      %v1350 = vadd.f32 0.0, %v1349
      %1351 = vmatmul.f32.gmra.mxu0 %v1240
      %v1352 = vpop.f32.mrf.mxu0
      %v1353 = vadd.f32 0.0, %v1352
      %1354 = vmatmul.f32.gmra.mxu0 %v1243
      %v1355 = vpop.f32.mrf.mxu0
      %v1356 = vadd.f32 0.0, %v1355
      %1357 = vdwg.mxu0
      %v1359 = vsel %vm1148, %v1081, 0
      %v1362 = vsel %vm1148, %v1082, 0
      %1364 = vmatpush.msra.mxu0 0.0
      %1365 = vmatpush.msra.mxu0 0.0
      %1366 = vmatpush.msra.mxu0 0.0
      %1367 = vmatpush.msra.mxu0 0.0
      %1368 = vmatpush.msra.mxu0 0.0
      %1369 = vmatpush.msra.mxu0 0.0
      %1370 = vmatpush.msra.mxu0 0.0
      %1371 = vmatpush.msra.mxu0 0.0
      %1372 = vmatpush.msra.mxu0 0.0
      %1373 = vmatpush.msra.mxu0 0.0
      %1374 = vmatpush.msra.mxu0 0.0
      %1375 = vmatpush.msra.mxu0 0.0
      %1376 = vmatpush.msra.mxu0 0.0
      %1377 = vmatpush.msra.mxu0 %v1115
      %1378 = vmatpush.msra.mxu0 %v1114
      %1379 = vmatpush.msra.mxu0 %v1113
      %1380 = vmatmul.f32.gmra.mxu0 %v1359
      %v1381 = vpop.f32.mrf.mxu0
      %v1382 = vadd.f32 %v1263, %v1381
      %1383 = vmatmul.f32.gmra.mxu0 %v1362
      %v1384 = vpop.f32.mrf.mxu0
      %v1385 = vadd.f32 %v1266, %v1384
      %1386 = vmatmul.f32.gmra.mxu0 %v1150
      %v1387 = vpop.f32.mrf.mxu0
      %v1388 = vadd.f32 %v1269, %v1387
      %1389 = vmatmul.f32.gmra.mxu0 %v1153
      %v1390 = vpop.f32.mrf.mxu0
      %v1391 = vadd.f32 %v1272, %v1390
      %1392 = vmatmul.f32.gmra.mxu0 %v1156
      %v1393 = vpop.f32.mrf.mxu0
      %v1394 = vadd.f32 %v1275, %v1393
      %1395 = vmatmul.f32.gmra.mxu0 %v1159
      %v1396 = vpop.f32.mrf.mxu0
      %v1397 = vadd.f32 %v1278, %v1396
      %1398 = vmatmul.f32.gmra.mxu0 %v1162
      %v1399 = vpop.f32.mrf.mxu0
      %v1400 = vadd.f32 %v1281, %v1399
      %1401 = vmatmul.f32.gmra.mxu0 %v1165
      %v1402 = vpop.f32.mrf.mxu0
      %v1403 = vadd.f32 %v1284, %v1402
      %1404 = vmatmul.f32.gmra.mxu0 %v1168
      %v1405 = vpop.f32.mrf.mxu0
      %v1406 = vadd.f32 %v1287, %v1405
      %1407 = vmatmul.f32.gmra.mxu0 %v1171
      %v1408 = vpop.f32.mrf.mxu0
      %v1409 = vadd.f32 %v1290, %v1408
      %1410 = vmatmul.f32.gmra.mxu0 %v1174
      %v1411 = vpop.f32.mrf.mxu0
      %v1412 = vadd.f32 %v1293, %v1411
      %1413 = vmatmul.f32.gmra.mxu0 %v1177
      %v1414 = vpop.f32.mrf.mxu0
      %v1415 = vadd.f32 %v1296, %v1414
      %1416 = vmatmul.f32.gmra.mxu0 %v1180
      %v1417 = vpop.f32.mrf.mxu0
      %v1418 = vadd.f32 %v1299, %v1417
      %1419 = vmatmul.f32.gmra.mxu0 %v1183
      %v1420 = vpop.f32.mrf.mxu0
      %v1421 = vadd.f32 %v1302, %v1420
      %1422 = vmatmul.f32.gmra.mxu0 %v1186
      %v1423 = vpop.f32.mrf.mxu0
      %v1424 = vadd.f32 %v1305, %v1423
      %1425 = vmatmul.f32.gmra.mxu0 %v1189
      %v1426 = vpop.f32.mrf.mxu0
      %v1427 = vadd.f32 %v1308, %v1426
      %1428 = vmatmul.f32.gmra.mxu0 %v1192
      %v1429 = vpop.f32.mrf.mxu0
      %v1430 = vadd.f32 %v1311, %v1429
      %1431 = vmatmul.f32.gmra.mxu0 %v1195
      %v1432 = vpop.f32.mrf.mxu0
      %v1433 = vadd.f32 %v1314, %v1432
      %1434 = vmatmul.f32.gmra.mxu0 %v1198
      %v1435 = vpop.f32.mrf.mxu0
      %v1436 = vadd.f32 %v1317, %v1435
      %1437 = vmatmul.f32.gmra.mxu0 %v1201
      %v1438 = vpop.f32.mrf.mxu0
      %v1439 = vadd.f32 %v1320, %v1438
      %1440 = vmatmul.f32.gmra.mxu0 %v1204
      %v1441 = vpop.f32.mrf.mxu0
      %v1442 = vadd.f32 %v1323, %v1441
      %1443 = vmatmul.f32.gmra.mxu0 %v1207
      %v1444 = vpop.f32.mrf.mxu0
      %v1445 = vadd.f32 %v1326, %v1444
      %1446 = vmatmul.f32.gmra.mxu0 %v1210
      %v1447 = vpop.f32.mrf.mxu0
      %v1448 = vadd.f32 %v1329, %v1447
      %1449 = vmatmul.f32.gmra.mxu0 %v1213
      %v1450 = vpop.f32.mrf.mxu0
      %v1451 = vadd.f32 %v1332, %v1450
      %1452 = vmatmul.f32.gmra.mxu0 %v1216
      %v1453 = vpop.f32.mrf.mxu0
      %v1454 = vadd.f32 %v1335, %v1453
      %1455 = vmatmul.f32.gmra.mxu0 %v1219
      %v1456 = vpop.f32.mrf.mxu0
      %v1457 = vadd.f32 %v1338, %v1456
      %1458 = vmatmul.f32.gmra.mxu0 %v1222
      %v1459 = vpop.f32.mrf.mxu0
      %v1460 = vadd.f32 %v1341, %v1459
      %1461 = vmatmul.f32.gmra.mxu0 %v1225
      %v1462 = vpop.f32.mrf.mxu0
      %v1463 = vadd.f32 %v1344, %v1462
      %1464 = vmatmul.f32.gmra.mxu0 %v1228
      %v1465 = vpop.f32.mrf.mxu0
      %v1466 = vadd.f32 %v1347, %v1465
      %1467 = vmatmul.f32.gmra.mxu0 %v1231
      %v1468 = vpop.f32.mrf.mxu0
      %v1469 = vadd.f32 %v1350, %v1468
      %1470 = vmatmul.f32.gmra.mxu0 %v1234
      %v1471 = vpop.f32.mrf.mxu0
      %v1472 = vadd.f32 %v1353, %v1471
      %1473 = vmatmul.f32.gmra.mxu0 %v1237
      %v1474 = vpop.f32.mrf.mxu0
      %v1475 = vadd.f32 %v1356, %v1474
      %1476 = vdwg.mxu0
      %v1479 = vrot.slane %v642, 1
      %v1480 = vrot.slane %v570, 1
      %v1481 = vsel %vm693, %v1479, %v1480
      %v1482 = vrot.slane %v660, 1
      %v1483 = vsel %vm693, %v1480, %v1482
      %1484 = vrot.lane.b32.xlu0 %v1481, 8
      %v1485 = vpop.permute.xlu0 %1484
      %1486 = vrot.lane.b32.xlu0 %v1483, 8
      %v1487 = vpop.permute.xlu0 %1486
      %v1490 = vrot.slane %v642, 2
      %v1491 = vrot.slane %v570, 2
      %v1492 = vsel %vm870, %v1490, %v1491
      %v1493 = vrot.slane %v660, 2
      %v1494 = vsel %vm870, %v1491, %v1493
      %1495 = vrot.lane.b32.xlu0 %v1492, 16
      %v1496 = vpop.permute.xlu0 %1495
      %1497 = vrot.lane.b32.xlu0 %v1494, 16
      %v1498 = vpop.permute.xlu0 %1497
      %v1501 = vsel %vm1047, %v642, %v1485
      %v1502 = vsel %vm1047, %v570, %v1487
      %v1503 = vsel %vm1080, %v1501, %v1496
      %v1504 = vsel %vm1080, %v1502, %v1498
      %s1505 = scalar_lea.vmem %s283, 48
      %v1506 = vld [vmem:[%s1505] sm:$0xff]
      %v1507 = vld [vmem:[%s1505 + $0x8] sm:$0xff]
      %v1508 = vld [vmem:[%s1505 + $0x10] sm:$0xff]
      %v1510 = vsel %vm1148, %v1503, 0
      %v1513 = vsel %vm1148, %v1504, 0
      %1515 = vmatpush.msra.mxu0 0.0
      %1516 = vmatpush.msra.mxu0 0.0
      %1517 = vmatpush.msra.mxu0 0.0
      %1518 = vmatpush.msra.mxu0 0.0
      %1519 = vmatpush.msra.mxu0 0.0
      %1520 = vmatpush.msra.mxu0 0.0
      %1521 = vmatpush.msra.mxu0 0.0
      %1522 = vmatpush.msra.mxu0 0.0
      %1523 = vmatpush.msra.mxu0 0.0
      %1524 = vmatpush.msra.mxu0 0.0
      %1525 = vmatpush.msra.mxu0 0.0
      %1526 = vmatpush.msra.mxu0 0.0
      %1527 = vmatpush.msra.mxu0 0.0
      %1528 = vmatpush.msra.mxu0 %v1508
      %1529 = vmatpush.msra.mxu0 %v1507
      %1530 = vmatpush.msra.mxu0 %v1506
      %1531 = vmatmul.f32.gmra.mxu0 %v1156
      %v1532 = vpop.f32.mrf.mxu0
      %v1533 = vadd.f32 0.0, %v1532
      %1534 = vmatmul.f32.gmra.mxu0 %v1159
      %v1535 = vpop.f32.mrf.mxu0
      %v1536 = vadd.f32 0.0, %v1535
      %1537 = vmatmul.f32.gmra.mxu0 %v1162
      %v1538 = vpop.f32.mrf.mxu0
      %v1539 = vadd.f32 0.0, %v1538
      %1540 = vmatmul.f32.gmra.mxu0 %v1165
      %v1541 = vpop.f32.mrf.mxu0
      %v1542 = vadd.f32 0.0, %v1541
      %1543 = vmatmul.f32.gmra.mxu0 %v1168
      %v1544 = vpop.f32.mrf.mxu0
      %v1545 = vadd.f32 0.0, %v1544
      %1546 = vmatmul.f32.gmra.mxu0 %v1171
      %v1547 = vpop.f32.mrf.mxu0
      %v1548 = vadd.f32 0.0, %v1547
      %1549 = vmatmul.f32.gmra.mxu0 %v1174
      %v1550 = vpop.f32.mrf.mxu0
      %v1551 = vadd.f32 0.0, %v1550
      %1552 = vmatmul.f32.gmra.mxu0 %v1177
      %v1553 = vpop.f32.mrf.mxu0
      %v1554 = vadd.f32 0.0, %v1553
      %1555 = vmatmul.f32.gmra.mxu0 %v1180
      %v1556 = vpop.f32.mrf.mxu0
      %v1557 = vadd.f32 0.0, %v1556
      %1558 = vmatmul.f32.gmra.mxu0 %v1183
      %v1559 = vpop.f32.mrf.mxu0
      %v1560 = vadd.f32 0.0, %v1559
      %1561 = vmatmul.f32.gmra.mxu0 %v1186
      %v1562 = vpop.f32.mrf.mxu0
      %v1563 = vadd.f32 0.0, %v1562
      %1564 = vmatmul.f32.gmra.mxu0 %v1189
      %v1565 = vpop.f32.mrf.mxu0
      %v1566 = vadd.f32 0.0, %v1565
      %1567 = vmatmul.f32.gmra.mxu0 %v1192
      %v1568 = vpop.f32.mrf.mxu0
      %v1569 = vadd.f32 0.0, %v1568
      %1570 = vmatmul.f32.gmra.mxu0 %v1195
      %v1571 = vpop.f32.mrf.mxu0
      %v1572 = vadd.f32 0.0, %v1571
      %1573 = vmatmul.f32.gmra.mxu0 %v1198
      %v1574 = vpop.f32.mrf.mxu0
      %v1575 = vadd.f32 0.0, %v1574
      %1576 = vmatmul.f32.gmra.mxu0 %v1201
      %v1577 = vpop.f32.mrf.mxu0
      %v1578 = vadd.f32 0.0, %v1577
      %1579 = vmatmul.f32.gmra.mxu0 %v1204
      %v1580 = vpop.f32.mrf.mxu0
      %v1581 = vadd.f32 0.0, %v1580
      %1582 = vmatmul.f32.gmra.mxu0 %v1207
      %v1583 = vpop.f32.mrf.mxu0
      %v1584 = vadd.f32 0.0, %v1583
      %1585 = vmatmul.f32.gmra.mxu0 %v1210
      %v1586 = vpop.f32.mrf.mxu0
      %v1587 = vadd.f32 0.0, %v1586
      %1588 = vmatmul.f32.gmra.mxu0 %v1213
      %v1589 = vpop.f32.mrf.mxu0
      %v1590 = vadd.f32 0.0, %v1589
      %1591 = vmatmul.f32.gmra.mxu0 %v1216
      %v1592 = vpop.f32.mrf.mxu0
      %v1593 = vadd.f32 0.0, %v1592
      %1594 = vmatmul.f32.gmra.mxu0 %v1219
      %v1595 = vpop.f32.mrf.mxu0
      %v1596 = vadd.f32 0.0, %v1595
      %1597 = vmatmul.f32.gmra.mxu0 %v1222
      %v1598 = vpop.f32.mrf.mxu0
      %v1599 = vadd.f32 0.0, %v1598
      %1600 = vmatmul.f32.gmra.mxu0 %v1225
      %v1601 = vpop.f32.mrf.mxu0
      %v1602 = vadd.f32 0.0, %v1601
      %1603 = vmatmul.f32.gmra.mxu0 %v1228
      %v1604 = vpop.f32.mrf.mxu0
      %v1605 = vadd.f32 0.0, %v1604
      %1606 = vmatmul.f32.gmra.mxu0 %v1231
      %v1607 = vpop.f32.mrf.mxu0
      %v1608 = vadd.f32 0.0, %v1607
      %1609 = vmatmul.f32.gmra.mxu0 %v1234
      %v1610 = vpop.f32.mrf.mxu0
      %v1611 = vadd.f32 0.0, %v1610
      %1612 = vmatmul.f32.gmra.mxu0 %v1237
      %v1613 = vpop.f32.mrf.mxu0
      %v1614 = vadd.f32 0.0, %v1613
      %1615 = vmatmul.f32.gmra.mxu0 %v1240
      %v1616 = vpop.f32.mrf.mxu0
      %v1617 = vadd.f32 0.0, %v1616
      %1618 = vmatmul.f32.gmra.mxu0 %v1243
      %v1619 = vpop.f32.mrf.mxu0
      %v1620 = vadd.f32 0.0, %v1619
      %1621 = vmatmul.f32.gmra.mxu0 %v1510
      %v1622 = vpop.f32.mrf.mxu0
      %v1623 = vadd.f32 0.0, %v1622
      %1624 = vmatmul.f32.gmra.mxu0 %v1513
      %v1625 = vpop.f32.mrf.mxu0
      %v1626 = vadd.f32 0.0, %v1625
      %1627 = vdwg.mxu0
      %v1628 = vadd.f32 %v1382, %v1533
      %v1629 = vadd.f32 %v1385, %v1536
      %v1630 = vadd.f32 %v1388, %v1539
      %v1631 = vadd.f32 %v1391, %v1542
      %v1632 = vadd.f32 %v1394, %v1545
      %v1633 = vadd.f32 %v1397, %v1548
      %v1634 = vadd.f32 %v1400, %v1551
      %v1635 = vadd.f32 %v1403, %v1554
      %v1636 = vadd.f32 %v1406, %v1557
      %v1637 = vadd.f32 %v1409, %v1560
      %v1638 = vadd.f32 %v1412, %v1563
      %v1639 = vadd.f32 %v1415, %v1566
      %v1640 = vadd.f32 %v1418, %v1569
      %v1641 = vadd.f32 %v1421, %v1572
      %v1642 = vadd.f32 %v1424, %v1575
      %v1643 = vadd.f32 %v1427, %v1578
      %v1644 = vadd.f32 %v1430, %v1581
      %v1645 = vadd.f32 %v1433, %v1584
      %v1646 = vadd.f32 %v1436, %v1587
      %v1647 = vadd.f32 %v1439, %v1590
      %v1648 = vadd.f32 %v1442, %v1593
      %v1649 = vadd.f32 %v1445, %v1596
      %v1650 = vadd.f32 %v1448, %v1599
      %v1651 = vadd.f32 %v1451, %v1602
      %v1652 = vadd.f32 %v1454, %v1605
      %v1653 = vadd.f32 %v1457, %v1608
      %v1654 = vadd.f32 %v1460, %v1611
      %v1655 = vadd.f32 %v1463, %v1614
      %v1656 = vadd.f32 %v1466, %v1617
      %v1657 = vadd.f32 %v1469, %v1620
      %v1658 = vadd.f32 %v1472, %v1623
      %v1659 = vadd.f32 %v1475, %v1626
      %1660 = vst.msk [vmem:[%s295] sm:$0xff] %vm1047, %v1628
      %1661 = vst.msk [vmem:[%s295 + $0x8] sm:$0xff] %vm1047, %v1629
      %1662 = vst.msk [vmem:[%s295 + $0x10] sm:$0xff] %vm1047, %v1630
      %1663 = vst.msk [vmem:[%s295 + $0x18] sm:$0xff] %vm1047, %v1631
      %1664 = vst.msk [vmem:[%s295 + $0x20] sm:$0xff] %vm1047, %v1632
      %1665 = vst.msk [vmem:[%s295 + $0x28] sm:$0xff] %vm1047, %v1633
      %1666 = vst.msk [vmem:[%s295 + $0x30] sm:$0xff] %vm1047, %v1634
      %1667 = vst.msk [vmem:[%s295 + $0x38] sm:$0xff] %vm1047, %v1635
      %1668 = vst.msk [vmem:[%s295 + $0x40] sm:$0xff] %vm1047, %v1636
      %1669 = vst.msk [vmem:[%s295 + $0x48] sm:$0xff] %vm1047, %v1637
      %1670 = vst.msk [vmem:[%s295 + $0x50] sm:$0xff] %vm1047, %v1638
      %1671 = vst.msk [vmem:[%s295 + $0x58] sm:$0xff] %vm1047, %v1639
      %1672 = vst.msk [vmem:[%s295 + $0x60] sm:$0xff] %vm1047, %v1640
      %1673 = vst.msk [vmem:[%s295 + $0x68] sm:$0xff] %vm1047, %v1641
      %1674 = vst.msk [vmem:[%s295 + $0x70] sm:$0xff] %vm1047, %v1642
      %1675 = vst.msk [vmem:[%s295 + $0x78] sm:$0xff] %vm1047, %v1643
      %1676 = vst.msk [vmem:[%s295 + $0x80] sm:$0xff] %vm1047, %v1644
      %1677 = vst.msk [vmem:[%s295 + $0x88] sm:$0xff] %vm1047, %v1645
      %1678 = vst.msk [vmem:[%s295 + $0x90] sm:$0xff] %vm1047, %v1646
      %1679 = vst.msk [vmem:[%s295 + $0x98] sm:$0xff] %vm1047, %v1647
      %1680 = vst.msk [vmem:[%s295 + $0xa0] sm:$0xff] %vm1047, %v1648
      %1681 = vst.msk [vmem:[%s295 + $0xa8] sm:$0xff] %vm1047, %v1649
      %1682 = vst.msk [vmem:[%s295 + $0xb0] sm:$0xff] %vm1047, %v1650
      %1683 = vst.msk [vmem:[%s295 + $0xb8] sm:$0xff] %vm1047, %v1651
      %1684 = vst.msk [vmem:[%s295 + $0xc0] sm:$0xff] %vm1047, %v1652
      %1685 = vst.msk [vmem:[%s295 + $0xc8] sm:$0xff] %vm1047, %v1653
      %1686 = vst.msk [vmem:[%s295 + $0xd0] sm:$0xff] %vm1047, %v1654
      %1687 = vst.msk [vmem:[%s295 + $0xd8] sm:$0xff] %vm1047, %v1655
      %1688 = vst.msk [vmem:[%s295 + $0xe0] sm:$0xff] %vm1047, %v1656
      %1689 = vst.msk [vmem:[%s295 + $0xe8] sm:$0xff] %vm1047, %v1657
      %1690 = vst.msk [vmem:[%s295 + $0xf0] sm:$0xff] %vm1047, %v1658
      %1691 = vst.msk [vmem:[%s295 + $0xf8] sm:$0xff] %vm1047, %v1659
      %v1692 = vsel %vm1047, %v1628, 0.0
      %v1693 = vsel %vm1047, %v1629, 0.0
      %v1694 = vadd.f32 %v1692, %v1693
      %v1695 = vsel %vm1047, %v1630, 0.0
      %v1696 = vadd.f32 %v1694, %v1695
      %v1697 = vsel %vm1047, %v1631, 0.0
      %v1698 = vadd.f32 %v1696, %v1697
      %v1699 = vsel %vm1047, %v1632, 0.0
      %v1700 = vadd.f32 %v1698, %v1699
      %v1701 = vsel %vm1047, %v1633, 0.0
      %v1702 = vadd.f32 %v1700, %v1701
      %v1703 = vsel %vm1047, %v1634, 0.0
      %v1704 = vadd.f32 %v1702, %v1703
      %v1705 = vsel %vm1047, %v1635, 0.0
      %v1706 = vadd.f32 %v1704, %v1705
      %v1707 = vsel %vm1047, %v1636, 0.0
      %v1708 = vadd.f32 %v1706, %v1707
      %v1709 = vsel %vm1047, %v1637, 0.0
      %v1710 = vadd.f32 %v1708, %v1709
      %v1711 = vsel %vm1047, %v1638, 0.0
      %v1712 = vadd.f32 %v1710, %v1711
      %v1713 = vsel %vm1047, %v1639, 0.0
      %v1714 = vadd.f32 %v1712, %v1713
      %v1715 = vsel %vm1047, %v1640, 0.0
      %v1716 = vadd.f32 %v1714, %v1715
      %v1717 = vsel %vm1047, %v1641, 0.0
      %v1718 = vadd.f32 %v1716, %v1717
      %v1719 = vsel %vm1047, %v1642, 0.0
      %v1720 = vadd.f32 %v1718, %v1719
      %v1721 = vsel %vm1047, %v1643, 0.0
      %v1722 = vadd.f32 %v1720, %v1721
      %v1723 = vsel %vm1047, %v1644, 0.0
      %v1724 = vadd.f32 %v1722, %v1723
      %v1725 = vsel %vm1047, %v1645, 0.0
      %v1726 = vadd.f32 %v1724, %v1725
      %v1727 = vsel %vm1047, %v1646, 0.0
      %v1728 = vadd.f32 %v1726, %v1727
      %v1729 = vsel %vm1047, %v1647, 0.0
      %v1730 = vadd.f32 %v1728, %v1729
      %v1731 = vsel %vm1047, %v1648, 0.0
      %v1732 = vadd.f32 %v1730, %v1731
      %v1733 = vsel %vm1047, %v1649, 0.0
      %v1734 = vadd.f32 %v1732, %v1733
      %v1735 = vsel %vm1047, %v1650, 0.0
      %v1736 = vadd.f32 %v1734, %v1735
      %v1737 = vsel %vm1047, %v1651, 0.0
      %v1738 = vadd.f32 %v1736, %v1737
      %v1739 = vsel %vm1047, %v1652, 0.0
      %v1740 = vadd.f32 %v1738, %v1739
      %v1741 = vsel %vm1047, %v1653, 0.0
      %v1742 = vadd.f32 %v1740, %v1741
      %v1743 = vsel %vm1047, %v1654, 0.0
      %v1744 = vadd.f32 %v1742, %v1743
      %v1745 = vsel %vm1047, %v1655, 0.0
      %v1746 = vadd.f32 %v1744, %v1745
      %v1747 = vsel %vm1047, %v1656, 0.0
      %v1748 = vadd.f32 %v1746, %v1747
      %v1749 = vsel %vm1047, %v1657, 0.0
      %v1750 = vadd.f32 %v1748, %v1749
      %v1751 = vsel %vm1047, %v1658, 0.0
      %v1752 = vadd.f32 %v1750, %v1751
      %v1753 = vsel %vm1047, %v1659, 0.0
      %v1754 = vadd.f32 %v1752, %v1753
      %v1755 = vrot.slane %v1754, 4
      %v1756 = vadd.f32 %v1754, %v1755
      %v1757 = vrot.slane %v1756, 2
      %v1758 = vadd.f32 %v1756, %v1757
      %v1759 = vrot.slane %v1758, 1
      %v1760 = vadd.f32 %v1758, %v1759
      %v1761 = vmul.f32 %v1628, %v1628
      %v1762 = vmul.f32 %v1629, %v1629
      %v1763 = vmul.f32 %v1630, %v1630
      %v1764 = vmul.f32 %v1631, %v1631
      %v1765 = vmul.f32 %v1632, %v1632
      %v1766 = vmul.f32 %v1633, %v1633
      %v1767 = vmul.f32 %v1634, %v1634
      %v1768 = vmul.f32 %v1635, %v1635
      %v1769 = vmul.f32 %v1636, %v1636
      %v1770 = vmul.f32 %v1637, %v1637
      %v1771 = vmul.f32 %v1638, %v1638
      %v1772 = vmul.f32 %v1639, %v1639
      %v1773 = vmul.f32 %v1640, %v1640
      %v1774 = vmul.f32 %v1641, %v1641
      %v1775 = vmul.f32 %v1642, %v1642
      %v1776 = vmul.f32 %v1643, %v1643
      %v1777 = vmul.f32 %v1644, %v1644
      %v1778 = vmul.f32 %v1645, %v1645
      %v1779 = vmul.f32 %v1646, %v1646
      %v1780 = vmul.f32 %v1647, %v1647
      %v1781 = vmul.f32 %v1648, %v1648
      %v1782 = vmul.f32 %v1649, %v1649
      %v1783 = vmul.f32 %v1650, %v1650
      %v1784 = vmul.f32 %v1651, %v1651
      %v1785 = vmul.f32 %v1652, %v1652
      %v1786 = vmul.f32 %v1653, %v1653
      %v1787 = vmul.f32 %v1654, %v1654
      %v1788 = vmul.f32 %v1655, %v1655
      %v1789 = vmul.f32 %v1656, %v1656
      %v1790 = vmul.f32 %v1657, %v1657
      %v1791 = vmul.f32 %v1658, %v1658
      %v1792 = vmul.f32 %v1659, %v1659
      %v1793 = vsel %vm1047, %v1761, 0.0
      %v1794 = vsel %vm1047, %v1762, 0.0
      %v1795 = vadd.f32 %v1793, %v1794
      %v1796 = vsel %vm1047, %v1763, 0.0
      %v1797 = vadd.f32 %v1795, %v1796
      %v1798 = vsel %vm1047, %v1764, 0.0
      %v1799 = vadd.f32 %v1797, %v1798
      %v1800 = vsel %vm1047, %v1765, 0.0
      %v1801 = vadd.f32 %v1799, %v1800
      %v1802 = vsel %vm1047, %v1766, 0.0
      %v1803 = vadd.f32 %v1801, %v1802
      %v1804 = vsel %vm1047, %v1767, 0.0
      %v1805 = vadd.f32 %v1803, %v1804
      %v1806 = vsel %vm1047, %v1768, 0.0
      %v1807 = vadd.f32 %v1805, %v1806
      %v1808 = vsel %vm1047, %v1769, 0.0
      %v1809 = vadd.f32 %v1807, %v1808
      %v1810 = vsel %vm1047, %v1770, 0.0
      %v1811 = vadd.f32 %v1809, %v1810
      %v1812 = vsel %vm1047, %v1771, 0.0
      %v1813 = vadd.f32 %v1811, %v1812
      %v1814 = vsel %vm1047, %v1772, 0.0
      %v1815 = vadd.f32 %v1813, %v1814
      %v1816 = vsel %vm1047, %v1773, 0.0
      %v1817 = vadd.f32 %v1815, %v1816
      %v1818 = vsel %vm1047, %v1774, 0.0
      %v1819 = vadd.f32 %v1817, %v1818
      %v1820 = vsel %vm1047, %v1775, 0.0
      %v1821 = vadd.f32 %v1819, %v1820
      %v1822 = vsel %vm1047, %v1776, 0.0
      %v1823 = vadd.f32 %v1821, %v1822
      %v1824 = vsel %vm1047, %v1777, 0.0
      %v1825 = vadd.f32 %v1823, %v1824
      %v1826 = vsel %vm1047, %v1778, 0.0
      %v1827 = vadd.f32 %v1825, %v1826
      %v1828 = vsel %vm1047, %v1779, 0.0
      %v1829 = vadd.f32 %v1827, %v1828
      %v1830 = vsel %vm1047, %v1780, 0.0
      %v1831 = vadd.f32 %v1829, %v1830
      %v1832 = vsel %vm1047, %v1781, 0.0
      %v1833 = vadd.f32 %v1831, %v1832
      %v1834 = vsel %vm1047, %v1782, 0.0
      %v1835 = vadd.f32 %v1833, %v1834
      %v1836 = vsel %vm1047, %v1783, 0.0
      %v1837 = vadd.f32 %v1835, %v1836
      %v1838 = vsel %vm1047, %v1784, 0.0
      %v1839 = vadd.f32 %v1837, %v1838
      %v1840 = vsel %vm1047, %v1785, 0.0
      %v1841 = vadd.f32 %v1839, %v1840
      %v1842 = vsel %vm1047, %v1786, 0.0
      %v1843 = vadd.f32 %v1841, %v1842
      %v1844 = vsel %vm1047, %v1787, 0.0
      %v1845 = vadd.f32 %v1843, %v1844
      %v1846 = vsel %vm1047, %v1788, 0.0
      %v1847 = vadd.f32 %v1845, %v1846
      %v1848 = vsel %vm1047, %v1789, 0.0
      %v1849 = vadd.f32 %v1847, %v1848
      %v1850 = vsel %vm1047, %v1790, 0.0
      %v1851 = vadd.f32 %v1849, %v1850
      %v1852 = vsel %vm1047, %v1791, 0.0
      %v1853 = vadd.f32 %v1851, %v1852
      %v1854 = vsel %vm1047, %v1792, 0.0
      %v1855 = vadd.f32 %v1853, %v1854
      %v1856 = vrot.slane %v1855, 4
      %v1857 = vadd.f32 %v1855, %v1856
      %v1858 = vrot.slane %v1857, 2
      %v1859 = vadd.f32 %v1857, %v1858
      %v1860 = vrot.slane %v1859, 1
      %v1861 = vadd.f32 %v1859, %v1860
      %v1862 = vsel %vm516, %v1760, %v1861
      %vm1863 = vcmask 58368
      %1864 = vst.msk [vmem:[%s306] sm:$0x3] %vm1863, %v1862
      %s1865 = smul.u32 32, %s23
      %p1866 = scmp.lt.s32.totalorder %s22, 1
      %s1867 = scalar_select %p1866, %s22, 1
      %p1868 = scmp.lt.s32.totalorder %s1865, 31
      %s1869 = scalar_select %p1868, %s1865, 31
      %p1870 = scmp.lt.s32.totalorder %s24, 0
      %s1871 = scalar_select %p1870, %s24, 0
      %s1872 = sadd.s32 %s1871, %s1869
      %s1873 = smul.addr %s1867, 32
      %s1874 = sadd.s32 %s1872, %s1873
      %s1875 = smul.addr %s1874, 8
      %s1876 = scalar_lea.vmem %s4, %s1875
      %p1877 = scmp.lt.s32.totalorder %s22, 1
      %s1878 = scalar_select %p1877, %s22, 1
      %p1879 = scmp.lt.s32.totalorder %s23, 0
      %s1880 = scalar_select %p1879, %s23, 0
      %p1881 = scmp.lt.s32.totalorder %s24, 0
      %s1882 = scalar_select %p1881, %s24, 0
      %s1883 = sadd.s32 %s1882, %s1880
      %s1884 = sadd.s32 %s1883, %s1878
      %s1885 = smul.addr %s1884, 2
      %s1886 = scalar_lea.vmem %s5, %s1885
      // Predicated region
      $region37: #{double_conv_forward.4} parent=35 // pred_check
        %p1887 = pneg %p152
      $region38: #{double_conv_forward.4} parent=35 // pred_check_branch
        %1889 = sbr.rel (%p1887) target = $region40
      $region39: #{double_conv_forward.4} parent=35 // pred_region
        %s1890 = smul.u32 32, %s23
      $region40: #{double_conv_forward.4} parent=35 // pred_fallthru
        _
      // Predicated region
      $region41: #{double_conv_forward.4} parent=35 // pred_check
        %p1891 = pneg %p182
      $region42: #{double_conv_forward.4} parent=35 // pred_check_branch
        %1893 = sbr.rel (%p1891) target = $region44
      $region43: #{double_conv_forward.4} parent=35 // pred_region
        _
      $region44: #{double_conv_forward.4} parent=35 // pred_fallthru
        _
    $region36: #{double_conv_forward.4} parent=5 // pred_fallthru
      _
    %p1894 = scmp.le.s32.totalorder 2, %s12
    // Predicated region
    $region45: #{double_conv_forward.4} parent=5 // pred_check
      %p1895 = pneg %p1894
    $region46: #{double_conv_forward.4} parent=5 // pred_check_branch
      %1897 = sbr.rel (%p1895) target = $region48
    $region47: #{double_conv_forward.4} parent=5 // pred_region
      %s1898 = ssub.s32 %s12, 2
      // Predicated region
      $region49: #{double_conv_forward.4} parent=47 // pred_check
        %p1899 = pneg %p158
      $region50: #{double_conv_forward.4} parent=47 // pred_check_branch
        %1901 = sbr.rel (%p1899) target = $region52
      $region51: #{double_conv_forward.4} parent=47 // pred_region
        %s1902 = smul.u32 32, %s26
        %p1903 = scmp.lt.s32.totalorder %s25, 1
        %s1904 = scalar_select %p1903, %s25, 1
        %p1905 = scmp.lt.s32.totalorder %s1902, 31
        %s1906 = scalar_select %p1905, %s1902, 31
        %p1907 = scmp.lt.s32.totalorder %s27, 0
        %s1908 = scalar_select %p1907, %s27, 0
        %s1909 = sadd.s32 %s1908, %s1906
        %s1910 = smul.addr %s1904, 32
        %s1911 = sadd.s32 %s1909, %s1910
        %s1912 = smul.addr %s1911, 8
        %s1913 = scalar_lea.vmem %s4, %s1912
      $region52: #{double_conv_forward.4} parent=47 // pred_fallthru
        _
      // Predicated region
      $region53: #{double_conv_forward.4} parent=47 // pred_check
        %p1914 = pneg %p188
      $region54: #{double_conv_forward.4} parent=47 // pred_check_branch
        %1916 = sbr.rel (%p1914) target = $region56
      $region55: #{double_conv_forward.4} parent=47 // pred_region
        %p1917 = scmp.lt.s32.totalorder %s25, 1
        %s1918 = scalar_select %p1917, %s25, 1
        %p1919 = scmp.lt.s32.totalorder %s26, 0
        %s1920 = scalar_select %p1919, %s26, 0
        %p1921 = scmp.lt.s32.totalorder %s27, 0
        %s1922 = scalar_select %p1921, %s27, 0
        %s1923 = sadd.s32 %s1922, %s1920
        %s1924 = sadd.s32 %s1923, %s1918
        %s1925 = smul.addr %s1924, 2
        %s1926 = scalar_lea.vmem %s5, %s1925
      $region56: #{double_conv_forward.4} parent=47 // pred_fallthru
        _
    $region48: #{double_conv_forward.4} parent=5 // pred_fallthru
      _
  $region6: #{double_conv_forward.4} parent=0 // loop_footer
    %s16 = sadd.s32 1, %s12
  $region7: #{double_conv_forward.4} parent=0 // loop_footer_branch
    %11 = sbr.rel target = $region3
  $region8: #{double_conv_forward.4} parent=0 // loop_exit
    _

</llo_original>
